<compile_context>
chip_gen: v7x
topology: tpu7x:2x2x1
jax: 0.10.0
libtpu: 0.0.40
codegen_flags: <defaults>
</compile_context>

<pallas_src>
import jax
import jax.numpy as jnp
import numpy as np
from jax.experimental import pallas as pl
from jax.experimental.pallas import tpu as pltpu


# ----------------------------------------------------------------------------
# helpers
# ----------------------------------------------------------------------------
def _round_up(x, m):
    return (x + m - 1) // m * m


def _largest_divisor(n, cap):
    for d in range(min(n, cap), 0, -1):
        if n % d == 0:
            return d
    return 1


def _pad_cast(a, shape, dtype):
    a = a.astype(dtype)
    if a.shape == tuple(shape):
        return a
    pads = [(0, s - d) for s, d in zip(shape, a.shape)]
    return jnp.pad(a, pads)


def _gate_pad_cols(w_t, h, hp):
    """(K, 4H) with gate blocks [i,f,g,o] -> (K, 4Hp), each gate zero-padded H->Hp."""
    if hp == h:
        return w_t
    k = w_t.shape[0]
    w4 = w_t.reshape(k, 4, h)
    w4 = jnp.pad(w4, ((0, 0), (0, 0), (0, hp - h)))
    return w4.reshape(k, 4 * hp)


def _pad_rows(w, kp):
    if w.shape[0] == kp:
        return w
    return jnp.pad(w, ((0, kp - w.shape[0]), (0, 0)))


# ----------------------------------------------------------------------------
# Tiled matmul + bias kernel (used for the hoisted input projection and decoder)
# ----------------------------------------------------------------------------
def _matmul_bias_kernel(x_ref, w_ref, b_ref, o_ref, acc_ref):
    @pl.when(pl.program_id(2) == 0)
    def _():
        acc_ref[...] = jnp.zeros_like(acc_ref)

    acc_ref[...] += jnp.dot(x_ref[...], w_ref[...],
                            preferred_element_type=jnp.float32)

    @pl.when(pl.program_id(2) == pl.num_programs(2) - 1)
    def _():
        o_ref[...] = (acc_ref[...] + b_ref[...]).astype(o_ref.dtype)


def matmul_bias(x, w, b, *, tm=256, tn=256, tk=512, out_dtype=jnp.float32):
    """(M,K) @ (K,N) + (1,N) -> (M,N). bf16 MXU operands, f32 accumulation."""
    M, K = x.shape
    _, N = w.shape
    tm = min(tm, _round_up(M, 8))
    tn = min(tn, _round_up(N, 128))
    tk = min(tk, _round_up(K, 128))
    Mp, Kp, Np = _round_up(M, tm), _round_up(K, tk), _round_up(N, tn)

    xp = _pad_cast(x, (Mp, Kp), jnp.bfloat16)
    wp = _pad_cast(w, (Kp, Np), jnp.bfloat16)
    bp = _pad_cast(b, (1, Np), jnp.float32)

    out = pl.pallas_call(
        _matmul_bias_kernel,
        out_shape=jax.ShapeDtypeStruct((Mp, Np), out_dtype),
        grid_spec=pltpu.PrefetchScalarGridSpec(
            num_scalar_prefetch=0,
            grid=(Mp // tm, Np // tn, Kp // tk),
            in_specs=[
                pl.BlockSpec((tm, tk), lambda i, j, k: (i, k)),
                pl.BlockSpec((tk, tn), lambda i, j, k: (k, j)),
                pl.BlockSpec((1, tn), lambda i, j, k: (0, j)),
            ],
            out_specs=pl.BlockSpec((tm, tn), lambda i, j, k: (i, j)),
            scratch_shapes=[pltpu.VMEM((tm, tn), jnp.float32)]),
        compiler_params=pltpu.CompilerParams(
            dimension_semantics=("parallel", "parallel", "arbitrary"),
            vmem_limit_bytes=48 * 1024 * 1024),
    )(xp, wp, bp)
    return out[:M, :N]


# ----------------------------------------------------------------------------
# LSTM recurrent kernel: only h_prev @ W_hh per step (input projection precomputed).
# Grid = (batch tiles [parallel], time blocks [arbitrary]); h/c carried in VMEM scratch.
# ----------------------------------------------------------------------------
def _lstm_recurrent_kernel(gin_ref, whh_ref, h0_ref, c0_ref,
                           y_ref, hN_ref, cN_ref, h_sc, c_sc):
    tb = pl.program_id(1)
    Tt = gin_ref.shape[0]
    Hp = h_sc.shape[-1]

    @pl.when(tb == 0)
    def _():
        h_sc[...] = h0_ref[...]
        c_sc[...] = c0_ref[...]

    h = h_sc[...]
    c = c_sc[...]
    # Fully unrolled inner time loop (Tt is small and static): static ref indices,
    # one lane-dense (Tt, Bt, Hp) output slab per grid step, and the LLO scheduler
    # can overlap MXU / VPU / EUP work across consecutive timesteps.
    for t in range(Tt):
        gates = gin_ref[t] + jnp.dot(h.astype(jnp.bfloat16), whh_ref[...],
                                     preferred_element_type=jnp.float32)
        # Gate slicing uses the padded stride Hp (gate blocks laid out at Hp).
        i_g = jax.nn.sigmoid(gates[:, 0 * Hp:1 * Hp])
        f_g = jax.nn.sigmoid(gates[:, 1 * Hp:2 * Hp])
        g_g = jnp.tanh(gates[:, 2 * Hp:3 * Hp])
        o_g = jax.nn.sigmoid(gates[:, 3 * Hp:4 * Hp])
        # TODO(synk): for very large H (>=512 per gate) chunk this elementwise block
        # to bound vreg live ranges.
        c = f_g * c + i_g * g_g
        h = o_g * jnp.tanh(c)
        y_ref[t] = h

    h_sc[...] = h
    c_sc[...] = c

    @pl.when(tb == pl.num_programs(1) - 1)
    def _():
        # hN/cN use a constant block index over the time axis, so the single
        # end-of-row writeback carries exactly this last-step value.
        hN_ref[...] = h
        cN_ref[...] = c


def lstm_recurrent(gates_in, w_hh_t, h0, c0, *, tt_target=16):
    """gates_in: (T, Bp, 4Hp) f32 (already X@W_ih^T + b); w_hh_t: (Hp, 4Hp) bf16."""
    T, Bp, G = gates_in.shape
    Hp = G // 4
    Tt = _largest_divisor(T, tt_target)
    Bt = min(Bp, 8)
    grid = (Bp // Bt, T // Tt)
    return pl.pallas_call(
        _lstm_recurrent_kernel,
        out_shape=(jax.ShapeDtypeStruct((T, Bp, Hp), jnp.float32),
                   jax.ShapeDtypeStruct((Bp, Hp), jnp.float32),
                   jax.ShapeDtypeStruct((Bp, Hp), jnp.float32)),
        grid_spec=pltpu.PrefetchScalarGridSpec(
            num_scalar_prefetch=0,
            grid=grid,
            in_specs=[
                pl.BlockSpec((Tt, Bt, G), lambda b, t: (t, b, 0)),   # precomputed gates
                pl.BlockSpec((Hp, G), lambda b, t: (0, 0)),          # W_hh^T (resident)
                pl.BlockSpec((Bt, Hp), lambda b, t: (b, 0)),         # h0
                pl.BlockSpec((Bt, Hp), lambda b, t: (b, 0)),         # c0
            ],
            out_specs=(
                pl.BlockSpec((Tt, Bt, Hp), lambda b, t: (t, b, 0)),  # per-block y slab
                pl.BlockSpec((Bt, Hp), lambda b, t: (b, 0)),         # final h
                pl.BlockSpec((Bt, Hp), lambda b, t: (b, 0)),         # final c
            ),
            scratch_shapes=[pltpu.VMEM((Bt, Hp), jnp.float32),
                            pltpu.VMEM((Bt, Hp), jnp.float32)]),
        compiler_params=pltpu.CompilerParams(
            dimension_semantics=("parallel", "arbitrary"),
            vmem_limit_bytes=48 * 1024 * 1024),
    )(gates_in, w_hh_t, h0, c0)


# ----------------------------------------------------------------------------
# Parameters: raw (PyTorch layout) + one-time preparation (transpose/pad/bf16)
# ----------------------------------------------------------------------------
def init_params(key, ntoken, ninp, nhid, nlayers):
    initrange = 0.1
    keys = jax.random.split(key, 2 + 4 * nlayers)
    params = {
        "encoder_w": jax.random.uniform(keys[0], (ntoken, ninp), jnp.float32,
                                        -initrange, initrange),
        "decoder_w": jax.random.uniform(keys[1], (ntoken, nhid), jnp.float32,
                                        -initrange, initrange),
        "decoder_b": jnp.zeros((ntoken,), jnp.float32),
        "lstm": [],
    }
    stdv = 1.0 / np.sqrt(nhid)
    for l in range(nlayers):
        in_size = ninp if l == 0 else nhid
        k = keys[2 + 4 * l: 2 + 4 * (l + 1)]
        w_ih = jax.random.uniform(k[0], (4 * nhid, in_size), jnp.float32, -stdv, stdv)
        w_hh = jax.random.uniform(k[1], (4 * nhid, nhid), jnp.float32, -stdv, stdv)
        b_ih = jax.random.uniform(k[2], (4 * nhid,), jnp.float32, -stdv, stdv)
        b_hh = jax.random.uniform(k[3], (4 * nhid,), jnp.float32, -stdv, stdv)
        params["lstm"].append((w_ih, w_hh, b_ih, b_hh))
    return params


def prepare_params(raw, nhid):
    """Pre-transpose, gate-pad to Hp=round_up(H,128) stride, cast weights to bf16."""
    H = nhid
    Hp = _round_up(H, 128)
    prep = {
        "encoder_w": raw["encoder_w"],                                  # (V, ninp) f32
        "dec_w_t": _pad_rows(raw["decoder_w"].T, Hp).astype(jnp.bfloat16),  # (Hp, V)
        "dec_b": raw["decoder_b"].reshape(1, -1).astype(jnp.float32),   # (1, V)
        "layers": [],
    }
    for l, (w_ih, w_hh, b_ih, b_hh) in enumerate(raw["lstm"]):
        w_ih_t = _gate_pad_cols(w_ih.T, H, Hp)                  # (In, 4Hp)
        if l > 0:
            # layers >0 consume the padded (Hp-wide) output of the previous layer
            w_ih_t = _pad_rows(w_ih_t, Hp)                      # (Hp, 4Hp)
        w_hh_t = _pad_rows(_gate_pad_cols(w_hh.T, H, Hp), Hp)   # (Hp, 4Hp)
        b = _gate_pad_cols((b_ih + b_hh).reshape(1, 4 * H), H, Hp)  # (1, 4Hp)
        prep["layers"].append({
            "w_ih_t": w_ih_t.astype(jnp.bfloat16),
            "w_hh_t": w_hh_t.astype(jnp.bfloat16),
            "b": b.astype(jnp.float32),
        })
    return prep


# ----------------------------------------------------------------------------
# Full model forward
# ----------------------------------------------------------------------------
@jax.jit
def rnn_model_forward(prep, tokens, hidden):
    """tokens: (T, B) int32; hidden: (h0, c0) each (nlayers, B, H)."""
    h0_all, c0_all = hidden
    nlayers, B, H = h0_all.shape
    Hp = prep["dec_w_t"].shape[0]
    T = tokens.shape[0]
    Bp = _round_up(B, 8)

    # Embedding lookup (gather) kept as JAX glue; hot path is in the kernels.
    emb = jnp.take(prep["encoder_w"], tokens, axis=0)            # (T, B, ninp)
    x = jnp.pad(emb, ((0, 0), (0, Bp - B), (0, 0)))              # (T, Bp, ninp)

    h0p = jnp.pad(h0_all, ((0, 0), (0, Bp - B), (0, Hp - H)))    # (L, Bp, Hp)
    c0p = jnp.pad(c0_all, ((0, 0), (0, Bp - B), (0, Hp - H)))

    h_fin, c_fin = [], []
    for l, lp in enumerate(prep["layers"]):
        In = x.shape[-1]
        # Hoisted input projection for ALL timesteps: one big MXU matmul.
        g2d = matmul_bias(x.reshape(T * Bp, In), lp["w_ih_t"], lp["b"])  # (T*Bp, 4Hp)
        gates_in = g2d.reshape(T, Bp, 4 * Hp)
        x, hN, cN = lstm_recurrent(gates_in, lp["w_hh_t"], h0p[l], c0p[l])
        h_fin.append(hN)
        c_fin.append(cN)

    # Decoder: tiled matmul over (T*Bp, Hp) x (Hp, V).
    logits2d = matmul_bias(x.reshape(T * Bp, Hp), prep["dec_w_t"], prep["dec_b"])
    V = logits2d.shape[-1]
    decoded = logits2d.reshape(T, Bp, V)[:, :B, :]
    hN = jnp.stack(h_fin, 0)[:, :B, :H]
    cN = jnp.stack(c_fin, 0)[:, :B, :H]
    return decoded, (hN, cN)


# ----------------------------------------------------------------------------
# Pure-JAX f32 reference (for correctness check)
# ----------------------------------------------------------------------------
def reference_forward(raw, tokens, hidden):
    h0_all, c0_all = hidden
    emb = jnp.take(raw["encoder_w"], tokens, axis=0)
    x = emb
    h_fin, c_fin = [], []
    for l, (w_ih, w_hh, b_ih, b_hh) in enumerate(raw["lstm"]):
        H = w_hh.shape[1]
        h, c = h0_all[l], c0_all[l]
        ys = []
        for t in range(x.shape[0]):
            gates = x[t] @ w_ih.T + h @ w_hh.T + b_ih + b_hh
            i = jax.nn.sigmoid(gates[:, 0 * H:1 * H])
            f = jax.nn.sigmoid(gates[:, 1 * H:2 * H])
            g = jnp.tanh(gates[:, 2 * H:3 * H])
            o = jax.nn.sigmoid(gates[:, 3 * H:4 * H])
            c = f * c + i * g
            h = o * jnp.tanh(c)
            ys.append(h)
        x = jnp.stack(ys, 0)
        h_fin.append(h)
        c_fin.append(c)
    T, B, H = x.shape
    dec = x.reshape(T * B, H) @ raw["decoder_w"].T + raw["decoder_b"]
    return dec.reshape(T, B, -1), (jnp.stack(h_fin, 0), jnp.stack(c_fin, 0))


if __name__ == "__main__":
    # Small shapes consistent with the module (LSTM, nlayers=2, ninp == nhid).
    VOCAB_SIZE = 50
    NINP = 32
    NHID = 32
    NLAYERS = 2
    T, B = 8, 2

    key = jax.random.PRNGKey(0)
    pkey, tkey = jax.random.split(key)
    raw = init_params(pkey, VOCAB_SIZE, NINP, NHID, NLAYERS)
    prep = prepare_params(raw, NHID)
    tokens = jax.random.randint(tkey, (T, B), 0, VOCAB_SIZE, dtype=jnp.int32)

    # init_hidden(bsz): zeros (nlayers, bsz, nhid) for h and c.
    hidden = (jnp.zeros((NLAYERS, B, NHID), jnp.float32),
              jnp.zeros((NLAYERS, B, NHID), jnp.float32))

    decoded, (hN, cN) = rnn_model_forward(prep, tokens, hidden)
    decoded = jax.block_until_ready(decoded)
    hN = jax.block_until_ready(hN)
    cN = jax.block_until_ready(cN)

    assert decoded.shape == (T, B, VOCAB_SIZE)
    assert hN.shape == (NLAYERS, B, NHID) and cN.shape == (NLAYERS, B, NHID)

    ref_dec, (ref_h, ref_c) = reference_forward(raw, tokens, hidden)
    # bf16 MXU operands (f32 accumulation) -> slightly looser tolerance than pure f32.
    np.testing.assert_allclose(np.asarray(decoded), np.asarray(ref_dec),
                               rtol=2e-2, atol=2e-2)
    np.testing.assert_allclose(np.asarray(hN), np.asarray(ref_h), rtol=2e-2, atol=2e-2)
    np.testing.assert_allclose(np.asarray(cN), np.asarray(ref_c), rtol=2e-2, atol=2e-2)

    print("KERNEL_OK")
</pallas_src>

<mosaic_0001>
module attributes {stable_mosaic.version = 11 : i64} {
  func.func @_matmul_bias_kernel(%arg0: i32, %arg1: i32, %arg2: i32, %arg3: memref<64x128xbf16, #tpu.memory_space<vmem>>, %arg4: memref<128x256xbf16, #tpu.memory_space<vmem>>, %arg5: memref<1x256xf32, #tpu.memory_space<vmem>>, %arg6: memref<64x256xf32, #tpu.memory_space<vmem>>, %arg7: memref<64x256xf32, #tpu.memory_space<vmem>>) attributes {dimension_semantics = [#tpu.dimension_semantics<parallel>, #tpu.dimension_semantics<parallel>, #tpu.dimension_semantics<arbitrary>], iteration_bounds = array<i64: 1, 2, 1>, scalar_prefetch = 0 : i64, scratch_operands = 1 : i64, tpu.core_type = #tpu.core_type<tc>, window_params = [{transform_indices = @transform_0, window_bounds = array<i64: 64, 128>}, {transform_indices = @transform_1, window_bounds = array<i64: 128, 256>}, {transform_indices = @transform_2, window_bounds = array<i64: 1, 256>}, {transform_indices = @transform_3, window_bounds = array<i64: 64, 256>}]} {
    %c0_i32 = arith.constant 0 : i32
    %0 = arith.cmpi eq, %arg2, %c0_i32 : i32
    %1 = arith.extui %0 : i1 to i32
    %c0_i32_0 = arith.constant 0 : i32
    %2 = arith.cmpi ne, %1, %c0_i32_0 : i32
    scf.if %2 {
      %cst_10 = arith.constant 0.000000e+00 : f32
      %12 = vector.broadcast %cst_10 : f32 to vector<64x256xf32>
      %c0_11 = arith.constant 0 : index
      %c0_12 = arith.constant 0 : index
      %13 = vector.load %arg7[%c0_11, %c0_12] : memref<64x256xf32, #tpu.memory_space<vmem>>, vector<64x256xf32>
      tpu.vector_store %arg7[%c0_11, %c0_12], %12 {strides = array<i32>} : memref<64x256xf32, #tpu.memory_space<vmem>>, vector<64x256xf32>,
    } else {
    }
    %c0 = arith.constant 0 : index
    %c0_1 = arith.constant 0 : index
    %3 = vector.load %arg7[%c0, %c0_1] : memref<64x256xf32, #tpu.memory_space<vmem>>, vector<64x256xf32>
    %c0_2 = arith.constant 0 : index
    %c0_3 = arith.constant 0 : index
    %4 = vector.load %arg3[%c0_2, %c0_3] : memref<64x128xbf16, #tpu.memory_space<vmem>>, vector<64x128xbf16>
    %c0_4 = arith.constant 0 : index
    %c0_5 = arith.constant 0 : index
    %5 = vector.load %arg4[%c0_4, %c0_5] : memref<128x256xbf16, #tpu.memory_space<vmem>>, vector<128x256xbf16>
    %cst = arith.constant dense<0.000000e+00> : vector<64x256xf32>
    %6 = tpu.matmul %4, %5, %cst {dimension_numbers = #tpu.dot_dimension_numbers<[1], [0], [0], [1], [0, 0, 1, 1], [], []>} : vector<64x128xbf16>, vector<128x256xbf16>, vector<64x256xf32> -> vector<64x256xf32>
    %7 = arith.addf %3, %6 : vector<64x256xf32>
    %c0_6 = arith.constant 0 : index
    %c0_7 = arith.constant 0 : index
    %8 = vector.load %arg7[%c0_6, %c0_7] : memref<64x256xf32, #tpu.memory_space<vmem>>, vector<64x256xf32>
    tpu.vector_store %arg7[%c0_6, %c0_7], %7 {strides = array<i32>} : memref<64x256xf32, #tpu.memory_space<vmem>>, vector<64x256xf32>,
    %c0_i32_8 = arith.constant 0 : i32
    %9 = arith.cmpi eq, %arg2, %c0_i32_8 : i32
    %10 = arith.extui %9 : i1 to i32
    %c0_i32_9 = arith.constant 0 : i32
    %11 = arith.cmpi ne, %10, %c0_i32_9 : i32
    scf.if %11 {
      %c0_10 = arith.constant 0 : index
      %c0_11 = arith.constant 0 : index
      %12 = vector.load %arg7[%c0_10, %c0_11] : memref<64x256xf32, #tpu.memory_space<vmem>>, vector<64x256xf32>
      %c0_12 = arith.constant 0 : index
      %c0_13 = arith.constant 0 : index
      %13 = vector.load %arg5[%c0_12, %c0_13] : memref<1x256xf32, #tpu.memory_space<vmem>>, vector<1x256xf32>
      %14 = vector.broadcast %13 : vector<1x256xf32> to vector<64x256xf32>
      %15 = arith.addf %12, %14 : vector<64x256xf32>
      %c0_14 = arith.constant 0 : index
      %c0_15 = arith.constant 0 : index
      %16 = vector.load %arg6[%c0_14, %c0_15] : memref<64x256xf32, #tpu.memory_space<vmem>>, vector<64x256xf32>
      tpu.vector_store %arg6[%c0_14, %c0_15], %15 {strides = array<i32>} : memref<64x256xf32, #tpu.memory_space<vmem>>, vector<64x256xf32>,
    } else {
    }
    return
  }
  func.func @transform_0(%arg0: i32, %arg1: i32, %arg2: i32) -> (i32, i32) {
    %c0_i32 = arith.constant 0 : i32
    return %arg0, %arg2 : i32, i32
  }
  func.func @transform_1(%arg0: i32, %arg1: i32, %arg2: i32) -> (i32, i32) {
    %c0_i32 = arith.constant 0 : i32
    return %arg2, %arg1 : i32, i32
  }
  func.func @transform_2(%arg0: i32, %arg1: i32, %arg2: i32) -> (i32, i32) {
    %c0_i32 = arith.constant 0 : i32
    %c0_i32_0 = arith.constant 0 : i32
    return %c0_i32, %arg1 : i32, i32
  }
  func.func @transform_3(%arg0: i32, %arg1: i32, %arg2: i32) -> (i32, i32) {
    %c0_i32 = arith.constant 0 : i32
    return %arg0, %arg1 : i32, i32
  }
}

module attributes {stable_mosaic.version = 11 : i64} {
  func.func @_lstm_recurrent_kernel(%arg0: i32, %arg1: i32, %arg2: memref<8x8x512xf32, #tpu.memory_space<vmem>>, %arg3: memref<128x512xbf16, #tpu.memory_space<vmem>>, %arg4: memref<8x128xf32, #tpu.memory_space<vmem>>, %arg5: memref<8x128xf32, #tpu.memory_space<vmem>>, %arg6: memref<8x8x128xf32, #tpu.memory_space<vmem>>, %arg7: memref<8x128xf32, #tpu.memory_space<vmem>>, %arg8: memref<8x128xf32, #tpu.memory_space<vmem>>, %arg9: memref<8x128xf32, #tpu.memory_space<vmem>>, %arg10: memref<8x128xf32, #tpu.memory_space<vmem>>) attributes {dimension_semantics = [#tpu.dimension_semantics<parallel>, #tpu.dimension_semantics<arbitrary>], iteration_bounds = array<i64: 1, 1>, scalar_prefetch = 0 : i64, scratch_operands = 2 : i64, tpu.core_type = #tpu.core_type<tc>, window_params = [{transform_indices = @transform_0, window_bounds = array<i64: 8, 8, 512>}, {pipeline_mode = #tpu.pipeline_mode<synchronous>, transform_indices = @transform_1, window_bounds = array<i64: 128, 512>}, {transform_indices = @transform_2, window_bounds = array<i64: 8, 128>}, {transform_indices = @transform_3, window_bounds = array<i64: 8, 128>}, {transform_indices = @transform_4, window_bounds = array<i64: 8, 8, 128>}, {transform_indices = @transform_5, window_bounds = array<i64: 8, 128>}, {transform_indices = @transform_6, window_bounds = array<i64: 8, 128>}]} {
    %c0_i32 = arith.constant 0 : i32
    %0 = arith.cmpi eq, %arg1, %c0_i32 : i32
    %1 = arith.extui %0 : i1 to i32
    %c0_i32_0 = arith.constant 0 : i32
    %2 = arith.cmpi ne, %1, %c0_i32_0 : i32
    scf.if %2 {
      %c0_98 = arith.constant 0 : index
      %c0_99 = arith.constant 0 : index
      %282 = vector.load %arg4[%c0_98, %c0_99] : memref<8x128xf32, #tpu.memory_space<vmem>>, vector<8x128xf32>
      %c0_100 = arith.constant 0 : index
      %c0_101 = arith.constant 0 : index
      %283 = vector.load %arg9[%c0_100, %c0_101] : memref<8x128xf32, #tpu.memory_space<vmem>>, vector<8x128xf32>
      tpu.vector_store %arg9[%c0_100, %c0_101], %282 {strides = array<i32>} : memref<8x128xf32, #tpu.memory_space<vmem>>, vector<8x128xf32>,
      %c0_102 = arith.constant 0 : index
      %c0_103 = arith.constant 0 : index
      %284 = vector.load %arg5[%c0_102, %c0_103] : memref<8x128xf32, #tpu.memory_space<vmem>>, vector<8x128xf32>
      %c0_104 = arith.constant 0 : index
      %c0_105 = arith.constant 0 : index
      %285 = vector.load %arg10[%c0_104, %c0_105] : memref<8x128xf32, #tpu.memory_space<vmem>>, vector<8x128xf32>
      tpu.vector_store %arg10[%c0_104, %c0_105], %284 {strides = array<i32>} : memref<8x128xf32, #tpu.memory_space<vmem>>, vector<8x128xf32>,
    } else {
    }
    %c0 = arith.constant 0 : index
    %c0_1 = arith.constant 0 : index
    %3 = vector.load %arg9[%c0, %c0_1] : memref<8x128xf32, #tpu.memory_space<vmem>>, vector<8x128xf32>
    %c0_2 = arith.constant 0 : index
    %c0_3 = arith.constant 0 : index
    %4 = vector.load %arg10[%c0_2, %c0_3] : memref<8x128xf32, #tpu.memory_space<vmem>>, vector<8x128xf32>
    %c0_4 = arith.constant 0 : index
    %c0_5 = arith.constant 0 : index
    %c0_6 = arith.constant 0 : index
    %5 = vector.load %arg2[%c0_4, %c0_5, %c0_6] : memref<8x8x512xf32, #tpu.memory_space<vmem>>, vector<1x8x512xf32>
    %6 = vector.shape_cast %5 : vector<1x8x512xf32> to vector<8x512xf32>
    %7 = arith.truncf %3 : vector<8x128xf32> to vector<8x128xbf16>
    %c0_7 = arith.constant 0 : index
    %c0_8 = arith.constant 0 : index
    %8 = vector.load %arg3[%c0_7, %c0_8] : memref<128x512xbf16, #tpu.memory_space<vmem>>, vector<128x512xbf16>
    %cst = arith.constant dense<0.000000e+00> : vector<8x512xf32>
    %9 = tpu.matmul %7, %8, %cst {dimension_numbers = #tpu.dot_dimension_numbers<[1], [0], [0], [1], [0, 0, 1, 1], [], []>} : vector<8x128xbf16>, vector<128x512xbf16>, vector<8x512xf32> -> vector<8x512xf32>
    %10 = arith.addf %6, %9 : vector<8x512xf32>
    %11 = vector.extract_strided_slice %10 {offsets = [0, 0], sizes = [8, 128], strides = [1, 1]} : vector<8x512xf32> to vector<8x128xf32>
    %12 = arith.negf %11 : vector<8x128xf32>
    %13 = math.exp %12 : vector<8x128xf32>
    %cst_9 = arith.constant 1.000000e+00 : f32
    %14 = vector.broadcast %cst_9 : f32 to vector<8x128xf32>
    %15 = arith.addf %14, %13 : vector<8x128xf32>
    %16 = arith.divf %14, %15 : vector<8x128xf32>
    %17 = vector.extract_strided_slice %10 {offsets = [0, 128], sizes = [8, 128], strides = [1, 1]} : vector<8x512xf32> to vector<8x128xf32>
    %18 = arith.negf %17 : vector<8x128xf32>
    %19 = math.exp %18 : vector<8x128xf32>
    %cst_10 = arith.constant 1.000000e+00 : f32
    %20 = vector.broadcast %cst_10 : f32 to vector<8x128xf32>
    %21 = arith.addf %20, %19 : vector<8x128xf32>
    %22 = arith.divf %20, %21 : vector<8x128xf32>
    %23 = vector.extract_strided_slice %10 {offsets = [0, 256], sizes = [8, 128], strides = [1, 1]} : vector<8x512xf32> to vector<8x128xf32>
    %24 = math.tanh %23 : vector<8x128xf32>
    %25 = vector.extract_strided_slice %10 {offsets = [0, 384], sizes = [8, 128], strides = [1, 1]} : vector<8x512xf32> to vector<8x128xf32>
    %26 = arith.negf %25 : vector<8x128xf32>
    %27 = math.exp %26 : vector<8x128xf32>
    %cst_11 = arith.constant 1.000000e+00 : f32
    %28 = vector.broadcast %cst_11 : f32 to vector<8x128xf32>
    %29 = arith.addf %28, %27 : vector<8x128xf32>
    %30 = arith.divf %28, %29 : vector<8x128xf32>
    %31 = arith.mulf %22, %4 : vector<8x128xf32>
    %32 = arith.mulf %16, %24 : vector<8x128xf32>
    %33 = arith.addf %31, %32 : vector<8x128xf32>
    %34 = math.tanh %33 : vector<8x128xf32>
    %35 = arith.mulf %30, %34 : vector<8x128xf32>
    %c0_12 = arith.constant 0 : index
    %c0_13 = arith.constant 0 : index
    %c0_14 = arith.constant 0 : index
    %36 = vector.load %arg6[%c0_12, %c0_13, %c0_14] : memref<8x8x128xf32, #tpu.memory_space<vmem>>, vector<1x8x128xf32>
    %37 = vector.shape_cast %36 : vector<1x8x128xf32> to vector<8x128xf32>
    %38 = vector.shape_cast %35 : vector<8x128xf32> to vector<1x8x128xf32>
    tpu.vector_store %arg6[%c0_12, %c0_13, %c0_14], %38 {strides = array<i32>} : memref<8x8x128xf32, #tpu.memory_space<vmem>>, vector<1x8x128xf32>,
    %c1 = arith.constant 1 : index
    %c0_15 = arith.constant 0 : index
    %c0_16 = arith.constant 0 : index
    %39 = vector.load %arg2[%c1, %c0_15, %c0_16] : memref<8x8x512xf32, #tpu.memory_space<vmem>>, vector<1x8x512xf32>
    %40 = vector.shape_cast %39 : vector<1x8x512xf32> to vector<8x512xf32>
    %41 = arith.truncf %35 : vector<8x128xf32> to vector<8x128xbf16>
    %c0_17 = arith.constant 0 : index
    %c0_18 = arith.constant 0 : index
    %42 = vector.load %arg3[%c0_17, %c0_18] : memref<128x512xbf16, #tpu.memory_space<vmem>>, vector<128x512xbf16>
    %cst_19 = arith.constant dense<0.000000e+00> : vector<8x512xf32>
    %43 = tpu.matmul %41, %42, %cst_19 {dimension_numbers = #tpu.dot_dimension_numbers<[1], [0], [0], [1], [0, 0, 1, 1], [], []>} : vector<8x128xbf16>, vector<128x512xbf16>, vector<8x512xf32> -> vector<8x512xf32>
    %44 = arith.addf %40, %43 : vector<8x512xf32>
    %45 = vector.extract_strided_slice %44 {offsets = [0, 0], sizes = [8, 128], strides = [1, 1]} : vector<8x512xf32> to vector<8x128xf32>
    %46 = arith.negf %45 : vector<8x128xf32>
    %47 = math.exp %46 : vector<8x128xf32>
    %cst_20 = arith.constant 1.000000e+00 : f32
    %48 = vector.broadcast %cst_20 : f32 to vector<8x128xf32>
    %49 = arith.addf %48, %47 : vector<8x128xf32>
    %50 = arith.divf %48, %49 : vector<8x128xf32>
    %51 = vector.extract_strided_slice %44 {offsets = [0, 128], sizes = [8, 128], strides = [1, 1]} : vector<8x512xf32> to vector<8x128xf32>
    %52 = arith.negf %51 : vector<8x128xf32>
    %53 = math.exp %52 : vector<8x128xf32>
    %cst_21 = arith.constant 1.000000e+00 : f32
    %54 = vector.broadcast %cst_21 : f32 to vector<8x128xf32>
    %55 = arith.addf %54, %53 : vector<8x128xf32>
    %56 = arith.divf %54, %55 : vector<8x128xf32>
    %57 = vector.extract_strided_slice %44 {offsets = [0, 256], sizes = [8, 128], strides = [1, 1]} : vector<8x512xf32> to vector<8x128xf32>
    %58 = math.tanh %57 : vector<8x128xf32>
    %59 = vector.extract_strided_slice %44 {offsets = [0, 384], sizes = [8, 128], strides = [1, 1]} : vector<8x512xf32> to vector<8x128xf32>
    %60 = arith.negf %59 : vector<8x128xf32>
    %61 = math.exp %60 : vector<8x128xf32>
    %cst_22 = arith.constant 1.000000e+00 : f32
    %62 = vector.broadcast %cst_22 : f32 to vector<8x128xf32>
    %63 = arith.addf %62, %61 : vector<8x128xf32>
    %64 = arith.divf %62, %63 : vector<8x128xf32>
    %65 = arith.mulf %56, %33 : vector<8x128xf32>
    %66 = arith.mulf %50, %58 : vector<8x128xf32>
    %67 = arith.addf %65, %66 : vector<8x128xf32>
    %68 = math.tanh %67 : vector<8x128xf32>
    %69 = arith.mulf %64, %68 : vector<8x128xf32>
    %c1_23 = arith.constant 1 : index
    %c0_24 = arith.constant 0 : index
    %c0_25 = arith.constant 0 : index
    %70 = vector.load %arg6[%c1_23, %c0_24, %c0_25] : memref<8x8x128xf32, #tpu.memory_space<vmem>>, vector<1x8x128xf32>
    %71 = vector.shape_cast %70 : vector<1x8x128xf32> to vector<8x128xf32>
    %72 = vector.shape_cast %69 : vector<8x128xf32> to vector<1x8x128xf32>
    tpu.vector_store %arg6[%c1_23, %c0_24, %c0_25], %72 {strides = array<i32>} : memref<8x8x128xf32, #tpu.memory_space<vmem>>, vector<1x8x128xf32>,
    %c2 = arith.constant 2 : index
    %c0_26 = arith.constant 0 : index
    %c0_27 = arith.constant 0 : index
    %73 = vector.load %arg2[%c2, %c0_26, %c0_27] : memref<8x8x512xf32, #tpu.memory_space<vmem>>, vector<1x8x512xf32>
    %74 = vector.shape_cast %73 : vector<1x8x512xf32> to vector<8x512xf32>
    %75 = arith.truncf %69 : vector<8x128xf32> to vector<8x128xbf16>
    %c0_28 = arith.constant 0 : index
    %c0_29 = arith.constant 0 : index
    %76 = vector.load %arg3[%c0_28, %c0_29] : memref<128x512xbf16, #tpu.memory_space<vmem>>, vector<128x512xbf16>
    %cst_30 = arith.constant dense<0.000000e+00> : vector<8x512xf32>
    %77 = tpu.matmul %75, %76, %cst_30 {dimension_numbers = #tpu.dot_dimension_numbers<[1], [0], [0], [1], [0, 0, 1, 1], [], []>} : vector<8x128xbf16>, vector<128x512xbf16>, vector<8x512xf32> -> vector<8x512xf32>
    %78 = arith.addf %74, %77 : vector<8x512xf32>
    %79 = vector.extract_strided_slice %78 {offsets = [0, 0], sizes = [8, 128], strides = [1, 1]} : vector<8x512xf32> to vector<8x128xf32>
    %80 = arith.negf %79 : vector<8x128xf32>
    %81 = math.exp %80 : vector<8x128xf32>
    %cst_31 = arith.constant 1.000000e+00 : f32
    %82 = vector.broadcast %cst_31 : f32 to vector<8x128xf32>
    %83 = arith.addf %82, %81 : vector<8x128xf32>
    %84 = arith.divf %82, %83 : vector<8x128xf32>
    %85 = vector.extract_strided_slice %78 {offsets = [0, 128], sizes = [8, 128], strides = [1, 1]} : vector<8x512xf32> to vector<8x128xf32>
    %86 = arith.negf %85 : vector<8x128xf32>
    %87 = math.exp %86 : vector<8x128xf32>
    %cst_32 = arith.constant 1.000000e+00 : f32
    %88 = vector.broadcast %cst_32 : f32 to vector<8x128xf32>
    %89 = arith.addf %88, %87 : vector<8x128xf32>
    %90 = arith.divf %88, %89 : vector<8x128xf32>
    %91 = vector.extract_strided_slice %78 {offsets = [0, 256], sizes = [8, 128], strides = [1, 1]} : vector<8x512xf32> to vector<8x128xf32>
    %92 = math.tanh %91 : vector<8x128xf32>
    %93 = vector.extract_strided_slice %78 {offsets = [0, 384], sizes = [8, 128], strides = [1, 1]} : vector<8x512xf32> to vector<8x128xf32>
    %94 = arith.negf %93 : vector<8x128xf32>
    %95 = math.exp %94 : vector<8x128xf32>
    %cst_33 = arith.constant 1.000000e+00 : f32
    %96 = vector.broadcast %cst_33 : f32 to vector<8x128xf32>
    %97 = arith.addf %96, %95 : vector<8x128xf32>
    %98 = arith.divf %96, %97 : vector<8x128xf32>
    %99 = arith.mulf %90, %67 : vector<8x128xf32>
    %100 = arith.mulf %84, %92 : vector<8x128xf32>
    %101 = arith.addf %99, %100 : vector<8x128xf32>
    %102 = math.tanh %101 : vector<8x128xf32>
    %103 = arith.mulf %98, %102 : vector<8x128xf32>
    %c2_34 = arith.constant 2 : index
    %c0_35 = arith.constant 0 : index
    %c0_36 = arith.constant 0 : index
    %104 = vector.load %arg6[%c2_34, %c0_35, %c0_36] : memref<8x8x128xf32, #tpu.memory_space<vmem>>, vector<1x8x128xf32>
    %105 = vector.shape_cast %104 : vector<1x8x128xf32> to vector<8x128xf32>
    %106 = vector.shape_cast %103 : vector<8x128xf32> to vector<1x8x128xf32>
    tpu.vector_store %arg6[%c2_34, %c0_35, %c0_36], %106 {strides = array<i32>} : memref<8x8x128xf32, #tpu.memory_space<vmem>>, vector<1x8x128xf32>,
    %c3 = arith.constant 3 : index
    %c0_37 = arith.constant 0 : index
    %c0_38 = arith.constant 0 : index
    %107 = vector.load %arg2[%c3, %c0_37, %c0_38] : memref<8x8x512xf32, #tpu.memory_space<vmem>>, vector<1x8x512xf32>
    %108 = vector.shape_cast %107 : vector<1x8x512xf32> to vector<8x512xf32>
    %109 = arith.truncf %103 : vector<8x128xf32> to vector<8x128xbf16>
    %c0_39 = arith.constant 0 : index
    %c0_40 = arith.constant 0 : index
    %110 = vector.load %arg3[%c0_39, %c0_40] : memref<128x512xbf16, #tpu.memory_space<vmem>>, vector<128x512xbf16>
    %cst_41 = arith.constant dense<0.000000e+00> : vector<8x512xf32>
    %111 = tpu.matmul %109, %110, %cst_41 {dimension_numbers = #tpu.dot_dimension_numbers<[1], [0], [0], [1], [0, 0, 1, 1], [], []>} : vector<8x128xbf16>, vector<128x512xbf16>, vector<8x512xf32> -> vector<8x512xf32>
    %112 = arith.addf %108, %111 : vector<8x512xf32>
    %113 = vector.extract_strided_slice %112 {offsets = [0, 0], sizes = [8, 128], strides = [1, 1]} : vector<8x512xf32> to vector<8x128xf32>
    %114 = arith.negf %113 : vector<8x128xf32>
    %115 = math.exp %114 : vector<8x128xf32>
    %cst_42 = arith.constant 1.000000e+00 : f32
    %116 = vector.broadcast %cst_42 : f32 to vector<8x128xf32>
    %117 = arith.addf %116, %115 : vector<8x128xf32>
    %118 = arith.divf %116, %117 : vector<8x128xf32>
    %119 = vector.extract_strided_slice %112 {offsets = [0, 128], sizes = [8, 128], strides = [1, 1]} : vector<8x512xf32> to vector<8x128xf32>
    %120 = arith.negf %119 : vector<8x128xf32>
    %121 = math.exp %120 : vector<8x128xf32>
    %cst_43 = arith.constant 1.000000e+00 : f32
    %122 = vector.broadcast %cst_43 : f32 to vector<8x128xf32>
    %123 = arith.addf %122, %121 : vector<8x128xf32>
    %124 = arith.divf %122, %123 : vector<8x128xf32>
    %125 = vector.extract_strided_slice %112 {offsets = [0, 256], sizes = [8, 128], strides = [1, 1]} : vector<8x512xf32> to vector<8x128xf32>
    %126 = math.tanh %125 : vector<8x128xf32>
    %127 = vector.extract_strided_slice %112 {offsets = [0, 384], sizes = [8, 128], strides = [1, 1]} : vector<8x512xf32> to vector<8x128xf32>
    %128 = arith.negf %127 : vector<8x128xf32>
    %129 = math.exp %128 : vector<8x128xf32>
    %cst_44 = arith.constant 1.000000e+00 : f32
    %130 = vector.broadcast %cst_44 : f32 to vector<8x128xf32>
    %131 = arith.addf %130, %129 : vector<8x128xf32>
    %132 = arith.divf %130, %131 : vector<8x128xf32>
    %133 = arith.mulf %124, %101 : vector<8x128xf32>
    %134 = arith.mulf %118, %126 : vector<8x128xf32>
    %135 = arith.addf %133, %134 : vector<8x128xf32>
    %136 = math.tanh %135 : vector<8x128xf32>
    %137 = arith.mulf %132, %136 : vector<8x128xf32>
    %c3_45 = arith.constant 3 : index
    %c0_46 = arith.constant 0 : index
    %c0_47 = arith.constant 0 : index
    %138 = vector.load %arg6[%c3_45, %c0_46, %c0_47] : memref<8x8x128xf32, #tpu.memory_space<vmem>>, vector<1x8x128xf32>
    %139 = vector.shape_cast %138 : vector<1x8x128xf32> to vector<8x128xf32>
    %140 = vector.shape_cast %137 : vector<8x128xf32> to vector<1x8x128xf32>
    tpu.vector_store %arg6[%c3_45, %c0_46, %c0_47], %140 {strides = array<i32>} : memref<8x8x128xf32, #tpu.memory_space<vmem>>, vector<1x8x128xf32>,
    %c4 = arith.constant 4 : index
    %c0_48 = arith.constant 0 : index
    %c0_49 = arith.constant 0 : index
    %141 = vector.load %arg2[%c4, %c0_48, %c0_49] : memref<8x8x512xf32, #tpu.memory_space<vmem>>, vector<1x8x512xf32>
    %142 = vector.shape_cast %141 : vector<1x8x512xf32> to vector<8x512xf32>
    %143 = arith.truncf %137 : vector<8x128xf32> to vector<8x128xbf16>
    %c0_50 = arith.constant 0 : index
    %c0_51 = arith.constant 0 : index
    %144 = vector.load %arg3[%c0_50, %c0_51] : memref<128x512xbf16, #tpu.memory_space<vmem>>, vector<128x512xbf16>
    %cst_52 = arith.constant dense<0.000000e+00> : vector<8x512xf32>
    %145 = tpu.matmul %143, %144, %cst_52 {dimension_numbers = #tpu.dot_dimension_numbers<[1], [0], [0], [1], [0, 0, 1, 1], [], []>} : vector<8x128xbf16>, vector<128x512xbf16>, vector<8x512xf32> -> vector<8x512xf32>
    %146 = arith.addf %142, %145 : vector<8x512xf32>
    %147 = vector.extract_strided_slice %146 {offsets = [0, 0], sizes = [8, 128], strides = [1, 1]} : vector<8x512xf32> to vector<8x128xf32>
    %148 = arith.negf %147 : vector<8x128xf32>
    %149 = math.exp %148 : vector<8x128xf32>
    %cst_53 = arith.constant 1.000000e+00 : f32
    %150 = vector.broadcast %cst_53 : f32 to vector<8x128xf32>
    %151 = arith.addf %150, %149 : vector<8x128xf32>
    %152 = arith.divf %150, %151 : vector<8x128xf32>
    %153 = vector.extract_strided_slice %146 {offsets = [0, 128], sizes = [8, 128], strides = [1, 1]} : vector<8x512xf32> to vector<8x128xf32>
    %154 = arith.negf %153 : vector<8x128xf32>
    %155 = math.exp %154 : vector<8x128xf32>
    %cst_54 = arith.constant 1.000000e+00 : f32
    %156 = vector.broadcast %cst_54 : f32 to vector<8x128xf32>
    %157 = arith.addf %156, %155 : vector<8x128xf32>
    %158 = arith.divf %156, %157 : vector<8x128xf32>
    %159 = vector.extract_strided_slice %146 {offsets = [0, 256], sizes = [8, 128], strides = [1, 1]} : vector<8x512xf32> to vector<8x128xf32>
    %160 = math.tanh %159 : vector<8x128xf32>
    %161 = vector.extract_strided_slice %146 {offsets = [0, 384], sizes = [8, 128], strides = [1, 1]} : vector<8x512xf32> to vector<8x128xf32>
    %162 = arith.negf %161 : vector<8x128xf32>
    %163 = math.exp %162 : vector<8x128xf32>
    %cst_55 = arith.constant 1.000000e+00 : f32
    %164 = vector.broadcast %cst_55 : f32 to vector<8x128xf32>
    %165 = arith.addf %164, %163 : vector<8x128xf32>
    %166 = arith.divf %164, %165 : vector<8x128xf32>
    %167 = arith.mulf %158, %135 : vector<8x128xf32>
    %168 = arith.mulf %152, %160 : vector<8x128xf32>
    %169 = arith.addf %167, %168 : vector<8x128xf32>
    %170 = math.tanh %169 : vector<8x128xf32>
    %171 = arith.mulf %166, %170 : vector<8x128xf32>
    %c4_56 = arith.constant 4 : index
    %c0_57 = arith.constant 0 : index
    %c0_58 = arith.constant 0 : index
    %172 = vector.load %arg6[%c4_56, %c0_57, %c0_58] : memref<8x8x128xf32, #tpu.memory_space<vmem>>, vector<1x8x128xf32>
    %173 = vector.shape_cast %172 : vector<1x8x128xf32> to vector<8x128xf32>
    %174 = vector.shape_cast %171 : vector<8x128xf32> to vector<1x8x128xf32>
    tpu.vector_store %arg6[%c4_56, %c0_57, %c0_58], %174 {strides = array<i32>} : memref<8x8x128xf32, #tpu.memory_space<vmem>>, vector<1x8x128xf32>,
    %c5 = arith.constant 5 : index
    %c0_59 = arith.constant 0 : index
    %c0_60 = arith.constant 0 : index
    %175 = vector.load %arg2[%c5, %c0_59, %c0_60] : memref<8x8x512xf32, #tpu.memory_space<vmem>>, vector<1x8x512xf32>
    %176 = vector.shape_cast %175 : vector<1x8x512xf32> to vector<8x512xf32>
    %177 = arith.truncf %171 : vector<8x128xf32> to vector<8x128xbf16>
    %c0_61 = arith.constant 0 : index
    %c0_62 = arith.constant 0 : index
    %178 = vector.load %arg3[%c0_61, %c0_62] : memref<128x512xbf16, #tpu.memory_space<vmem>>, vector<128x512xbf16>
    %cst_63 = arith.constant dense<0.000000e+00> : vector<8x512xf32>
    %179 = tpu.matmul %177, %178, %cst_63 {dimension_numbers = #tpu.dot_dimension_numbers<[1], [0], [0], [1], [0, 0, 1, 1], [], []>} : vector<8x128xbf16>, vector<128x512xbf16>, vector<8x512xf32> -> vector<8x512xf32>
    %180 = arith.addf %176, %179 : vector<8x512xf32>
    %181 = vector.extract_strided_slice %180 {offsets = [0, 0], sizes = [8, 128], strides = [1, 1]} : vector<8x512xf32> to vector<8x128xf32>
    %182 = arith.negf %181 : vector<8x128xf32>
    %183 = math.exp %182 : vector<8x128xf32>
    %cst_64 = arith.constant 1.000000e+00 : f32
    %184 = vector.broadcast %cst_64 : f32 to vector<8x128xf32>
    %185 = arith.addf %184, %183 : vector<8x128xf32>
    %186 = arith.divf %184, %185 : vector<8x128xf32>
    %187 = vector.extract_strided_slice %180 {offsets = [0, 128], sizes = [8, 128], strides = [1, 1]} : vector<8x512xf32> to vector<8x128xf32>
    %188 = arith.negf %187 : vector<8x128xf32>
    %189 = math.exp %188 : vector<8x128xf32>
    %cst_65 = arith.constant 1.000000e+00 : f32
    %190 = vector.broadcast %cst_65 : f32 to vector<8x128xf32>
    %191 = arith.addf %190, %189 : vector<8x128xf32>
    %192 = arith.divf %190, %191 : vector<8x128xf32>
    %193 = vector.extract_strided_slice %180 {offsets = [0, 256], sizes = [8, 128], strides = [1, 1]} : vector<8x512xf32> to vector<8x128xf32>
    %194 = math.tanh %193 : vector<8x128xf32>
    %195 = vector.extract_strided_slice %180 {offsets = [0, 384], sizes = [8, 128], strides = [1, 1]} : vector<8x512xf32> to vector<8x128xf32>
    %196 = arith.negf %195 : vector<8x128xf32>
    %197 = math.exp %196 : vector<8x128xf32>
    %cst_66 = arith.constant 1.000000e+00 : f32
    %198 = vector.broadcast %cst_66 : f32 to vector<8x128xf32>
    %199 = arith.addf %198, %197 : vector<8x128xf32>
    %200 = arith.divf %198, %199 : vector<8x128xf32>
    %201 = arith.mulf %192, %169 : vector<8x128xf32>
    %202 = arith.mulf %186, %194 : vector<8x128xf32>
    %203 = arith.addf %201, %202 : vector<8x128xf32>
    %204 = math.tanh %203 : vector<8x128xf32>
    %205 = arith.mulf %200, %204 : vector<8x128xf32>
    %c5_67 = arith.constant 5 : index
    %c0_68 = arith.constant 0 : index
    %c0_69 = arith.constant 0 : index
    %206 = vector.load %arg6[%c5_67, %c0_68, %c0_69] : memref<8x8x128xf32, #tpu.memory_space<vmem>>, vector<1x8x128xf32>
    %207 = vector.shape_cast %206 : vector<1x8x128xf32> to vector<8x128xf32>
    %208 = vector.shape_cast %205 : vector<8x128xf32> to vector<1x8x128xf32>
    tpu.vector_store %arg6[%c5_67, %c0_68, %c0_69], %208 {strides = array<i32>} : memref<8x8x128xf32, #tpu.memory_space<vmem>>, vector<1x8x128xf32>,
    %c6 = arith.constant 6 : index
    %c0_70 = arith.constant 0 : index
    %c0_71 = arith.constant 0 : index
    %209 = vector.load %arg2[%c6, %c0_70, %c0_71] : memref<8x8x512xf32, #tpu.memory_space<vmem>>, vector<1x8x512xf32>
    %210 = vector.shape_cast %209 : vector<1x8x512xf32> to vector<8x512xf32>
    %211 = arith.truncf %205 : vector<8x128xf32> to vector<8x128xbf16>
    %c0_72 = arith.constant 0 : index
    %c0_73 = arith.constant 0 : index
    %212 = vector.load %arg3[%c0_72, %c0_73] : memref<128x512xbf16, #tpu.memory_space<vmem>>, vector<128x512xbf16>
    %cst_74 = arith.constant dense<0.000000e+00> : vector<8x512xf32>
    %213 = tpu.matmul %211, %212, %cst_74 {dimension_numbers = #tpu.dot_dimension_numbers<[1], [0], [0], [1], [0, 0, 1, 1], [], []>} : vector<8x128xbf16>, vector<128x512xbf16>, vector<8x512xf32> -> vector<8x512xf32>
    %214 = arith.addf %210, %213 : vector<8x512xf32>
    %215 = vector.extract_strided_slice %214 {offsets = [0, 0], sizes = [8, 128], strides = [1, 1]} : vector<8x512xf32> to vector<8x128xf32>
    %216 = arith.negf %215 : vector<8x128xf32>
    %217 = math.exp %216 : vector<8x128xf32>
    %cst_75 = arith.constant 1.000000e+00 : f32
    %218 = vector.broadcast %cst_75 : f32 to vector<8x128xf32>
    %219 = arith.addf %218, %217 : vector<8x128xf32>
    %220 = arith.divf %218, %219 : vector<8x128xf32>
    %221 = vector.extract_strided_slice %214 {offsets = [0, 128], sizes = [8, 128], strides = [1, 1]} : vector<8x512xf32> to vector<8x128xf32>
    %222 = arith.negf %221 : vector<8x128xf32>
    %223 = math.exp %222 : vector<8x128xf32>
    %cst_76 = arith.constant 1.000000e+00 : f32
    %224 = vector.broadcast %cst_76 : f32 to vector<8x128xf32>
    %225 = arith.addf %224, %223 : vector<8x128xf32>
    %226 = arith.divf %224, %225 : vector<8x128xf32>
    %227 = vector.extract_strided_slice %214 {offsets = [0, 256], sizes = [8, 128], strides = [1, 1]} : vector<8x512xf32> to vector<8x128xf32>
    %228 = math.tanh %227 : vector<8x128xf32>
    %229 = vector.extract_strided_slice %214 {offsets = [0, 384], sizes = [8, 128], strides = [1, 1]} : vector<8x512xf32> to vector<8x128xf32>
    %230 = arith.negf %229 : vector<8x128xf32>
    %231 = math.exp %230 : vector<8x128xf32>
    %cst_77 = arith.constant 1.000000e+00 : f32
    %232 = vector.broadcast %cst_77 : f32 to vector<8x128xf32>
    %233 = arith.addf %232, %231 : vector<8x128xf32>
    %234 = arith.divf %232, %233 : vector<8x128xf32>
    %235 = arith.mulf %226, %203 : vector<8x128xf32>
    %236 = arith.mulf %220, %228 : vector<8x128xf32>
    %237 = arith.addf %235, %236 : vector<8x128xf32>
    %238 = math.tanh %237 : vector<8x128xf32>
    %239 = arith.mulf %234, %238 : vector<8x128xf32>
    %c6_78 = arith.constant 6 : index
    %c0_79 = arith.constant 0 : index
    %c0_80 = arith.constant 0 : index
    %240 = vector.load %arg6[%c6_78, %c0_79, %c0_80] : memref<8x8x128xf32, #tpu.memory_space<vmem>>, vector<1x8x128xf32>
    %241 = vector.shape_cast %240 : vector<1x8x128xf32> to vector<8x128xf32>
    %242 = vector.shape_cast %239 : vector<8x128xf32> to vector<1x8x128xf32>
    tpu.vector_store %arg6[%c6_78, %c0_79, %c0_80], %242 {strides = array<i32>} : memref<8x8x128xf32, #tpu.memory_space<vmem>>, vector<1x8x128xf32>,
    %c7 = arith.constant 7 : index
    %c0_81 = arith.constant 0 : index
    %c0_82 = arith.constant 0 : index
    %243 = vector.load %arg2[%c7, %c0_81, %c0_82] : memref<8x8x512xf32, #tpu.memory_space<vmem>>, vector<1x8x512xf32>
    %244 = vector.shape_cast %243 : vector<1x8x512xf32> to vector<8x512xf32>
    %245 = arith.truncf %239 : vector<8x128xf32> to vector<8x128xbf16>
    %c0_83 = arith.constant 0 : index
    %c0_84 = arith.constant 0 : index
    %246 = vector.load %arg3[%c0_83, %c0_84] : memref<128x512xbf16, #tpu.memory_space<vmem>>, vector<128x512xbf16>
    %cst_85 = arith.constant dense<0.000000e+00> : vector<8x512xf32>
    %247 = tpu.matmul %245, %246, %cst_85 {dimension_numbers = #tpu.dot_dimension_numbers<[1], [0], [0], [1], [0, 0, 1, 1], [], []>} : vector<8x128xbf16>, vector<128x512xbf16>, vector<8x512xf32> -> vector<8x512xf32>
    %248 = arith.addf %244, %247 : vector<8x512xf32>
    %249 = vector.extract_strided_slice %248 {offsets = [0, 0], sizes = [8, 128], strides = [1, 1]} : vector<8x512xf32> to vector<8x128xf32>
    %250 = arith.negf %249 : vector<8x128xf32>
    %251 = math.exp %250 : vector<8x128xf32>
    %cst_86 = arith.constant 1.000000e+00 : f32
    %252 = vector.broadcast %cst_86 : f32 to vector<8x128xf32>
    %253 = arith.addf %252, %251 : vector<8x128xf32>
    %254 = arith.divf %252, %253 : vector<8x128xf32>
    %255 = vector.extract_strided_slice %248 {offsets = [0, 128], sizes = [8, 128], strides = [1, 1]} : vector<8x512xf32> to vector<8x128xf32>
    %256 = arith.negf %255 : vector<8x128xf32>
    %257 = math.exp %256 : vector<8x128xf32>
    %cst_87 = arith.constant 1.000000e+00 : f32
    %258 = vector.broadcast %cst_87 : f32 to vector<8x128xf32>
    %259 = arith.addf %258, %257 : vector<8x128xf32>
    %260 = arith.divf %258, %259 : vector<8x128xf32>
    %261 = vector.extract_strided_slice %248 {offsets = [0, 256], sizes = [8, 128], strides = [1, 1]} : vector<8x512xf32> to vector<8x128xf32>
    %262 = math.tanh %261 : vector<8x128xf32>
    %263 = vector.extract_strided_slice %248 {offsets = [0, 384], sizes = [8, 128], strides = [1, 1]} : vector<8x512xf32> to vector<8x128xf32>
    %264 = arith.negf %263 : vector<8x128xf32>
    %265 = math.exp %264 : vector<8x128xf32>
    %cst_88 = arith.constant 1.000000e+00 : f32
    %266 = vector.broadcast %cst_88 : f32 to vector<8x128xf32>
    %267 = arith.addf %266, %265 : vector<8x128xf32>
    %268 = arith.divf %266, %267 : vector<8x128xf32>
    %269 = arith.mulf %260, %237 : vector<8x128xf32>
    %270 = arith.mulf %254, %262 : vector<8x128xf32>
    %271 = arith.addf %269, %270 : vector<8x128xf32>
    %272 = math.tanh %271 : vector<8x128xf32>
    %273 = arith.mulf %268, %272 : vector<8x128xf32>
    %c7_89 = arith.constant 7 : index
    %c0_90 = arith.constant 0 : index
    %c0_91 = arith.constant 0 : index
    %274 = vector.load %arg6[%c7_89, %c0_90, %c0_91] : memref<8x8x128xf32, #tpu.memory_space<vmem>>, vector<1x8x128xf32>
    %275 = vector.shape_cast %274 : vector<1x8x128xf32> to vector<8x128xf32>
    %276 = vector.shape_cast %273 : vector<8x128xf32> to vector<1x8x128xf32>
    tpu.vector_store %arg6[%c7_89, %c0_90, %c0_91], %276 {strides = array<i32>} : memref<8x8x128xf32, #tpu.memory_space<vmem>>, vector<1x8x128xf32>,
    %c0_92 = arith.constant 0 : index
    %c0_93 = arith.constant 0 : index
    %277 = vector.load %arg9[%c0_92, %c0_93] : memref<8x128xf32, #tpu.memory_space<vmem>>, vector<8x128xf32>
    tpu.vector_store %arg9[%c0_92, %c0_93], %273 {strides = array<i32>} : memref<8x128xf32, #tpu.memory_space<vmem>>, vector<8x128xf32>,
    %c0_94 = arith.constant 0 : index
    %c0_95 = arith.constant 0 : index
    %278 = vector.load %arg10[%c0_94, %c0_95] : memref<8x128xf32, #tpu.memory_space<vmem>>, vector<8x128xf32>
    tpu.vector_store %arg10[%c0_94, %c0_95], %271 {strides = array<i32>} : memref<8x128xf32, #tpu.memory_space<vmem>>, vector<8x128xf32>,
    %c0_i32_96 = arith.constant 0 : i32
    %279 = arith.cmpi eq, %arg1, %c0_i32_96 : i32
    %280 = arith.extui %279 : i1 to i32
    %c0_i32_97 = arith.constant 0 : i32
    %281 = arith.cmpi ne, %280, %c0_i32_97 : i32
    scf.if %281 {
      %c0_98 = arith.constant 0 : index
      %c0_99 = arith.constant 0 : index
      %282 = vector.load %arg7[%c0_98, %c0_99] : memref<8x128xf32, #tpu.memory_space<vmem>>, vector<8x128xf32>
      tpu.vector_store %arg7[%c0_98, %c0_99], %273 {strides = array<i32>} : memref<8x128xf32, #tpu.memory_space<vmem>>, vector<8x128xf32>,
      %c0_100 = arith.constant 0 : index
      %c0_101 = arith.constant 0 : index
      %283 = vector.load %arg8[%c0_100, %c0_101] : memref<8x128xf32, #tpu.memory_space<vmem>>, vector<8x128xf32>
      tpu.vector_store %arg8[%c0_100, %c0_101], %271 {strides = array<i32>} : memref<8x128xf32, #tpu.memory_space<vmem>>, vector<8x128xf32>,
    } else {
    }
    return
  }
  func.func @transform_0(%arg0: i32, %arg1: i32) -> (i32, i32, i32) {
    %c0_i32 = arith.constant 0 : i32
    %c0_i32_0 = arith.constant 0 : i32
    return %arg1, %arg0, %c0_i32 : i32, i32, i32
  }
  func.func @transform_1(%arg0: i32, %arg1: i32) -> (i32, i32) {
    %c0_i32 = arith.constant 0 : i32
    %c0_i32_0 = arith.constant 0 : i32
    %c0_i32_1 = arith.constant 0 : i32
    return %c0_i32, %c0_i32_0 : i32, i32
  }
  func.func @transform_2(%arg0: i32, %arg1: i32) -> (i32, i32) {
    %c0_i32 = arith.constant 0 : i32
    %c0_i32_0 = arith.constant 0 : i32
    return %arg0, %c0_i32 : i32, i32
  }
  func.func @transform_3(%arg0: i32, %arg1: i32) -> (i32, i32) {
    %c0_i32 = arith.constant 0 : i32
    %c0_i32_0 = arith.constant 0 : i32
    return %arg0, %c0_i32 : i32, i32
  }
  func.func @transform_4(%arg0: i32, %arg1: i32) -> (i32, i32, i32) {
    %c0_i32 = arith.constant 0 : i32
    %c0_i32_0 = arith.constant 0 : i32
    return %arg1, %arg0, %c0_i32 : i32, i32, i32
  }
  func.func @transform_5(%arg0: i32, %arg1: i32) -> (i32, i32) {
    %c0_i32 = arith.constant 0 : i32
    %c0_i32_0 = arith.constant 0 : i32
    return %arg0, %c0_i32 : i32, i32
  }
  func.func @transform_6(%arg0: i32, %arg1: i32) -> (i32, i32) {
    %c0_i32 = arith.constant 0 : i32
    %c0_i32_0 = arith.constant 0 : i32
    return %arg0, %c0_i32 : i32, i32
  }
}

module attributes {stable_mosaic.version = 11 : i64} {
  func.func @_matmul_bias_kernel(%arg0: i32, %arg1: i32, %arg2: i32, %arg3: memref<64x128xbf16, #tpu.memory_space<vmem>>, %arg4: memref<128x128xbf16, #tpu.memory_space<vmem>>, %arg5: memref<1x128xf32, #tpu.memory_space<vmem>>, %arg6: memref<64x128xf32, #tpu.memory_space<vmem>>, %arg7: memref<64x128xf32, #tpu.memory_space<vmem>>) attributes {dimension_semantics = [#tpu.dimension_semantics<parallel>, #tpu.dimension_semantics<parallel>, #tpu.dimension_semantics<arbitrary>], iteration_bounds = array<i64: 1, 1, 1>, scalar_prefetch = 0 : i64, scratch_operands = 1 : i64, tpu.core_type = #tpu.core_type<tc>, window_params = [{transform_indices = @transform_0, window_bounds = array<i64: 64, 128>}, {transform_indices = @transform_1, window_bounds = array<i64: 128, 128>}, {transform_indices = @transform_2, window_bounds = array<i64: 1, 128>}, {transform_indices = @transform_3, window_bounds = array<i64: 64, 128>}]} {
    %c0_i32 = arith.constant 0 : i32
    %0 = arith.cmpi eq, %arg2, %c0_i32 : i32
    %1 = arith.extui %0 : i1 to i32
    %c0_i32_0 = arith.constant 0 : i32
    %2 = arith.cmpi ne, %1, %c0_i32_0 : i32
    scf.if %2 {
      %cst_10 = arith.constant 0.000000e+00 : f32
      %12 = vector.broadcast %cst_10 : f32 to vector<64x128xf32>
      %c0_11 = arith.constant 0 : index
      %c0_12 = arith.constant 0 : index
      %13 = vector.load %arg7[%c0_11, %c0_12] : memref<64x128xf32, #tpu.memory_space<vmem>>, vector<64x128xf32>
      tpu.vector_store %arg7[%c0_11, %c0_12], %12 {strides = array<i32>} : memref<64x128xf32, #tpu.memory_space<vmem>>, vector<64x128xf32>,
    } else {
    }
    %c0 = arith.constant 0 : index
    %c0_1 = arith.constant 0 : index
    %3 = vector.load %arg7[%c0, %c0_1] : memref<64x128xf32, #tpu.memory_space<vmem>>, vector<64x128xf32>
    %c0_2 = arith.constant 0 : index
    %c0_3 = arith.constant 0 : index
    %4 = vector.load %arg3[%c0_2, %c0_3] : memref<64x128xbf16, #tpu.memory_space<vmem>>, vector<64x128xbf16>
    %c0_4 = arith.constant 0 : index
    %c0_5 = arith.constant 0 : index
    %5 = vector.load %arg4[%c0_4, %c0_5] : memref<128x128xbf16, #tpu.memory_space<vmem>>, vector<128x128xbf16>
    %cst = arith.constant dense<0.000000e+00> : vector<64x128xf32>
    %6 = tpu.matmul %4, %5, %cst {dimension_numbers = #tpu.dot_dimension_numbers<[1], [0], [0], [1], [0, 0, 1, 1], [], []>} : vector<64x128xbf16>, vector<128x128xbf16>, vector<64x128xf32> -> vector<64x128xf32>
    %7 = arith.addf %3, %6 : vector<64x128xf32>
    %c0_6 = arith.constant 0 : index
    %c0_7 = arith.constant 0 : index
    %8 = vector.load %arg7[%c0_6, %c0_7] : memref<64x128xf32, #tpu.memory_space<vmem>>, vector<64x128xf32>
    tpu.vector_store %arg7[%c0_6, %c0_7], %7 {strides = array<i32>} : memref<64x128xf32, #tpu.memory_space<vmem>>, vector<64x128xf32>,
    %c0_i32_8 = arith.constant 0 : i32
    %9 = arith.cmpi eq, %arg2, %c0_i32_8 : i32
    %10 = arith.extui %9 : i1 to i32
    %c0_i32_9 = arith.constant 0 : i32
    %11 = arith.cmpi ne, %10, %c0_i32_9 : i32
    scf.if %11 {
      %c0_10 = arith.constant 0 : index
      %c0_11 = arith.constant 0 : index
      %12 = vector.load %arg7[%c0_10, %c0_11] : memref<64x128xf32, #tpu.memory_space<vmem>>, vector<64x128xf32>
      %c0_12 = arith.constant 0 : index
      %c0_13 = arith.constant 0 : index
      %13 = vector.load %arg5[%c0_12, %c0_13] : memref<1x128xf32, #tpu.memory_space<vmem>>, vector<1x128xf32>
      %14 = vector.broadcast %13 : vector<1x128xf32> to vector<64x128xf32>
      %15 = arith.addf %12, %14 : vector<64x128xf32>
      %c0_14 = arith.constant 0 : index
      %c0_15 = arith.constant 0 : index
      %16 = vector.load %arg6[%c0_14, %c0_15] : memref<64x128xf32, #tpu.memory_space<vmem>>, vector<64x128xf32>
      tpu.vector_store %arg6[%c0_14, %c0_15], %15 {strides = array<i32>} : memref<64x128xf32, #tpu.memory_space<vmem>>, vector<64x128xf32>,
    } else {
    }
    return
  }
  func.func @transform_0(%arg0: i32, %arg1: i32, %arg2: i32) -> (i32, i32) {
    %c0_i32 = arith.constant 0 : i32
    return %arg0, %arg2 : i32, i32
  }
  func.func @transform_1(%arg0: i32, %arg1: i32, %arg2: i32) -> (i32, i32) {
    %c0_i32 = arith.constant 0 : i32
    return %arg2, %arg1 : i32, i32
  }
  func.func @transform_2(%arg0: i32, %arg1: i32, %arg2: i32) -> (i32, i32) {
    %c0_i32 = arith.constant 0 : i32
    %c0_i32_0 = arith.constant 0 : i32
    return %c0_i32, %arg1 : i32, i32
  }
  func.func @transform_3(%arg0: i32, %arg1: i32, %arg2: i32) -> (i32, i32) {
    %c0_i32 = arith.constant 0 : i32
    return %arg0, %arg1 : i32, i32
  }
}

</mosaic_0001>

<llo_original>
// kernel: rnn_model_forward.9
$region0: #{rnn_model_forward.9}
  #allocation0 [shape = 'u32[]', space=smem, size = 0x4, offset = 0x4, fixed_abs, tag = 'smem constant byte address 0x4 - core index']
  #allocation1 [shape = 'u32[144,128]{1,0:T(1,128)}', space=vmem, size = 0x12000, scoped, tag = 'internal scratch']
  #allocation2 [shape = 'f32[64,128]{1,0:T(8,128)}', space=vmem, size = 0x8000, scoped, tag = 'scratch operand']
  %s0 = inlined_call_operand.vmem [shape: bf16[64,128], index: 0, kind: input, shape index: {}]
  %s1 = inlined_call_operand.vmem [shape: bf16[128,128], index: 1, kind: input, shape index: {}]
  %s2 = inlined_call_operand.vmem [shape: f32[1,128], index: 2, kind: input, shape index: {}]
  %s3 = inlined_call_operand.vmem [shape: f32[64,128], index: 3, kind: output, shape index: {}]
  %s4 = sld [smem:[#allocation0]]
  $region30: #{rnn_model_forward.9} parent=0
    _
  %s6 = ssub.s32 1, %s4
  %s7 = scalar_select 0, %s6, %s4
  // Predicated region
  $region2: #{rnn_model_forward.9} parent=0 // pred_check
    _
  $region3: #{rnn_model_forward.9} parent=0 // pred_check_branch
    %9 = sbr.rel (0) target = $region5
  $region4: #{rnn_model_forward.9} parent=0 // pred_region
    _
  $region5: #{rnn_model_forward.9} parent=0 // pred_fallthru
    _
  // Predicated region
  $region6: #{rnn_model_forward.9} parent=0 // pred_check
    _
  $region7: #{rnn_model_forward.9} parent=0 // pred_check_branch
    %11 = sbr.rel (0) target = $region9
  $region8: #{rnn_model_forward.9} parent=0 // pred_region
    _
  $region9: #{rnn_model_forward.9} parent=0 // pred_fallthru
    _
  // Predicated region
  $region10: #{rnn_model_forward.9} parent=0 // pred_check
    _
  $region11: #{rnn_model_forward.9} parent=0 // pred_check_branch
    %13 = sbr.rel (0) target = $region13
  $region12: #{rnn_model_forward.9} parent=0 // pred_region
    _
  $region13: #{rnn_model_forward.9} parent=0 // pred_fallthru
    _
  %p15 = scmp.eq.s32.totalorder 0, 0
  // Predicated region
  $region14: #{rnn_model_forward.9} parent=0 // pred_check
    %p16 = pneg %p15
  $region15: #{rnn_model_forward.9} parent=0 // pred_check_branch
    %18 = sbr.rel (%p16) target = $region17
  $region16: #{rnn_model_forward.9} parent=0 // pred_region
    %19 = vst [vmem:[#allocation2] sm:$0xff] 0.0
    %20 = vst [vmem:[#allocation2 + $0x8] sm:$0xff] 0.0
    %21 = vst [vmem:[#allocation2 + $0x10] sm:$0xff] 0.0
    %22 = vst [vmem:[#allocation2 + $0x18] sm:$0xff] 0.0
    %23 = vst [vmem:[#allocation2 + $0x20] sm:$0xff] 0.0
    %24 = vst [vmem:[#allocation2 + $0x28] sm:$0xff] 0.0
    %25 = vst [vmem:[#allocation2 + $0x30] sm:$0xff] 0.0
    %26 = vst [vmem:[#allocation2 + $0x38] sm:$0xff] 0.0
  $region17: #{rnn_model_forward.9} parent=0 // pred_fallthru
    _
  %v27 = vld [vmem:[#allocation2] sm:$0xff]
  %v28 = vld [vmem:[#allocation2 + $0x8] sm:$0xff]
  %v29 = vld [vmem:[#allocation2 + $0x10] sm:$0xff]
  %v30 = vld [vmem:[#allocation2 + $0x18] sm:$0xff]
  %v31 = vld [vmem:[#allocation2 + $0x20] sm:$0xff]
  %v32 = vld [vmem:[#allocation2 + $0x28] sm:$0xff]
  %v33 = vld [vmem:[#allocation2 + $0x30] sm:$0xff]
  %v34 = vld [vmem:[#allocation2 + $0x38] sm:$0xff]
  %v35 = vld [vmem:[%s0] sm:$0xf]
  %v36 = vld [vmem:[%s0 + $0x4] sm:$0xf]
  %v37 = vld [vmem:[%s0 + $0x8] sm:$0xf]
  %v38 = vld [vmem:[%s0 + $0xc] sm:$0xf]
  %v39 = vld [vmem:[%s0 + $0x10] sm:$0xf]
  %v40 = vld [vmem:[%s0 + $0x14] sm:$0xf]
  %v41 = vld [vmem:[%s0 + $0x18] sm:$0xf]
  %v42 = vld [vmem:[%s0 + $0x1c] sm:$0xf]
  %v43 = vld [vmem:[%s1] sm:$0xf]
  %v44 = vld [vmem:[%s1 + $0x4] sm:$0xf]
  %v45 = vld [vmem:[%s1 + $0x8] sm:$0xf]
  %v46 = vld [vmem:[%s1 + $0xc] sm:$0xf]
  %v47 = vld [vmem:[%s1 + $0x10] sm:$0xf]
  %v48 = vld [vmem:[%s1 + $0x14] sm:$0xf]
  %v49 = vld [vmem:[%s1 + $0x18] sm:$0xf]
  %v50 = vld [vmem:[%s1 + $0x1c] sm:$0xf]
  %v51 = vld [vmem:[%s1 + $0x20] sm:$0xf]
  %v52 = vld [vmem:[%s1 + $0x24] sm:$0xf]
  %v53 = vld [vmem:[%s1 + $0x28] sm:$0xf]
  %v54 = vld [vmem:[%s1 + $0x2c] sm:$0xf]
  %v55 = vld [vmem:[%s1 + $0x30] sm:$0xf]
  %v56 = vld [vmem:[%s1 + $0x34] sm:$0xf]
  %v57 = vld [vmem:[%s1 + $0x38] sm:$0xf]
  %v58 = vld [vmem:[%s1 + $0x3c] sm:$0xf]
  %v67 = vunpack.c.l.b16 %v35
  %v68 = vunpack.c.l.b16 %v36
  %v69 = vunpack.c.l.b16 %v37
  %v70 = vunpack.c.l.b16 %v38
  %v71 = vunpack.c.l.b16 %v39
  %v72 = vunpack.c.l.b16 %v40
  %v73 = vunpack.c.l.b16 %v41
  %v74 = vunpack.c.l.b16 %v42
  %v75 = vpack.c.b16 %v68, %v67
  %v76 = vpack.c.b16 %v70, %v69
  %v77 = vpack.c.b16 %v72, %v71
  %v78 = vpack.c.b16 %v74, %v73
  %v99 = vunpack.c.l.b16 %v43
  %v100 = vunpack.c.l.b16 %v44
  %v101 = vunpack.c.l.b16 %v45
  %v102 = vunpack.c.l.b16 %v46
  %v103 = vunpack.c.l.b16 %v47
  %v104 = vunpack.c.l.b16 %v48
  %v105 = vunpack.c.l.b16 %v49
  %v106 = vunpack.c.l.b16 %v50
  %v107 = vunpack.c.l.b16 %v51
  %v108 = vunpack.c.l.b16 %v52
  %v109 = vunpack.c.l.b16 %v53
  %v110 = vunpack.c.l.b16 %v54
  %v111 = vunpack.c.l.b16 %v55
  %v112 = vunpack.c.l.b16 %v56
  %v113 = vunpack.c.l.b16 %v57
  %v114 = vunpack.c.l.b16 %v58
  %v115 = vpack.c.b16 %v100, %v99
  %v116 = vpack.c.b16 %v102, %v101
  %v117 = vpack.c.b16 %v104, %v103
  %v118 = vpack.c.b16 %v106, %v105
  %v119 = vpack.c.b16 %v108, %v107
  %v120 = vpack.c.b16 %v110, %v109
  %v121 = vpack.c.b16 %v112, %v111
  %v122 = vpack.c.b16 %v114, %v113
  %131 = vmatprep.subr.bf16.mxu0 0
  %132 = vmatpush1.bf16.msra.mxu0 %v115
  %133 = vmatprep.subr.bf16.mxu0 0
  %134 = vmatpush1.bf16.msra.mxu0 %v116
  %135 = vmatprep.subr.bf16.mxu0 0
  %136 = vmatpush1.bf16.msra.mxu0 %v117
  %137 = vmatprep.subr.bf16.mxu0 0
  %138 = vmatpush1.bf16.msra.mxu0 %v118
  %139 = vmatprep.subr.bf16.mxu0 0
  %140 = vmatpush1.bf16.msra.mxu0 %v119
  %141 = vmatprep.subr.bf16.mxu0 0
  %142 = vmatpush1.bf16.msra.mxu0 %v120
  %143 = vmatprep.subr.bf16.mxu0 0
  %144 = vmatpush1.bf16.msra.mxu0 %v121
  %145 = vmatprep.subr.bf16.mxu0 0
  %146 = vmatpush1.bf16.msra.mxu0 %v122
  %147 = vmatprep.subr.bf16.mxu0 0
  %148 = vmatpush1.bf16.msra.mxu0 0
  %149 = vmatprep.subr.bf16.mxu0 0
  %150 = vmatpush1.bf16.msra.mxu0 0
  %151 = vmatprep.subr.bf16.mxu0 0
  %152 = vmatpush1.bf16.msra.mxu0 0
  %153 = vmatprep.subr.bf16.mxu0 0
  %154 = vmatpush1.bf16.msra.mxu0 0
  %155 = vmatprep.subr.bf16.mxu0 0
  %156 = vmatpush1.bf16.msra.mxu0 0
  %157 = vmatprep.subr.bf16.mxu0 0
  %158 = vmatpush1.bf16.msra.mxu0 0
  %159 = vmatprep.subr.bf16.mxu0 0
  %160 = vmatpush1.bf16.msra.mxu0 0
  %161 = vmatprep.subr.bf16.mxu0 0
  %162 = vmatpush1.bf16.msra.mxu0 0
  %163 = vmatprep.mubr.bf16.mxu0 0
  %164 = vmatmul.mubr.bf16.gmra.mrb[0].mxu0 %v75
  %v165 = vpop.f32.mrb[0].mxu0
  %v166 = vadd.f32 0.0, %v165
  %v167 = vpop.f32.mrb[0].mxu0
  %v168 = vpop.f32.mrb[0].mxu0
  %v169 = vadd.f32 0.0, %v168
  %v170 = vpop.f32.mrb[0].mxu0
  %171 = vmatprep.mubr.bf16.mxu0 0
  %172 = vmatmul.mubr.bf16.gmra.mrb[0].mxu0 %v76
  %v173 = vpop.f32.mrb[0].mxu0
  %v174 = vadd.f32 0.0, %v173
  %v175 = vpop.f32.mrb[0].mxu0
  %v176 = vpop.f32.mrb[0].mxu0
  %v177 = vadd.f32 0.0, %v176
  %v178 = vpop.f32.mrb[0].mxu0
  %179 = vmatprep.mubr.bf16.mxu0 0
  %180 = vmatmul.mubr.bf16.gmra.mrb[0].mxu0 %v77
  %v181 = vpop.f32.mrb[0].mxu0
  %v182 = vadd.f32 0.0, %v181
  %v183 = vpop.f32.mrb[0].mxu0
  %v184 = vpop.f32.mrb[0].mxu0
  %v185 = vadd.f32 0.0, %v184
  %v186 = vpop.f32.mrb[0].mxu0
  %187 = vmatprep.mubr.bf16.mxu0 0
  %188 = vmatmul.mubr.bf16.gmra.mrb[0].mxu0 %v78
  %v189 = vpop.f32.mrb[0].mxu0
  %v190 = vadd.f32 0.0, %v189
  %v191 = vpop.f32.mrb[0].mxu0
  %v192 = vpop.f32.mrb[0].mxu0
  %v193 = vadd.f32 0.0, %v192
  %v194 = vpop.f32.mrb[0].mxu0
  %195 = vdwg.mxu0
  %v196 = vadd.f32 %v27, %v166
  %v197 = vadd.f32 %v28, %v169
  %v198 = vadd.f32 %v29, %v174
  %v199 = vadd.f32 %v30, %v177
  %v200 = vadd.f32 %v31, %v182
  %v201 = vadd.f32 %v32, %v185
  %v202 = vadd.f32 %v33, %v190
  %v203 = vadd.f32 %v34, %v193
  %204 = vst [vmem:[#allocation2] sm:$0xff] %v196
  %205 = vst [vmem:[#allocation2 + $0x8] sm:$0xff] %v197
  %206 = vst [vmem:[#allocation2 + $0x10] sm:$0xff] %v198
  %207 = vst [vmem:[#allocation2 + $0x18] sm:$0xff] %v199
  %208 = vst [vmem:[#allocation2 + $0x20] sm:$0xff] %v200
  %209 = vst [vmem:[#allocation2 + $0x28] sm:$0xff] %v201
  %210 = vst [vmem:[#allocation2 + $0x30] sm:$0xff] %v202
  %211 = vst [vmem:[#allocation2 + $0x38] sm:$0xff] %v203
  // Predicated region
  $region18: #{rnn_model_forward.9} parent=0 // pred_check
    %p212 = pneg %p15
  $region19: #{rnn_model_forward.9} parent=0 // pred_check_branch
    %214 = sbr.rel (%p212) target = $region21
  $region20: #{rnn_model_forward.9} parent=0 // pred_region
    %v215 = vld [vmem:[#allocation2] sm:$0xff]
    %v216 = vld [vmem:[#allocation2 + $0x8] sm:$0xff]
    %v217 = vld [vmem:[#allocation2 + $0x10] sm:$0xff]
    %v218 = vld [vmem:[#allocation2 + $0x18] sm:$0xff]
    %v219 = vld [vmem:[#allocation2 + $0x20] sm:$0xff]
    %v220 = vld [vmem:[#allocation2 + $0x28] sm:$0xff]
    %v221 = vld [vmem:[#allocation2 + $0x30] sm:$0xff]
    %v222 = vld [vmem:[#allocation2 + $0x38] sm:$0xff]
    %v223 = vld [vmem:[%s2] sm:$0x1]
    %v225 = vlaneseq
    %v226 = vshrl.u32 %v225, 7
    %v227 = vsub.s32 0, %v226
    %v228 = vrot.slane %v223, %v227
    %v230 = vadd.f32 %v215, %v228
    %v231 = vadd.f32 %v216, %v228
    %v232 = vadd.f32 %v217, %v228
    %v233 = vadd.f32 %v218, %v228
    %v234 = vadd.f32 %v219, %v228
    %v235 = vadd.f32 %v220, %v228
    %v236 = vadd.f32 %v221, %v228
    %v237 = vadd.f32 %v222, %v228
    %238 = vst [vmem:[%s3] sm:$0xff] %v230
    %239 = vst [vmem:[%s3 + $0x8] sm:$0xff] %v231
    %240 = vst [vmem:[%s3 + $0x10] sm:$0xff] %v232
    %241 = vst [vmem:[%s3 + $0x18] sm:$0xff] %v233
    %242 = vst [vmem:[%s3 + $0x20] sm:$0xff] %v234
    %243 = vst [vmem:[%s3 + $0x28] sm:$0xff] %v235
    %244 = vst [vmem:[%s3 + $0x30] sm:$0xff] %v236
    %245 = vst [vmem:[%s3 + $0x38] sm:$0xff] %v237
  $region21: #{rnn_model_forward.9} parent=0 // pred_fallthru
    _
  // Predicated region
  $region22: #{rnn_model_forward.9} parent=0 // pred_check
    _
  $region23: #{rnn_model_forward.9} parent=0 // pred_check_branch
    %247 = sbr.rel (0) target = $region25
  $region24: #{rnn_model_forward.9} parent=0 // pred_region
    _
  $region25: #{rnn_model_forward.9} parent=0 // pred_fallthru
    _
  // Predicated region
  $region26: #{rnn_model_forward.9} parent=0 // pred_check
    _
  $region27: #{rnn_model_forward.9} parent=0 // pred_check_branch
    %249 = sbr.rel (0) target = $region29
  $region28: #{rnn_model_forward.9} parent=0 // pred_region
    _
  $region29: #{rnn_model_forward.9} parent=0 // pred_fallthru
    _

// kernel: rnn_model_forward.5
$region0: #{rnn_model_forward.5}
  #allocation0 [shape = 'u32[]', space=smem, size = 0x4, offset = 0x4, fixed_abs, tag = 'smem constant byte address 0x4 - core index']
  #allocation1 [shape = 'u32[144,128]{1,0:T(1,128)}', space=vmem, size = 0x12000, scoped, tag = 'internal scratch']
  #allocation2 [shape = 'f32[64,256]{1,0:T(8,128)}', space=vmem, size = 0x10000, scoped, tag = 'scratch operand']
  %s0 = inlined_call_operand.vmem [shape: bf16[64,128], index: 0, kind: input, shape index: {}]
  %s1 = inlined_call_operand.vmem [shape: bf16[128,512], index: 1, kind: input, shape index: {}]
  %s2 = inlined_call_operand.vmem [shape: f32[1,512], index: 2, kind: input, shape index: {}]
  %s3 = inlined_call_operand.vmem [shape: f32[64,512], index: 3, kind: output, shape index: {}]
  %s4 = sld [smem:[#allocation0]]
  $region110: #{rnn_model_forward.5} parent=0
    _
  %s6 = ssub.s32 1, %s4
  %s7 = scalar_select 0, %s6, %s4
  $region1: #{rnn_model_forward.5} parent=0
    #allocation3 [shape = 'u8[131072]{0}', space=vmem, size = 0x20000, scoped, tag = 'input window, operand 1']
    #allocation4 [shape = 'u8[131072]{0}', space=vmem, size = 0x20000, scoped, tag = 'output window, operand 0']
    loop: start=0, step=1, limit=4
    $region2: #{rnn_model_forward.5} parent=1 // loop_pre_header
      _
    $region3: #{rnn_model_forward.5} parent=1 // loop_header
      %s9 = sphi 0, %s13
      %p10 = scmp.ge.s32.totalorder %s9, 4
      %s16 = sphi 0, %s35
      %s17 = sphi 0, %s31
      %s18 = sphi 0, %s27
      %s19 = sphi 0, %s16
      %s20 = sphi 0, %s17
      %s21 = sphi 0, %s18
      %s22 = sphi 0, %s19
      %s23 = sphi 0, %s20
      %s24 = sphi 0, %s21
      %s40 = sphi 0, %s42
      %s43 = sphi 0, %s40
      %s44 = sphi 0, %s43
      %s60 = sphi 0, %s44
      %s68 = sphi 0, %s70
      %s71 = sphi 0, %s68
      %s72 = sphi 0, %s71
      %s88 = sphi 0, %s72
      %s94 = sphi 0, %s96
      %s97 = sphi 0, %s94
      %s98 = sphi 0, %s97
      %s114 = sphi 0, %s98
      %s122 = sphi 0, %s124
      %s125 = sphi 0, %s122
      %s126 = sphi 0, %s125
      %s142 = sphi 0, %s126
    $region4: #{rnn_model_forward.5} parent=1 // loop_header_branch
      %12 = sbr.rel (%p10) target = $region8
    $region5: #{rnn_model_forward.5} parent=1 // loop_body
      %s14 = ssub.s32 %s9, 1
      %s15 = ssub.s32 %s9, 2
      %s25 = sadd.s32 1, %s18
      %p26 = scmp.ge.s32.totalorder %s25, 1
      %s27 = scalar_select %p26, 0, %s25
      %s28 = sadd.s32 1, %s17
      %s29 = scalar_select %p26, %s28, %s17
      %p30 = scmp.ge.s32.totalorder %s29, 2
      %s31 = scalar_select %p30, 0, %s29
      %s32 = sadd.s32 1, %s16
      %s33 = scalar_select %p30, %s32, %s16
      %p34 = scmp.ge.s32.totalorder %s33, 1
      %s35 = scalar_select %p34, 0, %s33
      %s36 = ssub.s32 %s16, %s35
      %s37 = ssub.s32 %s18, %s27
      %s38 = sor.u32 %s36, %s37
      %p39 = scmp.eq.s32.totalorder %s38, 0
      %s41 = sadd.s32 %s40, 1
      %s42 = scalar_select %p39, %s40, %s41
      %p45 = pneg %p39
      %p46 = scmp.eq.s32.totalorder %s9, 1
      %p47 = por %p45, %p46
      %p48 = scmp.ne.s32.totalorder %s40, %s43
      %p49 = scmp.eq.s32.totalorder %s9, 0
      %p50 = por %p48, %p49
      %p51 = scmp.ne.s32.totalorder %s40, %s43
      %p52 = scmp.eq.s32.totalorder %s14, 1
      %p53 = por %p51, %p52
      %p54 = scmp.ne.s32.totalorder %s43, %s44
      %p55 = scmp.eq.s32.totalorder %s14, 0
      %p56 = por %p54, %p55
      %p57 = scmp.ne.s32.totalorder %s43, %s44
      %p58 = scmp.eq.s32.totalorder %s15, 1
      %p59 = por %p57, %p58
      %p61 = scmp.ne.s32.totalorder %s44, %s60
      %p62 = scmp.eq.s32.totalorder %s15, 0
      %p63 = por %p61, %p62
      %s64 = ssub.s32 %s18, %s27
      %s65 = ssub.s32 %s17, %s31
      %s66 = sor.u32 %s64, %s65
      %p67 = scmp.eq.s32.totalorder %s66, 0
      %s69 = sadd.s32 %s68, 1
      %s70 = scalar_select %p67, %s68, %s69
      %p73 = pneg %p67
      %p74 = scmp.eq.s32.totalorder %s9, 1
      %p75 = por %p73, %p74
      %p76 = scmp.ne.s32.totalorder %s68, %s71
      %p77 = scmp.eq.s32.totalorder %s9, 0
      %p78 = por %p76, %p77
      %p79 = scmp.ne.s32.totalorder %s68, %s71
      %p80 = scmp.eq.s32.totalorder %s14, 1
      %p81 = por %p79, %p80
      %p82 = scmp.ne.s32.totalorder %s71, %s72
      %p83 = scmp.eq.s32.totalorder %s14, 0
      %p84 = por %p82, %p83
      %p85 = scmp.ne.s32.totalorder %s71, %s72
      %p86 = scmp.eq.s32.totalorder %s15, 1
      %p87 = por %p85, %p86
      %p89 = scmp.ne.s32.totalorder %s72, %s88
      %p90 = scmp.eq.s32.totalorder %s15, 0
      %p91 = por %p89, %p90
      %s92 = ssub.s32 %s17, %s31
      %p93 = scmp.eq.s32.totalorder %s92, 0
      %s95 = sadd.s32 %s94, 1
      %s96 = scalar_select %p93, %s94, %s95
      %p99 = pneg %p93
      %p100 = scmp.eq.s32.totalorder %s9, 1
      %p101 = por %p99, %p100
      %p102 = scmp.ne.s32.totalorder %s94, %s97
      %p103 = scmp.eq.s32.totalorder %s9, 0
      %p104 = por %p102, %p103
      %p105 = scmp.ne.s32.totalorder %s94, %s97
      %p106 = scmp.eq.s32.totalorder %s14, 1
      %p107 = por %p105, %p106
      %p108 = scmp.ne.s32.totalorder %s97, %s98
      %p109 = scmp.eq.s32.totalorder %s14, 0
      %p110 = por %p108, %p109
      %p111 = scmp.ne.s32.totalorder %s97, %s98
      %p112 = scmp.eq.s32.totalorder %s15, 1
      %p113 = por %p111, %p112
      %p115 = scmp.ne.s32.totalorder %s98, %s114
      %p116 = scmp.eq.s32.totalorder %s15, 0
      %p117 = por %p115, %p116
      %s118 = ssub.s32 %s16, %s35
      %s119 = ssub.s32 %s17, %s31
      %s120 = sor.u32 %s118, %s119
      %p121 = scmp.eq.s32.totalorder %s120, 0
      %s123 = sadd.s32 %s122, 1
      %s124 = scalar_select %p121, %s122, %s123
      %p127 = pneg %p121
      %p128 = scmp.eq.s32.totalorder %s9, 1
      %p129 = por %p127, %p128
      %p130 = scmp.ne.s32.totalorder %s122, %s125
      %p131 = scmp.eq.s32.totalorder %s9, 0
      %p132 = por %p130, %p131
      %p133 = scmp.ne.s32.totalorder %s122, %s125
      %p134 = scmp.eq.s32.totalorder %s14, 1
      %p135 = por %p133, %p134
      %p136 = scmp.ne.s32.totalorder %s125, %s126
      %p137 = scmp.eq.s32.totalorder %s14, 0
      %p138 = por %p136, %p137
      %p139 = scmp.ne.s32.totalorder %s125, %s126
      %p140 = scmp.eq.s32.totalorder %s15, 1
      %p141 = por %p139, %p140
      %p143 = scmp.ne.s32.totalorder %s126, %s142
      %p144 = scmp.eq.s32.totalorder %s15, 0
      %p145 = por %p143, %p144
      %p146 = scmp.le.s32.totalorder 1, %s9
      %p147 = scmp.lt.s32.totalorder %s9, 3
      %p148 = pnand %p146, %p147
      %p149 = pneg %p148
      // Predicated region
      $region9: #{rnn_model_forward.5} parent=5 // pred_check
        _
      $region10: #{rnn_model_forward.5} parent=5 // pred_check_branch
        %151 = sbr.rel (%p148) target = $region12
      $region11: #{rnn_model_forward.5} parent=5 // pred_region
        %s152 = ssub.s32 %s9, 1
        // Predicated region
        $region13: #{rnn_model_forward.5} parent=11 // pred_check
          %p153 = pneg %p56
        $region14: #{rnn_model_forward.5} parent=11 // pred_check_branch
          %155 = sbr.rel (%p153) target = $region16
        $region15: #{rnn_model_forward.5} parent=11 // pred_region
          %s156 = smul.u32 8, %s19
          %p157 = scmp.lt.s32.totalorder %s156, 7
          %s158 = scalar_select %p157, %s156, 7
          %p159 = scmp.lt.s32.totalorder %s21, 0
          %s160 = scalar_select %p159, %s21, 0
          %s161 = sadd.s32 %s160, %s158
          %s162 = smul.addr %s161, 4
          %s163 = scalar_lea.vmem %s0, %s162
          %s164 = smul.u32 8, %s19
        $region16: #{rnn_model_forward.5} parent=11 // pred_fallthru
          _
      $region12: #{rnn_model_forward.5} parent=5 // pred_fallthru
        _
      %p165 = scmp.lt.s32.totalorder %s9, 2
      // Predicated region
      $region17: #{rnn_model_forward.5} parent=5 // pred_check
        %p166 = pneg %p165
      $region18: #{rnn_model_forward.5} parent=5 // pred_check_branch
        %168 = sbr.rel (%p166) target = $region20
      $region19: #{rnn_model_forward.5} parent=5 // pred_region
        // Predicated region
        $region21: #{rnn_model_forward.5} parent=19 // pred_check
          %p169 = pneg %p78
        $region22: #{rnn_model_forward.5} parent=19 // pred_check_branch
          %171 = sbr.rel (%p169) target = $region24
        $region23: #{rnn_model_forward.5} parent=19 // pred_region
          %s172 = sand.u32 %s68, 1
          %s173 = sand.u32 %s68, 1
          %s174 = smul.addr %s173, 128
          %s175 = scalar_lea.vmem [#allocation3], %s174
          %s176 = smul.u32 16, %s18
          %s177 = smul.u32 2, %s17
          %s178 = smul.addr %s176, 4
          %s179 = sadd.s32 %s177, %s178
          %s180 = smul.addr %s179, 4
          %s181 = scalar_lea.vmem %s1, %s180
          // Predicated region
          $region25: #{rnn_model_forward.5} parent=23 // pred_check
            _
          $region26: #{rnn_model_forward.5} parent=23 // pred_check_branch
            %183 = sbr.rel (0) target = $region28
          $region27: #{rnn_model_forward.5} parent=23 // pred_region
            // Predicated region
            $region29: #{rnn_model_forward.5} parent=27 // pred_check
              _
            $region30: #{rnn_model_forward.5} parent=27 // pred_check_branch
              %185 = sbr.rel (0) target = $region32
            $region31: #{rnn_model_forward.5} parent=27 // pred_region
              // Predicated region
              $region44: #{rnn_model_forward.5} parent=31 // pred_check
                _
              $region45: #{rnn_model_forward.5} parent=31 // pred_check_branch
                %230 = sbr.rel (0) target = $region47
              $region46: #{rnn_model_forward.5} parent=31 // pred_region
                loop: start=0, step=1, limit=1
                $region48: #{rnn_model_forward.5} parent=46 // loop_pre_header
                  _
                $region49: #{rnn_model_forward.5} parent=46 // loop_header
                  %s232 = sphi 0, %s236
                  %p233 = scmp.ge.s32.totalorder %s232, 1
                  %s237 = sphi %s181, %s181
                  %s238 = sphi %s175, %s175
                $region50: #{rnn_model_forward.5} parent=46 // loop_header_branch
                  %235 = sbr.rel (%p233) target = $region54
                $region51: #{rnn_model_forward.5} parent=46 // loop_body
                  %v239 = vld [vmem:[%s237] sm:$0xff]
                  %240 = vst [vmem:[%s238] sm:$0xff] %v239
                  %v241 = vld [vmem:[%s237 + $0x10] sm:$0xff]
                  %242 = vst [vmem:[%s238 + $0x8] sm:$0xff] %v241
                  %v243 = vld [vmem:[%s237 + $0x20] sm:$0xff]
                  %244 = vst [vmem:[%s238 + $0x10] sm:$0xff] %v243
                  %v245 = vld [vmem:[%s237 + $0x30] sm:$0xff]
                  %246 = vst [vmem:[%s238 + $0x18] sm:$0xff] %v245
                  %v247 = vld [vmem:[%s237 + $0x40] sm:$0xff]
                  %248 = vst [vmem:[%s238 + $0x20] sm:$0xff] %v247
                  %v249 = vld [vmem:[%s237 + $0x50] sm:$0xff]
                  %250 = vst [vmem:[%s238 + $0x28] sm:$0xff] %v249
                  %v251 = vld [vmem:[%s237 + $0x60] sm:$0xff]
                  %252 = vst [vmem:[%s238 + $0x30] sm:$0xff] %v251
                  %v253 = vld [vmem:[%s237 + $0x70] sm:$0xff]
                  %254 = vst [vmem:[%s238 + $0x38] sm:$0xff] %v253
                  %v255 = vld [vmem:[%s237 + $0x80] sm:$0xff]
                  %256 = vst [vmem:[%s238 + $0x40] sm:$0xff] %v255
                  %v257 = vld [vmem:[%s237 + $0x90] sm:$0xff]
                  %258 = vst [vmem:[%s238 + $0x48] sm:$0xff] %v257
                  %v259 = vld [vmem:[%s237 + $0xa0] sm:$0xff]
                  %260 = vst [vmem:[%s238 + $0x50] sm:$0xff] %v259
                  %v261 = vld [vmem:[%s237 + $0xb0] sm:$0xff]
                  %262 = vst [vmem:[%s238 + $0x58] sm:$0xff] %v261
                  %v263 = vld [vmem:[%s237 + $0xc0] sm:$0xff]
                  %264 = vst [vmem:[%s238 + $0x60] sm:$0xff] %v263
                  %v265 = vld [vmem:[%s237 + $0xd0] sm:$0xff]
                  %266 = vst [vmem:[%s238 + $0x68] sm:$0xff] %v265
                  %v267 = vld [vmem:[%s237 + $0xe0] sm:$0xff]
                  %268 = vst [vmem:[%s238 + $0x70] sm:$0xff] %v267
                  %v269 = vld [vmem:[%s237 + $0xf0] sm:$0xff]
                  %270 = vst [vmem:[%s238 + $0x78] sm:$0xff] %v269
                $region52: #{rnn_model_forward.5} parent=46 // loop_footer
                  %s236 = sadd.s32 1, %s232
                $region53: #{rnn_model_forward.5} parent=46 // loop_footer_branch
                  %231 = sbr.rel target = $region49
                $region54: #{rnn_model_forward.5} parent=46 // loop_exit
                  _
              $region47: #{rnn_model_forward.5} parent=31 // pred_fallthru
                _
              // Predicated region
              $region55: #{rnn_model_forward.5} parent=31 // pred_check
                _
              $region56: #{rnn_model_forward.5} parent=31 // pred_check_branch
                %272 = sbr.rel target = $region58
              $region57: #{rnn_model_forward.5} parent=31 // pred_region
                _
              $region58: #{rnn_model_forward.5} parent=31 // pred_fallthru
                _
            $region32: #{rnn_model_forward.5} parent=27 // pred_fallthru
              _
            // Predicated region
            $region33: #{rnn_model_forward.5} parent=27 // pred_check
              _
            $region34: #{rnn_model_forward.5} parent=27 // pred_check_branch
              %187 = sbr.rel target = $region36
            $region35: #{rnn_model_forward.5} parent=27 // pred_region
              loop: start=0, step=1, limit=1
              $region37: #{rnn_model_forward.5} parent=35 // loop_pre_header
                _
              $region38: #{rnn_model_forward.5} parent=35 // loop_header
                %s190 = sphi 0, %s194
                %p191 = scmp.ge.s32.totalorder %s190, 1
                %s195 = sphi %s181, %s181
                %s196 = sphi %s175, %s175
              $region39: #{rnn_model_forward.5} parent=35 // loop_header_branch
                %193 = sbr.rel (%p191) target = $region43
              $region40: #{rnn_model_forward.5} parent=35 // loop_body
                %v197 = vld [vmem:[%s195] sm:$0xff]
                %198 = vst [vmem:[%s196] sm:$0xff] %v197
                %v199 = vld [vmem:[%s195 + $0x10] sm:$0xff]
                %200 = vst [vmem:[%s196 + $0x8] sm:$0xff] %v199
                %v201 = vld [vmem:[%s195 + $0x20] sm:$0xff]
                %202 = vst [vmem:[%s196 + $0x10] sm:$0xff] %v201
                %v203 = vld [vmem:[%s195 + $0x30] sm:$0xff]
                %204 = vst [vmem:[%s196 + $0x18] sm:$0xff] %v203
                %v205 = vld [vmem:[%s195 + $0x40] sm:$0xff]
                %206 = vst [vmem:[%s196 + $0x20] sm:$0xff] %v205
                %v207 = vld [vmem:[%s195 + $0x50] sm:$0xff]
                %208 = vst [vmem:[%s196 + $0x28] sm:$0xff] %v207
                %v209 = vld [vmem:[%s195 + $0x60] sm:$0xff]
                %210 = vst [vmem:[%s196 + $0x30] sm:$0xff] %v209
                %v211 = vld [vmem:[%s195 + $0x70] sm:$0xff]
                %212 = vst [vmem:[%s196 + $0x38] sm:$0xff] %v211
                %v213 = vld [vmem:[%s195 + $0x80] sm:$0xff]
                %214 = vst [vmem:[%s196 + $0x40] sm:$0xff] %v213
                %v215 = vld [vmem:[%s195 + $0x90] sm:$0xff]
                %216 = vst [vmem:[%s196 + $0x48] sm:$0xff] %v215
                %v217 = vld [vmem:[%s195 + $0xa0] sm:$0xff]
                %218 = vst [vmem:[%s196 + $0x50] sm:$0xff] %v217
                %v219 = vld [vmem:[%s195 + $0xb0] sm:$0xff]
                %220 = vst [vmem:[%s196 + $0x58] sm:$0xff] %v219
                %v221 = vld [vmem:[%s195 + $0xc0] sm:$0xff]
                %222 = vst [vmem:[%s196 + $0x60] sm:$0xff] %v221
                %v223 = vld [vmem:[%s195 + $0xd0] sm:$0xff]
                %224 = vst [vmem:[%s196 + $0x68] sm:$0xff] %v223
                %v225 = vld [vmem:[%s195 + $0xe0] sm:$0xff]
                %226 = vst [vmem:[%s196 + $0x70] sm:$0xff] %v225
                %v227 = vld [vmem:[%s195 + $0xf0] sm:$0xff]
                %228 = vst [vmem:[%s196 + $0x78] sm:$0xff] %v227
              $region41: #{rnn_model_forward.5} parent=35 // loop_footer
                %s194 = sadd.s32 1, %s190
              $region42: #{rnn_model_forward.5} parent=35 // loop_footer_branch
                %189 = sbr.rel target = $region38
              $region43: #{rnn_model_forward.5} parent=35 // loop_exit
                _
            $region36: #{rnn_model_forward.5} parent=27 // pred_fallthru
              _
          $region28: #{rnn_model_forward.5} parent=23 // pred_fallthru
            _
          %273 = vnop
        $region24: #{rnn_model_forward.5} parent=19 // pred_fallthru
          _
        // Predicated region
        $region59: #{rnn_model_forward.5} parent=19 // pred_check
          %p274 = pneg %p104
        $region60: #{rnn_model_forward.5} parent=19 // pred_check_branch
          %276 = sbr.rel (%p274) target = $region62
        $region61: #{rnn_model_forward.5} parent=19 // pred_region
          %s277 = smul.u32 2, %s17
          %p278 = scmp.lt.s32.totalorder %s277, 3
          %s279 = scalar_select %p278, %s277, 3
          %s280 = scalar_lea.vmem %s2, %s279
          %s281 = smul.u32 2, %s17
        $region62: #{rnn_model_forward.5} parent=19 // pred_fallthru
          _
      $region20: #{rnn_model_forward.5} parent=5 // pred_fallthru
        _
      %p282 = scmp.le.s32.totalorder 1, %s9
      %p283 = scmp.lt.s32.totalorder %s9, 3
      %p284 = pnand %p282, %p283
      %p285 = pneg %p284
      // Predicated region
      $region63: #{rnn_model_forward.5} parent=5 // pred_check
        _
      $region64: #{rnn_model_forward.5} parent=5 // pred_check_branch
        %287 = sbr.rel (%p284) target = $region66
      $region65: #{rnn_model_forward.5} parent=5 // pred_region
        %s288 = ssub.s32 %s9, 1
        %s289 = sand.u32 %s71, 1
        %s290 = sand.u32 %s71, 1
        %s291 = smul.addr %s290, 128
        %s292 = scalar_lea.vmem [#allocation3], %s291
        // Predicated region
        $region67: #{rnn_model_forward.5} parent=65 // pred_check
          %p293 = pneg %p84
        $region68: #{rnn_model_forward.5} parent=65 // pred_check_branch
          %295 = sbr.rel (%p293) target = $region70
        $region69: #{rnn_model_forward.5} parent=65 // pred_region
          _
        $region70: #{rnn_model_forward.5} parent=65 // pred_fallthru
          _
        %s296 = smul.u32 8, %s19
        %p297 = scmp.lt.s32.totalorder %s296, 7
        %s298 = scalar_select %p297, %s296, 7
        %p299 = scmp.lt.s32.totalorder %s21, 0
        %s300 = scalar_select %p299, %s21, 0
        %s301 = sadd.s32 %s300, %s298
        %s302 = smul.addr %s301, 4
        %s303 = scalar_lea.vmem %s0, %s302
        %p304 = pneg %p56
        %p305 = pneg %p53
        %s306 = sand.u32 %s71, 1
        %s307 = sand.u32 %s71, 1
        %s308 = smul.addr %s307, 128
        %s309 = scalar_lea.vmem [#allocation3], %s308
        %p310 = pneg %p84
        %p311 = pneg %p81
        %s312 = smul.u32 2, %s20
        %p313 = scmp.lt.s32.totalorder %s312, 3
        %s314 = scalar_select %p313, %s312, 3
        %s315 = scalar_lea.vmem %s2, %s314
        %p316 = pneg %p110
        %p317 = pneg %p107
        %p318 = pneg %p138
        %p319 = pneg %p135
        %s320 = sand.u32 %s125, 1
        %s321 = sand.u32 %s125, 1
        %s322 = smul.addr %s321, 128
        %s323 = scalar_lea.vmem [#allocation4], %s322
        %s324 = smul.u32 8, %s19
        %p325 = scmp.lt.s32.totalorder %s324, 7
        %s326 = scalar_select %p325, %s324, 7
        %p327 = scmp.lt.s32.totalorder %s21, 0
        %s328 = scalar_select %p327, %s21, 0
        %s329 = sadd.s32 %s328, %s326
        %s330 = smul.addr %s329, 4
        %s331 = scalar_lea.vmem %s0, %s330
        %s332 = smul.u32 8, %s19
        %s333 = smul.u32 16, %s21
        %s334 = smul.u32 2, %s20
        %s335 = smul.u32 2, %s20
        %p336 = scmp.lt.s32.totalorder %s335, 3
        %s337 = scalar_select %p336, %s335, 3
        %s338 = scalar_lea.vmem %s2, %s337
        %s339 = smul.u32 2, %s20
        %s340 = smul.u32 8, %s19
        %s341 = smul.u32 2, %s20
        %p343 = scmp.eq.s32.totalorder %s21, 0
        // Predicated region
        $region71: #{rnn_model_forward.5} parent=65 // pred_check
          %p344 = pneg %p343
        $region72: #{rnn_model_forward.5} parent=65 // pred_check_branch
          %346 = sbr.rel (%p344) target = $region74
        $region73: #{rnn_model_forward.5} parent=65 // pred_region
          %347 = vst [vmem:[#allocation2] sm:$0xff] 0.0
          %348 = vst [vmem:[#allocation2 + $0x8] sm:$0xff] 0.0
          %349 = vst [vmem:[#allocation2 + $0x10] sm:$0xff] 0.0
          %350 = vst [vmem:[#allocation2 + $0x18] sm:$0xff] 0.0
          %351 = vst [vmem:[#allocation2 + $0x20] sm:$0xff] 0.0
          %352 = vst [vmem:[#allocation2 + $0x28] sm:$0xff] 0.0
          %353 = vst [vmem:[#allocation2 + $0x30] sm:$0xff] 0.0
          %354 = vst [vmem:[#allocation2 + $0x38] sm:$0xff] 0.0
          %355 = vst [vmem:[#allocation2 + $0x40] sm:$0xff] 0.0
          %356 = vst [vmem:[#allocation2 + $0x48] sm:$0xff] 0.0
          %357 = vst [vmem:[#allocation2 + $0x50] sm:$0xff] 0.0
          %358 = vst [vmem:[#allocation2 + $0x58] sm:$0xff] 0.0
          %359 = vst [vmem:[#allocation2 + $0x60] sm:$0xff] 0.0
          %360 = vst [vmem:[#allocation2 + $0x68] sm:$0xff] 0.0
          %361 = vst [vmem:[#allocation2 + $0x70] sm:$0xff] 0.0
          %362 = vst [vmem:[#allocation2 + $0x78] sm:$0xff] 0.0
        $region74: #{rnn_model_forward.5} parent=65 // pred_fallthru
          _
        %v363 = vld [vmem:[#allocation2] sm:$0xff]
        %v364 = vld [vmem:[#allocation2 + $0x8] sm:$0xff]
        %v365 = vld [vmem:[#allocation2 + $0x10] sm:$0xff]
        %v366 = vld [vmem:[#allocation2 + $0x18] sm:$0xff]
        %v367 = vld [vmem:[#allocation2 + $0x20] sm:$0xff]
        %v368 = vld [vmem:[#allocation2 + $0x28] sm:$0xff]
        %v369 = vld [vmem:[#allocation2 + $0x30] sm:$0xff]
        %v370 = vld [vmem:[#allocation2 + $0x38] sm:$0xff]
        %v371 = vld [vmem:[#allocation2 + $0x40] sm:$0xff]
        %v372 = vld [vmem:[#allocation2 + $0x48] sm:$0xff]
        %v373 = vld [vmem:[#allocation2 + $0x50] sm:$0xff]
        %v374 = vld [vmem:[#allocation2 + $0x58] sm:$0xff]
        %v375 = vld [vmem:[#allocation2 + $0x60] sm:$0xff]
        %v376 = vld [vmem:[#allocation2 + $0x68] sm:$0xff]
        %v377 = vld [vmem:[#allocation2 + $0x70] sm:$0xff]
        %v378 = vld [vmem:[#allocation2 + $0x78] sm:$0xff]
        %v379 = vld [vmem:[%s331] sm:$0xf]
        %v380 = vld [vmem:[%s331 + $0x4] sm:$0xf]
        %v381 = vld [vmem:[%s331 + $0x8] sm:$0xf]
        %v382 = vld [vmem:[%s331 + $0xc] sm:$0xf]
        %v383 = vld [vmem:[%s331 + $0x10] sm:$0xf]
        %v384 = vld [vmem:[%s331 + $0x14] sm:$0xf]
        %v385 = vld [vmem:[%s331 + $0x18] sm:$0xf]
        %v386 = vld [vmem:[%s331 + $0x1c] sm:$0xf]
        %v387 = vld [vmem:[%s292] sm:$0xff]
        %v388 = vld [vmem:[%s292 + $0x8] sm:$0xff]
        %v389 = vld [vmem:[%s292 + $0x10] sm:$0xff]
        %v390 = vld [vmem:[%s292 + $0x18] sm:$0xff]
        %v391 = vld [vmem:[%s292 + $0x20] sm:$0xff]
        %v392 = vld [vmem:[%s292 + $0x28] sm:$0xff]
        %v393 = vld [vmem:[%s292 + $0x30] sm:$0xff]
        %v394 = vld [vmem:[%s292 + $0x38] sm:$0xff]
        %v395 = vld [vmem:[%s292 + $0x40] sm:$0xff]
        %v396 = vld [vmem:[%s292 + $0x48] sm:$0xff]
        %v397 = vld [vmem:[%s292 + $0x50] sm:$0xff]
        %v398 = vld [vmem:[%s292 + $0x58] sm:$0xff]
        %v399 = vld [vmem:[%s292 + $0x60] sm:$0xff]
        %v400 = vld [vmem:[%s292 + $0x68] sm:$0xff]
        %v401 = vld [vmem:[%s292 + $0x70] sm:$0xff]
        %v402 = vld [vmem:[%s292 + $0x78] sm:$0xff]
        %v411 = vunpack.c.l.b16 %v379
        %v412 = vunpack.c.l.b16 %v380
        %v413 = vunpack.c.l.b16 %v381
        %v414 = vunpack.c.l.b16 %v382
        %v415 = vunpack.c.l.b16 %v383
        %v416 = vunpack.c.l.b16 %v384
        %v417 = vunpack.c.l.b16 %v385
        %v418 = vunpack.c.l.b16 %v386
        %v419 = vpack.c.b16 %v412, %v411
        %v420 = vpack.c.b16 %v414, %v413
        %v421 = vpack.c.b16 %v416, %v415
        %v422 = vpack.c.b16 %v418, %v417
        %v443 = vunpack.c.l.b16 %v387
        %v444 = vunpack.c.h.b16 %v387
        %v445 = vunpack.c.l.b16 %v388
        %v446 = vunpack.c.h.b16 %v388
        %v447 = vunpack.c.l.b16 %v389
        %v448 = vunpack.c.h.b16 %v389
        %v449 = vunpack.c.l.b16 %v390
        %v450 = vunpack.c.h.b16 %v390
        %v451 = vunpack.c.l.b16 %v391
        %v452 = vunpack.c.h.b16 %v391
        %v453 = vunpack.c.l.b16 %v392
        %v454 = vunpack.c.h.b16 %v392
        %v455 = vunpack.c.l.b16 %v393
        %v456 = vunpack.c.h.b16 %v393
        %v457 = vunpack.c.l.b16 %v394
        %v458 = vunpack.c.h.b16 %v394
        %v459 = vunpack.c.l.b16 %v395
        %v460 = vunpack.c.h.b16 %v395
        %v461 = vunpack.c.l.b16 %v396
        %v462 = vunpack.c.h.b16 %v396
        %v463 = vunpack.c.l.b16 %v397
        %v464 = vunpack.c.h.b16 %v397
        %v465 = vunpack.c.l.b16 %v398
        %v466 = vunpack.c.h.b16 %v398
        %v467 = vunpack.c.l.b16 %v399
        %v468 = vunpack.c.h.b16 %v399
        %v469 = vunpack.c.l.b16 %v400
        %v470 = vunpack.c.h.b16 %v400
        %v471 = vunpack.c.l.b16 %v401
        %v472 = vunpack.c.h.b16 %v401
        %v473 = vunpack.c.l.b16 %v402
        %v474 = vunpack.c.h.b16 %v402
        %v475 = vpack.c.b16 %v445, %v443
        %v476 = vpack.c.b16 %v446, %v444
        %v477 = vpack.c.b16 %v449, %v447
        %v478 = vpack.c.b16 %v450, %v448
        %v479 = vpack.c.b16 %v453, %v451
        %v480 = vpack.c.b16 %v454, %v452
        %v481 = vpack.c.b16 %v457, %v455
        %v482 = vpack.c.b16 %v458, %v456
        %v483 = vpack.c.b16 %v461, %v459
        %v484 = vpack.c.b16 %v462, %v460
        %v485 = vpack.c.b16 %v465, %v463
        %v486 = vpack.c.b16 %v466, %v464
        %v487 = vpack.c.b16 %v469, %v467
        %v488 = vpack.c.b16 %v470, %v468
        %v489 = vpack.c.b16 %v473, %v471
        %v490 = vpack.c.b16 %v474, %v472
        %507 = vmatprep.subr.bf16.mxu0 %v476
        %508 = vmatpush1.bf16.msra.mxu0 %v475
        %509 = vmatprep.subr.bf16.mxu0 %v478
        %510 = vmatpush1.bf16.msra.mxu0 %v477
        %511 = vmatprep.subr.bf16.mxu0 %v480
        %512 = vmatpush1.bf16.msra.mxu0 %v479
        %513 = vmatprep.subr.bf16.mxu0 %v482
        %514 = vmatpush1.bf16.msra.mxu0 %v481
        %515 = vmatprep.subr.bf16.mxu0 %v484
        %516 = vmatpush1.bf16.msra.mxu0 %v483
        %517 = vmatprep.subr.bf16.mxu0 %v486
        %518 = vmatpush1.bf16.msra.mxu0 %v485
        %519 = vmatprep.subr.bf16.mxu0 %v488
        %520 = vmatpush1.bf16.msra.mxu0 %v487
        %521 = vmatprep.subr.bf16.mxu0 %v490
        %522 = vmatpush1.bf16.msra.mxu0 %v489
        %523 = vmatprep.subr.bf16.mxu0 0
        %524 = vmatpush1.bf16.msra.mxu0 0
        %525 = vmatprep.subr.bf16.mxu0 0
        %526 = vmatpush1.bf16.msra.mxu0 0
        %527 = vmatprep.subr.bf16.mxu0 0
        %528 = vmatpush1.bf16.msra.mxu0 0
        %529 = vmatprep.subr.bf16.mxu0 0
        %530 = vmatpush1.bf16.msra.mxu0 0
        %531 = vmatprep.subr.bf16.mxu0 0
        %532 = vmatpush1.bf16.msra.mxu0 0
        %533 = vmatprep.subr.bf16.mxu0 0
        %534 = vmatpush1.bf16.msra.mxu0 0
        %535 = vmatprep.subr.bf16.mxu0 0
        %536 = vmatpush1.bf16.msra.mxu0 0
        %537 = vmatprep.subr.bf16.mxu0 0
        %538 = vmatpush1.bf16.msra.mxu0 0
        %539 = vmatprep.mubr.bf16.mxu0 0
        %540 = vmatmul.mubr.bf16.gmra.mrb[0].mxu0 %v419
        %v541 = vpop.f32.mrb[0].mxu0
        %v542 = vadd.f32 0.0, %v541
        %v543 = vpop.f32.mrb[0].mxu0
        %v544 = vadd.f32 0.0, %v543
        %v545 = vpop.f32.mrb[0].mxu0
        %v546 = vadd.f32 0.0, %v545
        %v547 = vpop.f32.mrb[0].mxu0
        %v548 = vadd.f32 0.0, %v547
        %549 = vmatprep.mubr.bf16.mxu0 0
        %550 = vmatmul.mubr.bf16.gmra.mrb[0].mxu0 %v420
        %v551 = vpop.f32.mrb[0].mxu0
        %v552 = vadd.f32 0.0, %v551
        %v553 = vpop.f32.mrb[0].mxu0
        %v554 = vadd.f32 0.0, %v553
        %v555 = vpop.f32.mrb[0].mxu0
        %v556 = vadd.f32 0.0, %v555
        %v557 = vpop.f32.mrb[0].mxu0
        %v558 = vadd.f32 0.0, %v557
        %559 = vmatprep.mubr.bf16.mxu0 0
        %560 = vmatmul.mubr.bf16.gmra.mrb[0].mxu0 %v421
        %v561 = vpop.f32.mrb[0].mxu0
        %v562 = vadd.f32 0.0, %v561
        %v563 = vpop.f32.mrb[0].mxu0
        %v564 = vadd.f32 0.0, %v563
        %v565 = vpop.f32.mrb[0].mxu0
        %v566 = vadd.f32 0.0, %v565
        %v567 = vpop.f32.mrb[0].mxu0
        %v568 = vadd.f32 0.0, %v567
        %569 = vmatprep.mubr.bf16.mxu0 0
        %570 = vmatmul.mubr.bf16.gmra.mrb[0].mxu0 %v422
        %v571 = vpop.f32.mrb[0].mxu0
        %v572 = vadd.f32 0.0, %v571
        %v573 = vpop.f32.mrb[0].mxu0
        %v574 = vadd.f32 0.0, %v573
        %v575 = vpop.f32.mrb[0].mxu0
        %v576 = vadd.f32 0.0, %v575
        %v577 = vpop.f32.mrb[0].mxu0
        %v578 = vadd.f32 0.0, %v577
        %579 = vdwg.mxu0
        %v580 = vadd.f32 %v363, %v542
        %v581 = vadd.f32 %v364, %v544
        %v582 = vadd.f32 %v365, %v546
        %v583 = vadd.f32 %v366, %v548
        %v584 = vadd.f32 %v367, %v552
        %v585 = vadd.f32 %v368, %v554
        %v586 = vadd.f32 %v369, %v556
        %v587 = vadd.f32 %v370, %v558
        %v588 = vadd.f32 %v371, %v562
        %v589 = vadd.f32 %v372, %v564
        %v590 = vadd.f32 %v373, %v566
        %v591 = vadd.f32 %v374, %v568
        %v592 = vadd.f32 %v375, %v572
        %v593 = vadd.f32 %v376, %v574
        %v594 = vadd.f32 %v377, %v576
        %v595 = vadd.f32 %v378, %v578
        %596 = vst [vmem:[#allocation2] sm:$0xff] %v580
        %597 = vst [vmem:[#allocation2 + $0x8] sm:$0xff] %v581
        %598 = vst [vmem:[#allocation2 + $0x10] sm:$0xff] %v582
        %599 = vst [vmem:[#allocation2 + $0x18] sm:$0xff] %v583
        %600 = vst [vmem:[#allocation2 + $0x20] sm:$0xff] %v584
        %601 = vst [vmem:[#allocation2 + $0x28] sm:$0xff] %v585
        %602 = vst [vmem:[#allocation2 + $0x30] sm:$0xff] %v586
        %603 = vst [vmem:[#allocation2 + $0x38] sm:$0xff] %v587
        %604 = vst [vmem:[#allocation2 + $0x40] sm:$0xff] %v588
        %605 = vst [vmem:[#allocation2 + $0x48] sm:$0xff] %v589
        %606 = vst [vmem:[#allocation2 + $0x50] sm:$0xff] %v590
        %607 = vst [vmem:[#allocation2 + $0x58] sm:$0xff] %v591
        %608 = vst [vmem:[#allocation2 + $0x60] sm:$0xff] %v592
        %609 = vst [vmem:[#allocation2 + $0x68] sm:$0xff] %v593
        %610 = vst [vmem:[#allocation2 + $0x70] sm:$0xff] %v594
        %611 = vst [vmem:[#allocation2 + $0x78] sm:$0xff] %v595
        // Predicated region
        $region75: #{rnn_model_forward.5} parent=65 // pred_check
          %p612 = pneg %p343
        $region76: #{rnn_model_forward.5} parent=65 // pred_check_branch
          %614 = sbr.rel (%p612) target = $region78
        $region77: #{rnn_model_forward.5} parent=65 // pred_region
          %v615 = vld [vmem:[#allocation2] sm:$0xff]
          %v616 = vld [vmem:[#allocation2 + $0x8] sm:$0xff]
          %v617 = vld [vmem:[#allocation2 + $0x10] sm:$0xff]
          %v618 = vld [vmem:[#allocation2 + $0x18] sm:$0xff]
          %v619 = vld [vmem:[#allocation2 + $0x20] sm:$0xff]
          %v620 = vld [vmem:[#allocation2 + $0x28] sm:$0xff]
          %v621 = vld [vmem:[#allocation2 + $0x30] sm:$0xff]
          %v622 = vld [vmem:[#allocation2 + $0x38] sm:$0xff]
          %v623 = vld [vmem:[#allocation2 + $0x40] sm:$0xff]
          %v624 = vld [vmem:[#allocation2 + $0x48] sm:$0xff]
          %v625 = vld [vmem:[#allocation2 + $0x50] sm:$0xff]
          %v626 = vld [vmem:[#allocation2 + $0x58] sm:$0xff]
          %v627 = vld [vmem:[#allocation2 + $0x60] sm:$0xff]
          %v628 = vld [vmem:[#allocation2 + $0x68] sm:$0xff]
          %v629 = vld [vmem:[#allocation2 + $0x70] sm:$0xff]
          %v630 = vld [vmem:[#allocation2 + $0x78] sm:$0xff]
          %v631 = vld [vmem:[%s338] sm:$0x3]
          %v633 = vlaneseq
          %v634 = vshrl.u32 %v633, 7
          %v635 = vsub.s32 0, %v634
          %v636 = vrot.slane %v631, %v635
          %v637 = vlaneseq
          %v638 = vshrl.u32 %v637, 7
          %v639 = vsub.s32 1, %v638
          %v640 = vrot.slane %v631, %v639
          %v643 = vadd.f32 %v615, %v636
          %v644 = vadd.f32 %v616, %v640
          %v645 = vadd.f32 %v617, %v636
          %v646 = vadd.f32 %v618, %v640
          %v647 = vadd.f32 %v619, %v636
          %v648 = vadd.f32 %v620, %v640
          %v649 = vadd.f32 %v621, %v636
          %v650 = vadd.f32 %v622, %v640
          %v651 = vadd.f32 %v623, %v636
          %v652 = vadd.f32 %v624, %v640
          %v653 = vadd.f32 %v625, %v636
          %v654 = vadd.f32 %v626, %v640
          %v655 = vadd.f32 %v627, %v636
          %v656 = vadd.f32 %v628, %v640
          %v657 = vadd.f32 %v629, %v636
          %v658 = vadd.f32 %v630, %v640
          %659 = vst [vmem:[%s323] sm:$0xff] %v643
          %660 = vst [vmem:[%s323 + $0x8] sm:$0xff] %v644
          %661 = vst [vmem:[%s323 + $0x10] sm:$0xff] %v645
          %662 = vst [vmem:[%s323 + $0x18] sm:$0xff] %v646
          %663 = vst [vmem:[%s323 + $0x20] sm:$0xff] %v647
          %664 = vst [vmem:[%s323 + $0x28] sm:$0xff] %v648
          %665 = vst [vmem:[%s323 + $0x30] sm:$0xff] %v649
          %666 = vst [vmem:[%s323 + $0x38] sm:$0xff] %v650
          %667 = vst [vmem:[%s323 + $0x40] sm:$0xff] %v651
          %668 = vst [vmem:[%s323 + $0x48] sm:$0xff] %v652
          %669 = vst [vmem:[%s323 + $0x50] sm:$0xff] %v653
          %670 = vst [vmem:[%s323 + $0x58] sm:$0xff] %v654
          %671 = vst [vmem:[%s323 + $0x60] sm:$0xff] %v655
          %672 = vst [vmem:[%s323 + $0x68] sm:$0xff] %v656
          %673 = vst [vmem:[%s323 + $0x70] sm:$0xff] %v657
          %674 = vst [vmem:[%s323 + $0x78] sm:$0xff] %v658
        $region78: #{rnn_model_forward.5} parent=65 // pred_fallthru
          _
        %s675 = sand.u32 %s125, 1
        %s676 = sand.u32 %s125, 1
        %s677 = smul.addr %s676, 128
        %s678 = scalar_lea.vmem [#allocation4], %s677
        // Predicated region
        $region79: #{rnn_model_forward.5} parent=65 // pred_check
          %p679 = pneg %p135
        $region80: #{rnn_model_forward.5} parent=65 // pred_check_branch
          %681 = sbr.rel (%p679) target = $region82
        $region81: #{rnn_model_forward.5} parent=65 // pred_region
          %s682 = smul.u32 8, %s19
          %s683 = smul.u32 2, %s20
          %s684 = smul.addr %s682, 4
          %s685 = sadd.s32 %s683, %s684
          %s686 = smul.addr %s685, 8
          %s687 = scalar_lea.vmem %s3, %s686
          // Predicated region
          $region83: #{rnn_model_forward.5} parent=81 // pred_check
            _
          $region84: #{rnn_model_forward.5} parent=81 // pred_check_branch
            %689 = sbr.rel (0) target = $region86
          $region85: #{rnn_model_forward.5} parent=81 // pred_region
            // Predicated region
            $region87: #{rnn_model_forward.5} parent=85 // pred_check
              _
            $region88: #{rnn_model_forward.5} parent=85 // pred_check_branch
              %691 = sbr.rel (0) target = $region90
            $region89: #{rnn_model_forward.5} parent=85 // pred_region
              loop: start=0, step=1, limit=1
              $region91: #{rnn_model_forward.5} parent=89 // loop_pre_header
                _
              $region92: #{rnn_model_forward.5} parent=89 // loop_header
                %s693 = sphi 0, %s697
                %p694 = scmp.ge.s32.totalorder %s693, 1
                %s698 = sphi %s678, %s678
                %s699 = sphi %s687, %s687
              $region93: #{rnn_model_forward.5} parent=89 // loop_header_branch
                %696 = sbr.rel (%p694) target = $region97
              $region94: #{rnn_model_forward.5} parent=89 // loop_body
                %v700 = vld [vmem:[%s698] sm:$0xff]
                %701 = vst [vmem:[%s699] sm:$0xff] %v700
                %v702 = vld [vmem:[%s698 + $0x8] sm:$0xff]
                %703 = vst [vmem:[%s699 + $0x8] sm:$0xff] %v702
                %v704 = vld [vmem:[%s698 + $0x10] sm:$0xff]
                %705 = vst [vmem:[%s699 + $0x20] sm:$0xff] %v704
                %v706 = vld [vmem:[%s698 + $0x18] sm:$0xff]
                %707 = vst [vmem:[%s699 + $0x28] sm:$0xff] %v706
                %v708 = vld [vmem:[%s698 + $0x20] sm:$0xff]
                %709 = vst [vmem:[%s699 + $0x40] sm:$0xff] %v708
                %v710 = vld [vmem:[%s698 + $0x28] sm:$0xff]
                %711 = vst [vmem:[%s699 + $0x48] sm:$0xff] %v710
                %v712 = vld [vmem:[%s698 + $0x30] sm:$0xff]
                %713 = vst [vmem:[%s699 + $0x60] sm:$0xff] %v712
                %v714 = vld [vmem:[%s698 + $0x38] sm:$0xff]
                %715 = vst [vmem:[%s699 + $0x68] sm:$0xff] %v714
                %v716 = vld [vmem:[%s698 + $0x40] sm:$0xff]
                %717 = vst [vmem:[%s699 + $0x80] sm:$0xff] %v716
                %v718 = vld [vmem:[%s698 + $0x48] sm:$0xff]
                %719 = vst [vmem:[%s699 + $0x88] sm:$0xff] %v718
                %v720 = vld [vmem:[%s698 + $0x50] sm:$0xff]
                %721 = vst [vmem:[%s699 + $0xa0] sm:$0xff] %v720
                %v722 = vld [vmem:[%s698 + $0x58] sm:$0xff]
                %723 = vst [vmem:[%s699 + $0xa8] sm:$0xff] %v722
                %v724 = vld [vmem:[%s698 + $0x60] sm:$0xff]
                %725 = vst [vmem:[%s699 + $0xc0] sm:$0xff] %v724
                %v726 = vld [vmem:[%s698 + $0x68] sm:$0xff]
                %727 = vst [vmem:[%s699 + $0xc8] sm:$0xff] %v726
                %v728 = vld [vmem:[%s698 + $0x70] sm:$0xff]
                %729 = vst [vmem:[%s699 + $0xe0] sm:$0xff] %v728
                %v730 = vld [vmem:[%s698 + $0x78] sm:$0xff]
                %731 = vst [vmem:[%s699 + $0xe8] sm:$0xff] %v730
              $region95: #{rnn_model_forward.5} parent=89 // loop_footer
                %s697 = sadd.s32 1, %s693
              $region96: #{rnn_model_forward.5} parent=89 // loop_footer_branch
                %692 = sbr.rel target = $region92
              $region97: #{rnn_model_forward.5} parent=89 // loop_exit
                _
            $region90: #{rnn_model_forward.5} parent=85 // pred_fallthru
              _
            // Predicated region
            $region98: #{rnn_model_forward.5} parent=85 // pred_check
              _
            $region99: #{rnn_model_forward.5} parent=85 // pred_check_branch
              %733 = sbr.rel target = $region101
            $region100: #{rnn_model_forward.5} parent=85 // pred_region
              _
            $region101: #{rnn_model_forward.5} parent=85 // pred_fallthru
              _
          $region86: #{rnn_model_forward.5} parent=81 // pred_fallthru
            _
          %734 = vnop
        $region82: #{rnn_model_forward.5} parent=65 // pred_fallthru
          _
      $region66: #{rnn_model_forward.5} parent=5 // pred_fallthru
        _
      %p735 = scmp.le.s32.totalorder 2, %s9
      // Predicated region
      $region102: #{rnn_model_forward.5} parent=5 // pred_check
        %p736 = pneg %p735
      $region103: #{rnn_model_forward.5} parent=5 // pred_check_branch
        %738 = sbr.rel (%p736) target = $region105
      $region104: #{rnn_model_forward.5} parent=5 // pred_region
        %s739 = ssub.s32 %s9, 2
        // Predicated region
        $region106: #{rnn_model_forward.5} parent=104 // pred_check
          %p740 = pneg %p141
        $region107: #{rnn_model_forward.5} parent=104 // pred_check_branch
          %742 = sbr.rel (%p740) target = $region109
        $region108: #{rnn_model_forward.5} parent=104 // pred_region
          %s743 = sand.u32 %s126, 1
          %s744 = sand.u32 %s126, 1
          %s745 = smul.addr %s744, 128
          %s746 = scalar_lea.vmem [#allocation4], %s745
        $region109: #{rnn_model_forward.5} parent=104 // pred_fallthru
          _
      $region105: #{rnn_model_forward.5} parent=5 // pred_fallthru
        _
    $region6: #{rnn_model_forward.5} parent=1 // loop_footer
      %s13 = sadd.s32 1, %s9
    $region7: #{rnn_model_forward.5} parent=1 // loop_footer_branch
      %8 = sbr.rel target = $region3
    $region8: #{rnn_model_forward.5} parent=1 // loop_exit
      _

// kernel: rnn_model_forward.6
$region0: #{rnn_model_forward.6}
  #allocation0 [shape = 'u32[]', space=smem, size = 0x4, offset = 0x4, fixed_abs, tag = 'smem constant byte address 0x4 - core index']
  #allocation1 [shape = 'u32[144,128]{1,0:T(1,128)}', space=vmem, size = 0x12000, scoped, tag = 'internal scratch']
  #allocation2 [shape = 'f32[8,128]{1,0:T(8,128)}', space=vmem, size = 0x1000, scoped, tag = 'scratch operand']
  #allocation3 [shape = 'f32[8,128]{1,0:T(8,128)}', space=vmem, size = 0x1000, scoped, tag = 'scratch operand']
  %s0 = inlined_call_operand.vmem [shape: f32[8,8,512], index: 0, kind: input, shape index: {}]
  %s1 = inlined_call_operand.vmem [shape: bf16[128,512], index: 1, kind: input, shape index: {}]
  %s2 = inlined_call_operand.vmem [shape: f32[8,128], index: 2, kind: input, shape index: {}]
  %s3 = inlined_call_operand.vmem [shape: f32[8,128], index: 3, kind: input, shape index: {}]
  %s4 = inlined_call_operand.vmem [shape: f32[8,8,128], index: 4, kind: output, shape index: {0}]
  %s5 = inlined_call_operand.vmem [shape: f32[8,128], index: 5, kind: output, shape index: {1}]
  %s6 = inlined_call_operand.vmem [shape: f32[8,128], index: 6, kind: output, shape index: {2}]
  %7 = xla_tuple %s4, %s5, %s6
  %s8 = sld [smem:[#allocation0]]
  $region50: #{rnn_model_forward.6} parent=0
    _
  %s10 = ssub.s32 1, %s8
  %s11 = scalar_select 0, %s10, %s8
  // Predicated region
  $region2: #{rnn_model_forward.6} parent=0 // pred_check
    _
  $region3: #{rnn_model_forward.6} parent=0 // pred_check_branch
    %13 = sbr.rel (0) target = $region5
  $region4: #{rnn_model_forward.6} parent=0 // pred_region
    _
  $region5: #{rnn_model_forward.6} parent=0 // pred_fallthru
    _
  // Predicated region
  $region6: #{rnn_model_forward.6} parent=0 // pred_check
    _
  $region7: #{rnn_model_forward.6} parent=0 // pred_check_branch
    %15 = sbr.rel (0) target = $region9
  $region8: #{rnn_model_forward.6} parent=0 // pred_region
    _
  $region9: #{rnn_model_forward.6} parent=0 // pred_fallthru
    _
  // Predicated region
  $region10: #{rnn_model_forward.6} parent=0 // pred_check
    _
  $region11: #{rnn_model_forward.6} parent=0 // pred_check_branch
    %17 = sbr.rel (0) target = $region13
  $region12: #{rnn_model_forward.6} parent=0 // pred_region
    _
  $region13: #{rnn_model_forward.6} parent=0 // pred_fallthru
    _
  // Predicated region
  $region14: #{rnn_model_forward.6} parent=0 // pred_check
    _
  $region15: #{rnn_model_forward.6} parent=0 // pred_check_branch
    %19 = sbr.rel (0) target = $region17
  $region16: #{rnn_model_forward.6} parent=0 // pred_region
    _
  $region17: #{rnn_model_forward.6} parent=0 // pred_fallthru
    _
  %p21 = scmp.eq.s32.totalorder 0, 0
  // Predicated region
  $region18: #{rnn_model_forward.6} parent=0 // pred_check
    %p22 = pneg %p21
  $region19: #{rnn_model_forward.6} parent=0 // pred_check_branch
    %24 = sbr.rel (%p22) target = $region21
  $region20: #{rnn_model_forward.6} parent=0 // pred_region
    %v25 = vld [vmem:[%s2] sm:$0xff]
    %26 = vst [vmem:[#allocation2] sm:$0xff] %v25
    %v27 = vld [vmem:[%s3] sm:$0xff]
    %28 = vst [vmem:[#allocation3] sm:$0xff] %v27
  $region21: #{rnn_model_forward.6} parent=0 // pred_fallthru
    _
  %v29 = vld [vmem:[#allocation2] sm:$0xff]
  %v30 = vld [vmem:[#allocation3] sm:$0xff]
  %v31 = vld [vmem:[%s0] sm:$0xff]
  %v32 = vld [vmem:[%s0 + $0x8] sm:$0xff]
  %v33 = vld [vmem:[%s0 + $0x10] sm:$0xff]
  %v34 = vld [vmem:[%s0 + $0x18] sm:$0xff]
  %v35 = vpack.c.bf16 %v29, %v29
  %v36 = vld [vmem:[%s1] sm:$0xff]
  %v37 = vld [vmem:[%s1 + $0x8] sm:$0xff]
  %v38 = vld [vmem:[%s1 + $0x10] sm:$0xff]
  %v39 = vld [vmem:[%s1 + $0x18] sm:$0xff]
  %v40 = vld [vmem:[%s1 + $0x20] sm:$0xff]
  %v41 = vld [vmem:[%s1 + $0x28] sm:$0xff]
  %v42 = vld [vmem:[%s1 + $0x30] sm:$0xff]
  %v43 = vld [vmem:[%s1 + $0x38] sm:$0xff]
  %v44 = vld [vmem:[%s1 + $0x40] sm:$0xff]
  %v45 = vld [vmem:[%s1 + $0x48] sm:$0xff]
  %v46 = vld [vmem:[%s1 + $0x50] sm:$0xff]
  %v47 = vld [vmem:[%s1 + $0x58] sm:$0xff]
  %v48 = vld [vmem:[%s1 + $0x60] sm:$0xff]
  %v49 = vld [vmem:[%s1 + $0x68] sm:$0xff]
  %v50 = vld [vmem:[%s1 + $0x70] sm:$0xff]
  %v51 = vld [vmem:[%s1 + $0x78] sm:$0xff]
  %v52 = vld [vmem:[%s1 + $0x80] sm:$0xff]
  %v53 = vld [vmem:[%s1 + $0x88] sm:$0xff]
  %v54 = vld [vmem:[%s1 + $0x90] sm:$0xff]
  %v55 = vld [vmem:[%s1 + $0x98] sm:$0xff]
  %v56 = vld [vmem:[%s1 + $0xa0] sm:$0xff]
  %v57 = vld [vmem:[%s1 + $0xa8] sm:$0xff]
  %v58 = vld [vmem:[%s1 + $0xb0] sm:$0xff]
  %v59 = vld [vmem:[%s1 + $0xb8] sm:$0xff]
  %v60 = vld [vmem:[%s1 + $0xc0] sm:$0xff]
  %v61 = vld [vmem:[%s1 + $0xc8] sm:$0xff]
  %v62 = vld [vmem:[%s1 + $0xd0] sm:$0xff]
  %v63 = vld [vmem:[%s1 + $0xd8] sm:$0xff]
  %v64 = vld [vmem:[%s1 + $0xe0] sm:$0xff]
  %v65 = vld [vmem:[%s1 + $0xe8] sm:$0xff]
  %v66 = vld [vmem:[%s1 + $0xf0] sm:$0xff]
  %v67 = vld [vmem:[%s1 + $0xf8] sm:$0xff]
  %v100 = vunpack.c.l.b16 %v36
  %v101 = vunpack.c.h.b16 %v36
  %v102 = vunpack.c.l.b16 %v37
  %v103 = vunpack.c.h.b16 %v37
  %v104 = vunpack.c.l.b16 %v38
  %v105 = vunpack.c.h.b16 %v38
  %v106 = vunpack.c.l.b16 %v39
  %v107 = vunpack.c.h.b16 %v39
  %v108 = vunpack.c.l.b16 %v40
  %v109 = vunpack.c.h.b16 %v40
  %v110 = vunpack.c.l.b16 %v41
  %v111 = vunpack.c.h.b16 %v41
  %v112 = vunpack.c.l.b16 %v42
  %v113 = vunpack.c.h.b16 %v42
  %v114 = vunpack.c.l.b16 %v43
  %v115 = vunpack.c.h.b16 %v43
  %v116 = vunpack.c.l.b16 %v44
  %v117 = vunpack.c.h.b16 %v44
  %v118 = vunpack.c.l.b16 %v45
  %v119 = vunpack.c.h.b16 %v45
  %v120 = vunpack.c.l.b16 %v46
  %v121 = vunpack.c.h.b16 %v46
  %v122 = vunpack.c.l.b16 %v47
  %v123 = vunpack.c.h.b16 %v47
  %v124 = vunpack.c.l.b16 %v48
  %v125 = vunpack.c.h.b16 %v48
  %v126 = vunpack.c.l.b16 %v49
  %v127 = vunpack.c.h.b16 %v49
  %v128 = vunpack.c.l.b16 %v50
  %v129 = vunpack.c.h.b16 %v50
  %v130 = vunpack.c.l.b16 %v51
  %v131 = vunpack.c.h.b16 %v51
  %v132 = vunpack.c.l.b16 %v52
  %v133 = vunpack.c.h.b16 %v52
  %v134 = vunpack.c.l.b16 %v53
  %v135 = vunpack.c.h.b16 %v53
  %v136 = vunpack.c.l.b16 %v54
  %v137 = vunpack.c.h.b16 %v54
  %v138 = vunpack.c.l.b16 %v55
  %v139 = vunpack.c.h.b16 %v55
  %v140 = vunpack.c.l.b16 %v56
  %v141 = vunpack.c.h.b16 %v56
  %v142 = vunpack.c.l.b16 %v57
  %v143 = vunpack.c.h.b16 %v57
  %v144 = vunpack.c.l.b16 %v58
  %v145 = vunpack.c.h.b16 %v58
  %v146 = vunpack.c.l.b16 %v59
  %v147 = vunpack.c.h.b16 %v59
  %v148 = vunpack.c.l.b16 %v60
  %v149 = vunpack.c.h.b16 %v60
  %v150 = vunpack.c.l.b16 %v61
  %v151 = vunpack.c.h.b16 %v61
  %v152 = vunpack.c.l.b16 %v62
  %v153 = vunpack.c.h.b16 %v62
  %v154 = vunpack.c.l.b16 %v63
  %v155 = vunpack.c.h.b16 %v63
  %v156 = vunpack.c.l.b16 %v64
  %v157 = vunpack.c.h.b16 %v64
  %v158 = vunpack.c.l.b16 %v65
  %v159 = vunpack.c.h.b16 %v65
  %v160 = vunpack.c.l.b16 %v66
  %v161 = vunpack.c.h.b16 %v66
  %v162 = vunpack.c.l.b16 %v67
  %v163 = vunpack.c.h.b16 %v67
  %v164 = vpack.c.b16 %v104, %v100
  %v165 = vpack.c.b16 %v105, %v101
  %v166 = vpack.c.b16 %v106, %v102
  %v167 = vpack.c.b16 %v107, %v103
  %v168 = vpack.c.b16 %v112, %v108
  %v169 = vpack.c.b16 %v113, %v109
  %v170 = vpack.c.b16 %v114, %v110
  %v171 = vpack.c.b16 %v115, %v111
  %v172 = vpack.c.b16 %v120, %v116
  %v173 = vpack.c.b16 %v121, %v117
  %v174 = vpack.c.b16 %v122, %v118
  %v175 = vpack.c.b16 %v123, %v119
  %v176 = vpack.c.b16 %v128, %v124
  %v177 = vpack.c.b16 %v129, %v125
  %v178 = vpack.c.b16 %v130, %v126
  %v179 = vpack.c.b16 %v131, %v127
  %v180 = vpack.c.b16 %v136, %v132
  %v181 = vpack.c.b16 %v137, %v133
  %v182 = vpack.c.b16 %v138, %v134
  %v183 = vpack.c.b16 %v139, %v135
  %v184 = vpack.c.b16 %v144, %v140
  %v185 = vpack.c.b16 %v145, %v141
  %v186 = vpack.c.b16 %v146, %v142
  %v187 = vpack.c.b16 %v147, %v143
  %v188 = vpack.c.b16 %v152, %v148
  %v189 = vpack.c.b16 %v153, %v149
  %v190 = vpack.c.b16 %v154, %v150
  %v191 = vpack.c.b16 %v155, %v151
  %v192 = vpack.c.b16 %v160, %v156
  %v193 = vpack.c.b16 %v161, %v157
  %v194 = vpack.c.b16 %v162, %v158
  %v195 = vpack.c.b16 %v163, %v159
  %228 = vmatprep.subr.bf16.mxu0 %v165
  %229 = vmatpush1.bf16.msra.mxu0 %v164
  %230 = vmatprep.subr.bf16.mxu0 %v169
  %231 = vmatpush1.bf16.msra.mxu0 %v168
  %232 = vmatprep.subr.bf16.mxu0 %v173
  %233 = vmatpush1.bf16.msra.mxu0 %v172
  %234 = vmatprep.subr.bf16.mxu0 %v177
  %235 = vmatpush1.bf16.msra.mxu0 %v176
  %236 = vmatprep.subr.bf16.mxu0 %v181
  %237 = vmatpush1.bf16.msra.mxu0 %v180
  %238 = vmatprep.subr.bf16.mxu0 %v185
  %239 = vmatpush1.bf16.msra.mxu0 %v184
  %240 = vmatprep.subr.bf16.mxu0 %v189
  %241 = vmatpush1.bf16.msra.mxu0 %v188
  %242 = vmatprep.subr.bf16.mxu0 %v193
  %243 = vmatpush1.bf16.msra.mxu0 %v192
  %244 = vmatprep.subr.bf16.mxu0 0
  %245 = vmatpush1.bf16.msra.mxu0 0
  %246 = vmatprep.subr.bf16.mxu0 0
  %247 = vmatpush1.bf16.msra.mxu0 0
  %248 = vmatprep.subr.bf16.mxu0 0
  %249 = vmatpush1.bf16.msra.mxu0 0
  %250 = vmatprep.subr.bf16.mxu0 0
  %251 = vmatpush1.bf16.msra.mxu0 0
  %252 = vmatprep.subr.bf16.mxu0 0
  %253 = vmatpush1.bf16.msra.mxu0 0
  %254 = vmatprep.subr.bf16.mxu0 0
  %255 = vmatpush1.bf16.msra.mxu0 0
  %256 = vmatprep.subr.bf16.mxu0 0
  %257 = vmatpush1.bf16.msra.mxu0 0
  %258 = vmatprep.subr.bf16.mxu0 0
  %259 = vmatpush1.bf16.msra.mxu0 0
  %260 = vmatprep.mubr.bf16.mxu0 0
  %261 = vmatmul.mubr.bf16.gmra.mrb[0].mxu0 %v35
  %v262 = vpop.f32.mrb[0].mxu0
  %v263 = vadd.f32 0.0, %v262
  %v264 = vpop.f32.mrb[0].mxu0
  %v265 = vadd.f32 0.0, %v264
  %v266 = vpop.f32.mrb[0].mxu0
  %v267 = vpop.f32.mrb[0].mxu0
  %268 = vdwg.mxu0
  %269 = vmatprep.subr.bf16.mxu0 %v167
  %270 = vmatpush1.bf16.msra.mxu0 %v166
  %271 = vmatprep.subr.bf16.mxu0 %v171
  %272 = vmatpush1.bf16.msra.mxu0 %v170
  %273 = vmatprep.subr.bf16.mxu0 %v175
  %274 = vmatpush1.bf16.msra.mxu0 %v174
  %275 = vmatprep.subr.bf16.mxu0 %v179
  %276 = vmatpush1.bf16.msra.mxu0 %v178
  %277 = vmatprep.subr.bf16.mxu0 %v183
  %278 = vmatpush1.bf16.msra.mxu0 %v182
  %279 = vmatprep.subr.bf16.mxu0 %v187
  %280 = vmatpush1.bf16.msra.mxu0 %v186
  %281 = vmatprep.subr.bf16.mxu0 %v191
  %282 = vmatpush1.bf16.msra.mxu0 %v190
  %283 = vmatprep.subr.bf16.mxu0 %v195
  %284 = vmatpush1.bf16.msra.mxu0 %v194
  %285 = vmatprep.subr.bf16.mxu0 0
  %286 = vmatpush1.bf16.msra.mxu0 0
  %287 = vmatprep.subr.bf16.mxu0 0
  %288 = vmatpush1.bf16.msra.mxu0 0
  %289 = vmatprep.subr.bf16.mxu0 0
  %290 = vmatpush1.bf16.msra.mxu0 0
  %291 = vmatprep.subr.bf16.mxu0 0
  %292 = vmatpush1.bf16.msra.mxu0 0
  %293 = vmatprep.subr.bf16.mxu0 0
  %294 = vmatpush1.bf16.msra.mxu0 0
  %295 = vmatprep.subr.bf16.mxu0 0
  %296 = vmatpush1.bf16.msra.mxu0 0
  %297 = vmatprep.subr.bf16.mxu0 0
  %298 = vmatpush1.bf16.msra.mxu0 0
  %299 = vmatprep.subr.bf16.mxu0 0
  %300 = vmatpush1.bf16.msra.mxu0 0
  %301 = vmatprep.mubr.bf16.mxu0 0
  %302 = vmatmul.mubr.bf16.gmra.mrb[0].mxu0 %v35
  %v303 = vpop.f32.mrb[0].mxu0
  %v304 = vadd.f32 0.0, %v303
  %v305 = vpop.f32.mrb[0].mxu0
  %v306 = vadd.f32 0.0, %v305
  %v307 = vpop.f32.mrb[0].mxu0
  %v308 = vpop.f32.mrb[0].mxu0
  %309 = vdwg.mxu0
  %v310 = vadd.f32 %v31, %v263
  %v311 = vadd.f32 %v32, %v265
  %v312 = vadd.f32 %v33, %v304
  %v313 = vadd.f32 %v34, %v306
  %v314 = vxor.u32 %v310, 2147483648
  %v315 = vmul.f32 %v314, 1.442695
  %v316 = vpow.pop %v315
  %v317 = vadd.f32 %v316, 1.0
  %v318 = vrcp.pop %v317
  %v319 = vmul.f32 1.0, %v318
  %v320 = vxor.u32 %v311, 2147483648
  %v321 = vmul.f32 %v320, 1.442695
  %v322 = vpow.pop %v321
  %v323 = vadd.f32 %v322, 1.0
  %v324 = vrcp.pop %v323
  %v325 = vmul.f32 1.0, %v324
  %v326 = vtanh.pop %v312
  %v327 = vxor.u32 %v313, 2147483648
  %v328 = vmul.f32 %v327, 1.442695
  %v329 = vpow.pop %v328
  %v330 = vadd.f32 %v329, 1.0
  %v331 = vrcp.pop %v330
  %v332 = vmul.f32 1.0, %v331
  %v333 = vmul.f32 %v325, %v30
  %v334 = vmul.f32 %v319, %v326
  %v335 = vadd.f32 %v333, %v334
  %v336 = vtanh.pop %v335
  %v337 = vmul.f32 %v332, %v336
  %338 = vst [vmem:[%s4] sm:$0xff] %v337
  %s339 = scalar_lea.vmem %s0, 32
  %v340 = vld [vmem:[%s339] sm:$0xff]
  %v341 = vld [vmem:[%s339 + $0x8] sm:$0xff]
  %v342 = vld [vmem:[%s339 + $0x10] sm:$0xff]
  %v343 = vld [vmem:[%s339 + $0x18] sm:$0xff]
  %v344 = vpack.c.bf16 %v337, %v337
  %v345 = vld [vmem:[%s1] sm:$0xff]
  %v346 = vld [vmem:[%s1 + $0x8] sm:$0xff]
  %v347 = vld [vmem:[%s1 + $0x10] sm:$0xff]
  %v348 = vld [vmem:[%s1 + $0x18] sm:$0xff]
  %v349 = vld [vmem:[%s1 + $0x20] sm:$0xff]
  %v350 = vld [vmem:[%s1 + $0x28] sm:$0xff]
  %v351 = vld [vmem:[%s1 + $0x30] sm:$0xff]
  %v352 = vld [vmem:[%s1 + $0x38] sm:$0xff]
  %v353 = vld [vmem:[%s1 + $0x40] sm:$0xff]
  %v354 = vld [vmem:[%s1 + $0x48] sm:$0xff]
  %v355 = vld [vmem:[%s1 + $0x50] sm:$0xff]
  %v356 = vld [vmem:[%s1 + $0x58] sm:$0xff]
  %v357 = vld [vmem:[%s1 + $0x60] sm:$0xff]
  %v358 = vld [vmem:[%s1 + $0x68] sm:$0xff]
  %v359 = vld [vmem:[%s1 + $0x70] sm:$0xff]
  %v360 = vld [vmem:[%s1 + $0x78] sm:$0xff]
  %v361 = vld [vmem:[%s1 + $0x80] sm:$0xff]
  %v362 = vld [vmem:[%s1 + $0x88] sm:$0xff]
  %v363 = vld [vmem:[%s1 + $0x90] sm:$0xff]
  %v364 = vld [vmem:[%s1 + $0x98] sm:$0xff]
  %v365 = vld [vmem:[%s1 + $0xa0] sm:$0xff]
  %v366 = vld [vmem:[%s1 + $0xa8] sm:$0xff]
  %v367 = vld [vmem:[%s1 + $0xb0] sm:$0xff]
  %v368 = vld [vmem:[%s1 + $0xb8] sm:$0xff]
  %v369 = vld [vmem:[%s1 + $0xc0] sm:$0xff]
  %v370 = vld [vmem:[%s1 + $0xc8] sm:$0xff]
  %v371 = vld [vmem:[%s1 + $0xd0] sm:$0xff]
  %v372 = vld [vmem:[%s1 + $0xd8] sm:$0xff]
  %v373 = vld [vmem:[%s1 + $0xe0] sm:$0xff]
  %v374 = vld [vmem:[%s1 + $0xe8] sm:$0xff]
  %v375 = vld [vmem:[%s1 + $0xf0] sm:$0xff]
  %v376 = vld [vmem:[%s1 + $0xf8] sm:$0xff]
  %v409 = vunpack.c.l.b16 %v345
  %v410 = vunpack.c.h.b16 %v345
  %v411 = vunpack.c.l.b16 %v346
  %v412 = vunpack.c.h.b16 %v346
  %v413 = vunpack.c.l.b16 %v347
  %v414 = vunpack.c.h.b16 %v347
  %v415 = vunpack.c.l.b16 %v348
  %v416 = vunpack.c.h.b16 %v348
  %v417 = vunpack.c.l.b16 %v349
  %v418 = vunpack.c.h.b16 %v349
  %v419 = vunpack.c.l.b16 %v350
  %v420 = vunpack.c.h.b16 %v350
  %v421 = vunpack.c.l.b16 %v351
  %v422 = vunpack.c.h.b16 %v351
  %v423 = vunpack.c.l.b16 %v352
  %v424 = vunpack.c.h.b16 %v352
  %v425 = vunpack.c.l.b16 %v353
  %v426 = vunpack.c.h.b16 %v353
  %v427 = vunpack.c.l.b16 %v354
  %v428 = vunpack.c.h.b16 %v354
  %v429 = vunpack.c.l.b16 %v355
  %v430 = vunpack.c.h.b16 %v355
  %v431 = vunpack.c.l.b16 %v356
  %v432 = vunpack.c.h.b16 %v356
  %v433 = vunpack.c.l.b16 %v357
  %v434 = vunpack.c.h.b16 %v357
  %v435 = vunpack.c.l.b16 %v358
  %v436 = vunpack.c.h.b16 %v358
  %v437 = vunpack.c.l.b16 %v359
  %v438 = vunpack.c.h.b16 %v359
  %v439 = vunpack.c.l.b16 %v360
  %v440 = vunpack.c.h.b16 %v360
  %v441 = vunpack.c.l.b16 %v361
  %v442 = vunpack.c.h.b16 %v361
  %v443 = vunpack.c.l.b16 %v362
  %v444 = vunpack.c.h.b16 %v362
  %v445 = vunpack.c.l.b16 %v363
  %v446 = vunpack.c.h.b16 %v363
  %v447 = vunpack.c.l.b16 %v364
  %v448 = vunpack.c.h.b16 %v364
  %v449 = vunpack.c.l.b16 %v365
  %v450 = vunpack.c.h.b16 %v365
  %v451 = vunpack.c.l.b16 %v366
  %v452 = vunpack.c.h.b16 %v366
  %v453 = vunpack.c.l.b16 %v367
  %v454 = vunpack.c.h.b16 %v367
  %v455 = vunpack.c.l.b16 %v368
  %v456 = vunpack.c.h.b16 %v368
  %v457 = vunpack.c.l.b16 %v369
  %v458 = vunpack.c.h.b16 %v369
  %v459 = vunpack.c.l.b16 %v370
  %v460 = vunpack.c.h.b16 %v370
  %v461 = vunpack.c.l.b16 %v371
  %v462 = vunpack.c.h.b16 %v371
  %v463 = vunpack.c.l.b16 %v372
  %v464 = vunpack.c.h.b16 %v372
  %v465 = vunpack.c.l.b16 %v373
  %v466 = vunpack.c.h.b16 %v373
  %v467 = vunpack.c.l.b16 %v374
  %v468 = vunpack.c.h.b16 %v374
  %v469 = vunpack.c.l.b16 %v375
  %v470 = vunpack.c.h.b16 %v375
  %v471 = vunpack.c.l.b16 %v376
  %v472 = vunpack.c.h.b16 %v376
  %v473 = vpack.c.b16 %v413, %v409
  %v474 = vpack.c.b16 %v414, %v410
  %v475 = vpack.c.b16 %v415, %v411
  %v476 = vpack.c.b16 %v416, %v412
  %v477 = vpack.c.b16 %v421, %v417
  %v478 = vpack.c.b16 %v422, %v418
  %v479 = vpack.c.b16 %v423, %v419
  %v480 = vpack.c.b16 %v424, %v420
  %v481 = vpack.c.b16 %v429, %v425
  %v482 = vpack.c.b16 %v430, %v426
  %v483 = vpack.c.b16 %v431, %v427
  %v484 = vpack.c.b16 %v432, %v428
  %v485 = vpack.c.b16 %v437, %v433
  %v486 = vpack.c.b16 %v438, %v434
  %v487 = vpack.c.b16 %v439, %v435
  %v488 = vpack.c.b16 %v440, %v436
  %v489 = vpack.c.b16 %v445, %v441
  %v490 = vpack.c.b16 %v446, %v442
  %v491 = vpack.c.b16 %v447, %v443
  %v492 = vpack.c.b16 %v448, %v444
  %v493 = vpack.c.b16 %v453, %v449
  %v494 = vpack.c.b16 %v454, %v450
  %v495 = vpack.c.b16 %v455, %v451
  %v496 = vpack.c.b16 %v456, %v452
  %v497 = vpack.c.b16 %v461, %v457
  %v498 = vpack.c.b16 %v462, %v458
  %v499 = vpack.c.b16 %v463, %v459
  %v500 = vpack.c.b16 %v464, %v460
  %v501 = vpack.c.b16 %v469, %v465
  %v502 = vpack.c.b16 %v470, %v466
  %v503 = vpack.c.b16 %v471, %v467
  %v504 = vpack.c.b16 %v472, %v468
  %537 = vmatprep.subr.bf16.mxu0 %v474
  %538 = vmatpush1.bf16.msra.mxu0 %v473
  %539 = vmatprep.subr.bf16.mxu0 %v478
  %540 = vmatpush1.bf16.msra.mxu0 %v477
  %541 = vmatprep.subr.bf16.mxu0 %v482
  %542 = vmatpush1.bf16.msra.mxu0 %v481
  %543 = vmatprep.subr.bf16.mxu0 %v486
  %544 = vmatpush1.bf16.msra.mxu0 %v485
  %545 = vmatprep.subr.bf16.mxu0 %v490
  %546 = vmatpush1.bf16.msra.mxu0 %v489
  %547 = vmatprep.subr.bf16.mxu0 %v494
  %548 = vmatpush1.bf16.msra.mxu0 %v493
  %549 = vmatprep.subr.bf16.mxu0 %v498
  %550 = vmatpush1.bf16.msra.mxu0 %v497
  %551 = vmatprep.subr.bf16.mxu0 %v502
  %552 = vmatpush1.bf16.msra.mxu0 %v501
  %553 = vmatprep.subr.bf16.mxu0 0
  %554 = vmatpush1.bf16.msra.mxu0 0
  %555 = vmatprep.subr.bf16.mxu0 0
  %556 = vmatpush1.bf16.msra.mxu0 0
  %557 = vmatprep.subr.bf16.mxu0 0
  %558 = vmatpush1.bf16.msra.mxu0 0
  %559 = vmatprep.subr.bf16.mxu0 0
  %560 = vmatpush1.bf16.msra.mxu0 0
  %561 = vmatprep.subr.bf16.mxu0 0
  %562 = vmatpush1.bf16.msra.mxu0 0
  %563 = vmatprep.subr.bf16.mxu0 0
  %564 = vmatpush1.bf16.msra.mxu0 0
  %565 = vmatprep.subr.bf16.mxu0 0
  %566 = vmatpush1.bf16.msra.mxu0 0
  %567 = vmatprep.subr.bf16.mxu0 0
  %568 = vmatpush1.bf16.msra.mxu0 0
  %569 = vmatprep.mubr.bf16.mxu0 0
  %570 = vmatmul.mubr.bf16.gmra.mrb[0].mxu0 %v344
  %v571 = vpop.f32.mrb[0].mxu0
  %v572 = vadd.f32 0.0, %v571
  %v573 = vpop.f32.mrb[0].mxu0
  %v574 = vadd.f32 0.0, %v573
  %v575 = vpop.f32.mrb[0].mxu0
  %v576 = vpop.f32.mrb[0].mxu0
  %577 = vdwg.mxu0
  %578 = vmatprep.subr.bf16.mxu0 %v476
  %579 = vmatpush1.bf16.msra.mxu0 %v475
  %580 = vmatprep.subr.bf16.mxu0 %v480
  %581 = vmatpush1.bf16.msra.mxu0 %v479
  %582 = vmatprep.subr.bf16.mxu0 %v484
  %583 = vmatpush1.bf16.msra.mxu0 %v483
  %584 = vmatprep.subr.bf16.mxu0 %v488
  %585 = vmatpush1.bf16.msra.mxu0 %v487
  %586 = vmatprep.subr.bf16.mxu0 %v492
  %587 = vmatpush1.bf16.msra.mxu0 %v491
  %588 = vmatprep.subr.bf16.mxu0 %v496
  %589 = vmatpush1.bf16.msra.mxu0 %v495
  %590 = vmatprep.subr.bf16.mxu0 %v500
  %591 = vmatpush1.bf16.msra.mxu0 %v499
  %592 = vmatprep.subr.bf16.mxu0 %v504
  %593 = vmatpush1.bf16.msra.mxu0 %v503
  %594 = vmatprep.subr.bf16.mxu0 0
  %595 = vmatpush1.bf16.msra.mxu0 0
  %596 = vmatprep.subr.bf16.mxu0 0
  %597 = vmatpush1.bf16.msra.mxu0 0
  %598 = vmatprep.subr.bf16.mxu0 0
  %599 = vmatpush1.bf16.msra.mxu0 0
  %600 = vmatprep.subr.bf16.mxu0 0
  %601 = vmatpush1.bf16.msra.mxu0 0
  %602 = vmatprep.subr.bf16.mxu0 0
  %603 = vmatpush1.bf16.msra.mxu0 0
  %604 = vmatprep.subr.bf16.mxu0 0
  %605 = vmatpush1.bf16.msra.mxu0 0
  %606 = vmatprep.subr.bf16.mxu0 0
  %607 = vmatpush1.bf16.msra.mxu0 0
  %608 = vmatprep.subr.bf16.mxu0 0
  %609 = vmatpush1.bf16.msra.mxu0 0
  %610 = vmatprep.mubr.bf16.mxu0 0
  %611 = vmatmul.mubr.bf16.gmra.mrb[0].mxu0 %v344
  %v612 = vpop.f32.mrb[0].mxu0
  %v613 = vadd.f32 0.0, %v612
  %v614 = vpop.f32.mrb[0].mxu0
  %v615 = vadd.f32 0.0, %v614
  %v616 = vpop.f32.mrb[0].mxu0
  %v617 = vpop.f32.mrb[0].mxu0
  %618 = vdwg.mxu0
  %v619 = vadd.f32 %v340, %v572
  %v620 = vadd.f32 %v341, %v574
  %v621 = vadd.f32 %v342, %v613
  %v622 = vadd.f32 %v343, %v615
  %v623 = vxor.u32 %v619, 2147483648
  %v624 = vmul.f32 %v623, 1.442695
  %v625 = vpow.pop %v624
  %v626 = vadd.f32 %v625, 1.0
  %v627 = vrcp.pop %v626
  %v628 = vmul.f32 1.0, %v627
  %v629 = vxor.u32 %v620, 2147483648
  %v630 = vmul.f32 %v629, 1.442695
  %v631 = vpow.pop %v630
  %v632 = vadd.f32 %v631, 1.0
  %v633 = vrcp.pop %v632
  %v634 = vmul.f32 1.0, %v633
  %v635 = vtanh.pop %v621
  %v636 = vxor.u32 %v622, 2147483648
  %v637 = vmul.f32 %v636, 1.442695
  %v638 = vpow.pop %v637
  %v639 = vadd.f32 %v638, 1.0
  %v640 = vrcp.pop %v639
  %v641 = vmul.f32 1.0, %v640
  %v642 = vmul.f32 %v634, %v335
  %v643 = vmul.f32 %v628, %v635
  %v644 = vadd.f32 %v642, %v643
  %v645 = vtanh.pop %v644
  %v646 = vmul.f32 %v641, %v645
  %s647 = scalar_lea.vmem %s4, 8
  %648 = vst [vmem:[%s647] sm:$0xff] %v646
  %s649 = scalar_lea.vmem %s0, 64
  %v650 = vld [vmem:[%s649] sm:$0xff]
  %v651 = vld [vmem:[%s649 + $0x8] sm:$0xff]
  %v652 = vld [vmem:[%s649 + $0x10] sm:$0xff]
  %v653 = vld [vmem:[%s649 + $0x18] sm:$0xff]
  %v654 = vpack.c.bf16 %v646, %v646
  %v655 = vld [vmem:[%s1] sm:$0xff]
  %v656 = vld [vmem:[%s1 + $0x8] sm:$0xff]
  %v657 = vld [vmem:[%s1 + $0x10] sm:$0xff]
  %v658 = vld [vmem:[%s1 + $0x18] sm:$0xff]
  %v659 = vld [vmem:[%s1 + $0x20] sm:$0xff]
  %v660 = vld [vmem:[%s1 + $0x28] sm:$0xff]
  %v661 = vld [vmem:[%s1 + $0x30] sm:$0xff]
  %v662 = vld [vmem:[%s1 + $0x38] sm:$0xff]
  %v663 = vld [vmem:[%s1 + $0x40] sm:$0xff]
  %v664 = vld [vmem:[%s1 + $0x48] sm:$0xff]
  %v665 = vld [vmem:[%s1 + $0x50] sm:$0xff]
  %v666 = vld [vmem:[%s1 + $0x58] sm:$0xff]
  %v667 = vld [vmem:[%s1 + $0x60] sm:$0xff]
  %v668 = vld [vmem:[%s1 + $0x68] sm:$0xff]
  %v669 = vld [vmem:[%s1 + $0x70] sm:$0xff]
  %v670 = vld [vmem:[%s1 + $0x78] sm:$0xff]
  %v671 = vld [vmem:[%s1 + $0x80] sm:$0xff]
  %v672 = vld [vmem:[%s1 + $0x88] sm:$0xff]
  %v673 = vld [vmem:[%s1 + $0x90] sm:$0xff]
  %v674 = vld [vmem:[%s1 + $0x98] sm:$0xff]
  %v675 = vld [vmem:[%s1 + $0xa0] sm:$0xff]
  %v676 = vld [vmem:[%s1 + $0xa8] sm:$0xff]
  %v677 = vld [vmem:[%s1 + $0xb0] sm:$0xff]
  %v678 = vld [vmem:[%s1 + $0xb8] sm:$0xff]
  %v679 = vld [vmem:[%s1 + $0xc0] sm:$0xff]
  %v680 = vld [vmem:[%s1 + $0xc8] sm:$0xff]
  %v681 = vld [vmem:[%s1 + $0xd0] sm:$0xff]
  %v682 = vld [vmem:[%s1 + $0xd8] sm:$0xff]
  %v683 = vld [vmem:[%s1 + $0xe0] sm:$0xff]
  %v684 = vld [vmem:[%s1 + $0xe8] sm:$0xff]
  %v685 = vld [vmem:[%s1 + $0xf0] sm:$0xff]
  %v686 = vld [vmem:[%s1 + $0xf8] sm:$0xff]
  %v719 = vunpack.c.l.b16 %v655
  %v720 = vunpack.c.h.b16 %v655
  %v721 = vunpack.c.l.b16 %v656
  %v722 = vunpack.c.h.b16 %v656
  %v723 = vunpack.c.l.b16 %v657
  %v724 = vunpack.c.h.b16 %v657
  %v725 = vunpack.c.l.b16 %v658
  %v726 = vunpack.c.h.b16 %v658
  %v727 = vunpack.c.l.b16 %v659
  %v728 = vunpack.c.h.b16 %v659
  %v729 = vunpack.c.l.b16 %v660
  %v730 = vunpack.c.h.b16 %v660
  %v731 = vunpack.c.l.b16 %v661
  %v732 = vunpack.c.h.b16 %v661
  %v733 = vunpack.c.l.b16 %v662
  %v734 = vunpack.c.h.b16 %v662
  %v735 = vunpack.c.l.b16 %v663
  %v736 = vunpack.c.h.b16 %v663
  %v737 = vunpack.c.l.b16 %v664
  %v738 = vunpack.c.h.b16 %v664
  %v739 = vunpack.c.l.b16 %v665
  %v740 = vunpack.c.h.b16 %v665
  %v741 = vunpack.c.l.b16 %v666
  %v742 = vunpack.c.h.b16 %v666
  %v743 = vunpack.c.l.b16 %v667
  %v744 = vunpack.c.h.b16 %v667
  %v745 = vunpack.c.l.b16 %v668
  %v746 = vunpack.c.h.b16 %v668
  %v747 = vunpack.c.l.b16 %v669
  %v748 = vunpack.c.h.b16 %v669
  %v749 = vunpack.c.l.b16 %v670
  %v750 = vunpack.c.h.b16 %v670
  %v751 = vunpack.c.l.b16 %v671
  %v752 = vunpack.c.h.b16 %v671
  %v753 = vunpack.c.l.b16 %v672
  %v754 = vunpack.c.h.b16 %v672
  %v755 = vunpack.c.l.b16 %v673
  %v756 = vunpack.c.h.b16 %v673
  %v757 = vunpack.c.l.b16 %v674
  %v758 = vunpack.c.h.b16 %v674
  %v759 = vunpack.c.l.b16 %v675
  %v760 = vunpack.c.h.b16 %v675
  %v761 = vunpack.c.l.b16 %v676
  %v762 = vunpack.c.h.b16 %v676
  %v763 = vunpack.c.l.b16 %v677
  %v764 = vunpack.c.h.b16 %v677
  %v765 = vunpack.c.l.b16 %v678
  %v766 = vunpack.c.h.b16 %v678
  %v767 = vunpack.c.l.b16 %v679
  %v768 = vunpack.c.h.b16 %v679
  %v769 = vunpack.c.l.b16 %v680
  %v770 = vunpack.c.h.b16 %v680
  %v771 = vunpack.c.l.b16 %v681
  %v772 = vunpack.c.h.b16 %v681
  %v773 = vunpack.c.l.b16 %v682
  %v774 = vunpack.c.h.b16 %v682
  %v775 = vunpack.c.l.b16 %v683
  %v776 = vunpack.c.h.b16 %v683
  %v777 = vunpack.c.l.b16 %v684
  %v778 = vunpack.c.h.b16 %v684
  %v779 = vunpack.c.l.b16 %v685
  %v780 = vunpack.c.h.b16 %v685
  %v781 = vunpack.c.l.b16 %v686
  %v782 = vunpack.c.h.b16 %v686
  %v783 = vpack.c.b16 %v723, %v719
  %v784 = vpack.c.b16 %v724, %v720
  %v785 = vpack.c.b16 %v725, %v721
  %v786 = vpack.c.b16 %v726, %v722
  %v787 = vpack.c.b16 %v731, %v727
  %v788 = vpack.c.b16 %v732, %v728
  %v789 = vpack.c.b16 %v733, %v729
  %v790 = vpack.c.b16 %v734, %v730
  %v791 = vpack.c.b16 %v739, %v735
  %v792 = vpack.c.b16 %v740, %v736
  %v793 = vpack.c.b16 %v741, %v737
  %v794 = vpack.c.b16 %v742, %v738
  %v795 = vpack.c.b16 %v747, %v743
  %v796 = vpack.c.b16 %v748, %v744
  %v797 = vpack.c.b16 %v749, %v745
  %v798 = vpack.c.b16 %v750, %v746
  %v799 = vpack.c.b16 %v755, %v751
  %v800 = vpack.c.b16 %v756, %v752
  %v801 = vpack.c.b16 %v757, %v753
  %v802 = vpack.c.b16 %v758, %v754
  %v803 = vpack.c.b16 %v763, %v759
  %v804 = vpack.c.b16 %v764, %v760
  %v805 = vpack.c.b16 %v765, %v761
  %v806 = vpack.c.b16 %v766, %v762
  %v807 = vpack.c.b16 %v771, %v767
  %v808 = vpack.c.b16 %v772, %v768
  %v809 = vpack.c.b16 %v773, %v769
  %v810 = vpack.c.b16 %v774, %v770
  %v811 = vpack.c.b16 %v779, %v775
  %v812 = vpack.c.b16 %v780, %v776
  %v813 = vpack.c.b16 %v781, %v777
  %v814 = vpack.c.b16 %v782, %v778
  %847 = vmatprep.subr.bf16.mxu0 %v784
  %848 = vmatpush1.bf16.msra.mxu0 %v783
  %849 = vmatprep.subr.bf16.mxu0 %v788
  %850 = vmatpush1.bf16.msra.mxu0 %v787
  %851 = vmatprep.subr.bf16.mxu0 %v792
  %852 = vmatpush1.bf16.msra.mxu0 %v791
  %853 = vmatprep.subr.bf16.mxu0 %v796
  %854 = vmatpush1.bf16.msra.mxu0 %v795
  %855 = vmatprep.subr.bf16.mxu0 %v800
  %856 = vmatpush1.bf16.msra.mxu0 %v799
  %857 = vmatprep.subr.bf16.mxu0 %v804
  %858 = vmatpush1.bf16.msra.mxu0 %v803
  %859 = vmatprep.subr.bf16.mxu0 %v808
  %860 = vmatpush1.bf16.msra.mxu0 %v807
  %861 = vmatprep.subr.bf16.mxu0 %v812
  %862 = vmatpush1.bf16.msra.mxu0 %v811
  %863 = vmatprep.subr.bf16.mxu0 0
  %864 = vmatpush1.bf16.msra.mxu0 0
  %865 = vmatprep.subr.bf16.mxu0 0
  %866 = vmatpush1.bf16.msra.mxu0 0
  %867 = vmatprep.subr.bf16.mxu0 0
  %868 = vmatpush1.bf16.msra.mxu0 0
  %869 = vmatprep.subr.bf16.mxu0 0
  %870 = vmatpush1.bf16.msra.mxu0 0
  %871 = vmatprep.subr.bf16.mxu0 0
  %872 = vmatpush1.bf16.msra.mxu0 0
  %873 = vmatprep.subr.bf16.mxu0 0
  %874 = vmatpush1.bf16.msra.mxu0 0
  %875 = vmatprep.subr.bf16.mxu0 0
  %876 = vmatpush1.bf16.msra.mxu0 0
  %877 = vmatprep.subr.bf16.mxu0 0
  %878 = vmatpush1.bf16.msra.mxu0 0
  %879 = vmatprep.mubr.bf16.mxu0 0
  %880 = vmatmul.mubr.bf16.gmra.mrb[0].mxu0 %v654
  %v881 = vpop.f32.mrb[0].mxu0
  %v882 = vadd.f32 0.0, %v881
  %v883 = vpop.f32.mrb[0].mxu0
  %v884 = vadd.f32 0.0, %v883
  %v885 = vpop.f32.mrb[0].mxu0
  %v886 = vpop.f32.mrb[0].mxu0
  %887 = vdwg.mxu0
  %888 = vmatprep.subr.bf16.mxu0 %v786
  %889 = vmatpush1.bf16.msra.mxu0 %v785
  %890 = vmatprep.subr.bf16.mxu0 %v790
  %891 = vmatpush1.bf16.msra.mxu0 %v789
  %892 = vmatprep.subr.bf16.mxu0 %v794
  %893 = vmatpush1.bf16.msra.mxu0 %v793
  %894 = vmatprep.subr.bf16.mxu0 %v798
  %895 = vmatpush1.bf16.msra.mxu0 %v797
  %896 = vmatprep.subr.bf16.mxu0 %v802
  %897 = vmatpush1.bf16.msra.mxu0 %v801
  %898 = vmatprep.subr.bf16.mxu0 %v806
  %899 = vmatpush1.bf16.msra.mxu0 %v805
  %900 = vmatprep.subr.bf16.mxu0 %v810
  %901 = vmatpush1.bf16.msra.mxu0 %v809
  %902 = vmatprep.subr.bf16.mxu0 %v814
  %903 = vmatpush1.bf16.msra.mxu0 %v813
  %904 = vmatprep.subr.bf16.mxu0 0
  %905 = vmatpush1.bf16.msra.mxu0 0
  %906 = vmatprep.subr.bf16.mxu0 0
  %907 = vmatpush1.bf16.msra.mxu0 0
  %908 = vmatprep.subr.bf16.mxu0 0
  %909 = vmatpush1.bf16.msra.mxu0 0
  %910 = vmatprep.subr.bf16.mxu0 0
  %911 = vmatpush1.bf16.msra.mxu0 0
  %912 = vmatprep.subr.bf16.mxu0 0
  %913 = vmatpush1.bf16.msra.mxu0 0
  %914 = vmatprep.subr.bf16.mxu0 0
  %915 = vmatpush1.bf16.msra.mxu0 0
  %916 = vmatprep.subr.bf16.mxu0 0
  %917 = vmatpush1.bf16.msra.mxu0 0
  %918 = vmatprep.subr.bf16.mxu0 0
  %919 = vmatpush1.bf16.msra.mxu0 0
  %920 = vmatprep.mubr.bf16.mxu0 0
  %921 = vmatmul.mubr.bf16.gmra.mrb[0].mxu0 %v654
  %v922 = vpop.f32.mrb[0].mxu0
  %v923 = vadd.f32 0.0, %v922
  %v924 = vpop.f32.mrb[0].mxu0
  %v925 = vadd.f32 0.0, %v924
  %v926 = vpop.f32.mrb[0].mxu0
  %v927 = vpop.f32.mrb[0].mxu0
  %928 = vdwg.mxu0
  %v929 = vadd.f32 %v650, %v882
  %v930 = vadd.f32 %v651, %v884
  %v931 = vadd.f32 %v652, %v923
  %v932 = vadd.f32 %v653, %v925
  %v933 = vxor.u32 %v929, 2147483648
  %v934 = vmul.f32 %v933, 1.442695
  %v935 = vpow.pop %v934
  %v936 = vadd.f32 %v935, 1.0
  %v937 = vrcp.pop %v936
  %v938 = vmul.f32 1.0, %v937
  %v939 = vxor.u32 %v930, 2147483648
  %v940 = vmul.f32 %v939, 1.442695
  %v941 = vpow.pop %v940
  %v942 = vadd.f32 %v941, 1.0
  %v943 = vrcp.pop %v942
  %v944 = vmul.f32 1.0, %v943
  %v945 = vtanh.pop %v931
  %v946 = vxor.u32 %v932, 2147483648
  %v947 = vmul.f32 %v946, 1.442695
  %v948 = vpow.pop %v947
  %v949 = vadd.f32 %v948, 1.0
  %v950 = vrcp.pop %v949
  %v951 = vmul.f32 1.0, %v950
  %v952 = vmul.f32 %v944, %v644
  %v953 = vmul.f32 %v938, %v945
  %v954 = vadd.f32 %v952, %v953
  %v955 = vtanh.pop %v954
  %v956 = vmul.f32 %v951, %v955
  %s957 = scalar_lea.vmem %s4, 16
  %958 = vst [vmem:[%s957] sm:$0xff] %v956
  %s959 = scalar_lea.vmem %s0, 96
  %v960 = vld [vmem:[%s959] sm:$0xff]
  %v961 = vld [vmem:[%s959 + $0x8] sm:$0xff]
  %v962 = vld [vmem:[%s959 + $0x10] sm:$0xff]
  %v963 = vld [vmem:[%s959 + $0x18] sm:$0xff]
  %v964 = vpack.c.bf16 %v956, %v956
  %v965 = vld [vmem:[%s1] sm:$0xff]
  %v966 = vld [vmem:[%s1 + $0x8] sm:$0xff]
  %v967 = vld [vmem:[%s1 + $0x10] sm:$0xff]
  %v968 = vld [vmem:[%s1 + $0x18] sm:$0xff]
  %v969 = vld [vmem:[%s1 + $0x20] sm:$0xff]
  %v970 = vld [vmem:[%s1 + $0x28] sm:$0xff]
  %v971 = vld [vmem:[%s1 + $0x30] sm:$0xff]
  %v972 = vld [vmem:[%s1 + $0x38] sm:$0xff]
  %v973 = vld [vmem:[%s1 + $0x40] sm:$0xff]
  %v974 = vld [vmem:[%s1 + $0x48] sm:$0xff]
  %v975 = vld [vmem:[%s1 + $0x50] sm:$0xff]
  %v976 = vld [vmem:[%s1 + $0x58] sm:$0xff]
  %v977 = vld [vmem:[%s1 + $0x60] sm:$0xff]
  %v978 = vld [vmem:[%s1 + $0x68] sm:$0xff]
  %v979 = vld [vmem:[%s1 + $0x70] sm:$0xff]
  %v980 = vld [vmem:[%s1 + $0x78] sm:$0xff]
  %v981 = vld [vmem:[%s1 + $0x80] sm:$0xff]
  %v982 = vld [vmem:[%s1 + $0x88] sm:$0xff]
  %v983 = vld [vmem:[%s1 + $0x90] sm:$0xff]
  %v984 = vld [vmem:[%s1 + $0x98] sm:$0xff]
  %v985 = vld [vmem:[%s1 + $0xa0] sm:$0xff]
  %v986 = vld [vmem:[%s1 + $0xa8] sm:$0xff]
  %v987 = vld [vmem:[%s1 + $0xb0] sm:$0xff]
  %v988 = vld [vmem:[%s1 + $0xb8] sm:$0xff]
  %v989 = vld [vmem:[%s1 + $0xc0] sm:$0xff]
  %v990 = vld [vmem:[%s1 + $0xc8] sm:$0xff]
  %v991 = vld [vmem:[%s1 + $0xd0] sm:$0xff]
  %v992 = vld [vmem:[%s1 + $0xd8] sm:$0xff]
  %v993 = vld [vmem:[%s1 + $0xe0] sm:$0xff]
  %v994 = vld [vmem:[%s1 + $0xe8] sm:$0xff]
  %v995 = vld [vmem:[%s1 + $0xf0] sm:$0xff]
  %v996 = vld [vmem:[%s1 + $0xf8] sm:$0xff]
  %v1029 = vunpack.c.l.b16 %v965
  %v1030 = vunpack.c.h.b16 %v965
  %v1031 = vunpack.c.l.b16 %v966
  %v1032 = vunpack.c.h.b16 %v966
  %v1033 = vunpack.c.l.b16 %v967
  %v1034 = vunpack.c.h.b16 %v967
  %v1035 = vunpack.c.l.b16 %v968
  %v1036 = vunpack.c.h.b16 %v968
  %v1037 = vunpack.c.l.b16 %v969
  %v1038 = vunpack.c.h.b16 %v969
  %v1039 = vunpack.c.l.b16 %v970
  %v1040 = vunpack.c.h.b16 %v970
  %v1041 = vunpack.c.l.b16 %v971
  %v1042 = vunpack.c.h.b16 %v971
  %v1043 = vunpack.c.l.b16 %v972
  %v1044 = vunpack.c.h.b16 %v972
  %v1045 = vunpack.c.l.b16 %v973
  %v1046 = vunpack.c.h.b16 %v973
  %v1047 = vunpack.c.l.b16 %v974
  %v1048 = vunpack.c.h.b16 %v974
  %v1049 = vunpack.c.l.b16 %v975
  %v1050 = vunpack.c.h.b16 %v975
  %v1051 = vunpack.c.l.b16 %v976
  %v1052 = vunpack.c.h.b16 %v976
  %v1053 = vunpack.c.l.b16 %v977
  %v1054 = vunpack.c.h.b16 %v977
  %v1055 = vunpack.c.l.b16 %v978
  %v1056 = vunpack.c.h.b16 %v978
  %v1057 = vunpack.c.l.b16 %v979
  %v1058 = vunpack.c.h.b16 %v979
  %v1059 = vunpack.c.l.b16 %v980
  %v1060 = vunpack.c.h.b16 %v980
  %v1061 = vunpack.c.l.b16 %v981
  %v1062 = vunpack.c.h.b16 %v981
  %v1063 = vunpack.c.l.b16 %v982
  %v1064 = vunpack.c.h.b16 %v982
  %v1065 = vunpack.c.l.b16 %v983
  %v1066 = vunpack.c.h.b16 %v983
  %v1067 = vunpack.c.l.b16 %v984
  %v1068 = vunpack.c.h.b16 %v984
  %v1069 = vunpack.c.l.b16 %v985
  %v1070 = vunpack.c.h.b16 %v985
  %v1071 = vunpack.c.l.b16 %v986
  %v1072 = vunpack.c.h.b16 %v986
  %v1073 = vunpack.c.l.b16 %v987
  %v1074 = vunpack.c.h.b16 %v987
  %v1075 = vunpack.c.l.b16 %v988
  %v1076 = vunpack.c.h.b16 %v988
  %v1077 = vunpack.c.l.b16 %v989
  %v1078 = vunpack.c.h.b16 %v989
  %v1079 = vunpack.c.l.b16 %v990
  %v1080 = vunpack.c.h.b16 %v990
  %v1081 = vunpack.c.l.b16 %v991
  %v1082 = vunpack.c.h.b16 %v991
  %v1083 = vunpack.c.l.b16 %v992
  %v1084 = vunpack.c.h.b16 %v992
  %v1085 = vunpack.c.l.b16 %v993
  %v1086 = vunpack.c.h.b16 %v993
  %v1087 = vunpack.c.l.b16 %v994
  %v1088 = vunpack.c.h.b16 %v994
  %v1089 = vunpack.c.l.b16 %v995
  %v1090 = vunpack.c.h.b16 %v995
  %v1091 = vunpack.c.l.b16 %v996
  %v1092 = vunpack.c.h.b16 %v996
  %v1093 = vpack.c.b16 %v1033, %v1029
  %v1094 = vpack.c.b16 %v1034, %v1030
  %v1095 = vpack.c.b16 %v1035, %v1031
  %v1096 = vpack.c.b16 %v1036, %v1032
  %v1097 = vpack.c.b16 %v1041, %v1037
  %v1098 = vpack.c.b16 %v1042, %v1038
  %v1099 = vpack.c.b16 %v1043, %v1039
  %v1100 = vpack.c.b16 %v1044, %v1040
  %v1101 = vpack.c.b16 %v1049, %v1045
  %v1102 = vpack.c.b16 %v1050, %v1046
  %v1103 = vpack.c.b16 %v1051, %v1047
  %v1104 = vpack.c.b16 %v1052, %v1048
  %v1105 = vpack.c.b16 %v1057, %v1053
  %v1106 = vpack.c.b16 %v1058, %v1054
  %v1107 = vpack.c.b16 %v1059, %v1055
  %v1108 = vpack.c.b16 %v1060, %v1056
  %v1109 = vpack.c.b16 %v1065, %v1061
  %v1110 = vpack.c.b16 %v1066, %v1062
  %v1111 = vpack.c.b16 %v1067, %v1063
  %v1112 = vpack.c.b16 %v1068, %v1064
  %v1113 = vpack.c.b16 %v1073, %v1069
  %v1114 = vpack.c.b16 %v1074, %v1070
  %v1115 = vpack.c.b16 %v1075, %v1071
  %v1116 = vpack.c.b16 %v1076, %v1072
  %v1117 = vpack.c.b16 %v1081, %v1077
  %v1118 = vpack.c.b16 %v1082, %v1078
  %v1119 = vpack.c.b16 %v1083, %v1079
  %v1120 = vpack.c.b16 %v1084, %v1080
  %v1121 = vpack.c.b16 %v1089, %v1085
  %v1122 = vpack.c.b16 %v1090, %v1086
  %v1123 = vpack.c.b16 %v1091, %v1087
  %v1124 = vpack.c.b16 %v1092, %v1088
  %1157 = vmatprep.subr.bf16.mxu0 %v1094
  %1158 = vmatpush1.bf16.msra.mxu0 %v1093
  %1159 = vmatprep.subr.bf16.mxu0 %v1098
  %1160 = vmatpush1.bf16.msra.mxu0 %v1097
  %1161 = vmatprep.subr.bf16.mxu0 %v1102
  %1162 = vmatpush1.bf16.msra.mxu0 %v1101
  %1163 = vmatprep.subr.bf16.mxu0 %v1106
  %1164 = vmatpush1.bf16.msra.mxu0 %v1105
  %1165 = vmatprep.subr.bf16.mxu0 %v1110
  %1166 = vmatpush1.bf16.msra.mxu0 %v1109
  %1167 = vmatprep.subr.bf16.mxu0 %v1114
  %1168 = vmatpush1.bf16.msra.mxu0 %v1113
  %1169 = vmatprep.subr.bf16.mxu0 %v1118
  %1170 = vmatpush1.bf16.msra.mxu0 %v1117
  %1171 = vmatprep.subr.bf16.mxu0 %v1122
  %1172 = vmatpush1.bf16.msra.mxu0 %v1121
  %1173 = vmatprep.subr.bf16.mxu0 0
  %1174 = vmatpush1.bf16.msra.mxu0 0
  %1175 = vmatprep.subr.bf16.mxu0 0
  %1176 = vmatpush1.bf16.msra.mxu0 0
  %1177 = vmatprep.subr.bf16.mxu0 0
  %1178 = vmatpush1.bf16.msra.mxu0 0
  %1179 = vmatprep.subr.bf16.mxu0 0
  %1180 = vmatpush1.bf16.msra.mxu0 0
  %1181 = vmatprep.subr.bf16.mxu0 0
  %1182 = vmatpush1.bf16.msra.mxu0 0
  %1183 = vmatprep.subr.bf16.mxu0 0
  %1184 = vmatpush1.bf16.msra.mxu0 0
  %1185 = vmatprep.subr.bf16.mxu0 0
  %1186 = vmatpush1.bf16.msra.mxu0 0
  %1187 = vmatprep.subr.bf16.mxu0 0
  %1188 = vmatpush1.bf16.msra.mxu0 0
  %1189 = vmatprep.mubr.bf16.mxu0 0
  %1190 = vmatmul.mubr.bf16.gmra.mrb[0].mxu0 %v964
  %v1191 = vpop.f32.mrb[0].mxu0
  %v1192 = vadd.f32 0.0, %v1191
  %v1193 = vpop.f32.mrb[0].mxu0
  %v1194 = vadd.f32 0.0, %v1193
  %v1195 = vpop.f32.mrb[0].mxu0
  %v1196 = vpop.f32.mrb[0].mxu0
  %1197 = vdwg.mxu0
  %1198 = vmatprep.subr.bf16.mxu0 %v1096
  %1199 = vmatpush1.bf16.msra.mxu0 %v1095
  %1200 = vmatprep.subr.bf16.mxu0 %v1100
  %1201 = vmatpush1.bf16.msra.mxu0 %v1099
  %1202 = vmatprep.subr.bf16.mxu0 %v1104
  %1203 = vmatpush1.bf16.msra.mxu0 %v1103
  %1204 = vmatprep.subr.bf16.mxu0 %v1108
  %1205 = vmatpush1.bf16.msra.mxu0 %v1107
  %1206 = vmatprep.subr.bf16.mxu0 %v1112
  %1207 = vmatpush1.bf16.msra.mxu0 %v1111
  %1208 = vmatprep.subr.bf16.mxu0 %v1116
  %1209 = vmatpush1.bf16.msra.mxu0 %v1115
  %1210 = vmatprep.subr.bf16.mxu0 %v1120
  %1211 = vmatpush1.bf16.msra.mxu0 %v1119
  %1212 = vmatprep.subr.bf16.mxu0 %v1124
  %1213 = vmatpush1.bf16.msra.mxu0 %v1123
  %1214 = vmatprep.subr.bf16.mxu0 0
  %1215 = vmatpush1.bf16.msra.mxu0 0
  %1216 = vmatprep.subr.bf16.mxu0 0
  %1217 = vmatpush1.bf16.msra.mxu0 0
  %1218 = vmatprep.subr.bf16.mxu0 0
  %1219 = vmatpush1.bf16.msra.mxu0 0
  %1220 = vmatprep.subr.bf16.mxu0 0
  %1221 = vmatpush1.bf16.msra.mxu0 0
  %1222 = vmatprep.subr.bf16.mxu0 0
  %1223 = vmatpush1.bf16.msra.mxu0 0
  %1224 = vmatprep.subr.bf16.mxu0 0
  %1225 = vmatpush1.bf16.msra.mxu0 0
  %1226 = vmatprep.subr.bf16.mxu0 0
  %1227 = vmatpush1.bf16.msra.mxu0 0
  %1228 = vmatprep.subr.bf16.mxu0 0
  %1229 = vmatpush1.bf16.msra.mxu0 0
  %1230 = vmatprep.mubr.bf16.mxu0 0
  %1231 = vmatmul.mubr.bf16.gmra.mrb[0].mxu0 %v964
  %v1232 = vpop.f32.mrb[0].mxu0
  %v1233 = vadd.f32 0.0, %v1232
  %v1234 = vpop.f32.mrb[0].mxu0
  %v1235 = vadd.f32 0.0, %v1234
  %v1236 = vpop.f32.mrb[0].mxu0
  %v1237 = vpop.f32.mrb[0].mxu0
  %1238 = vdwg.mxu0
  %v1239 = vadd.f32 %v960, %v1192
  %v1240 = vadd.f32 %v961, %v1194
  %v1241 = vadd.f32 %v962, %v1233
  %v1242 = vadd.f32 %v963, %v1235
  %v1243 = vxor.u32 %v1239, 2147483648
  %v1244 = vmul.f32 %v1243, 1.442695
  %v1245 = vpow.pop %v1244
  %v1246 = vadd.f32 %v1245, 1.0
  %v1247 = vrcp.pop %v1246
  %v1248 = vmul.f32 1.0, %v1247
  %v1249 = vxor.u32 %v1240, 2147483648
  %v1250 = vmul.f32 %v1249, 1.442695
  %v1251 = vpow.pop %v1250
  %v1252 = vadd.f32 %v1251, 1.0
  %v1253 = vrcp.pop %v1252
  %v1254 = vmul.f32 1.0, %v1253
  %v1255 = vtanh.pop %v1241
  %v1256 = vxor.u32 %v1242, 2147483648
  %v1257 = vmul.f32 %v1256, 1.442695
  %v1258 = vpow.pop %v1257
  %v1259 = vadd.f32 %v1258, 1.0
  %v1260 = vrcp.pop %v1259
  %v1261 = vmul.f32 1.0, %v1260
  %v1262 = vmul.f32 %v1254, %v954
  %v1263 = vmul.f32 %v1248, %v1255
  %v1264 = vadd.f32 %v1262, %v1263
  %v1265 = vtanh.pop %v1264
  %v1266 = vmul.f32 %v1261, %v1265
  %s1267 = scalar_lea.vmem %s4, 24
  %1268 = vst [vmem:[%s1267] sm:$0xff] %v1266
  %s1269 = scalar_lea.vmem %s0, 128
  %v1270 = vld [vmem:[%s1269] sm:$0xff]
  %v1271 = vld [vmem:[%s1269 + $0x8] sm:$0xff]
  %v1272 = vld [vmem:[%s1269 + $0x10] sm:$0xff]
  %v1273 = vld [vmem:[%s1269 + $0x18] sm:$0xff]
  %v1274 = vpack.c.bf16 %v1266, %v1266
  %v1275 = vld [vmem:[%s1] sm:$0xff]
  %v1276 = vld [vmem:[%s1 + $0x8] sm:$0xff]
  %v1277 = vld [vmem:[%s1 + $0x10] sm:$0xff]
  %v1278 = vld [vmem:[%s1 + $0x18] sm:$0xff]
  %v1279 = vld [vmem:[%s1 + $0x20] sm:$0xff]
  %v1280 = vld [vmem:[%s1 + $0x28] sm:$0xff]
  %v1281 = vld [vmem:[%s1 + $0x30] sm:$0xff]
  %v1282 = vld [vmem:[%s1 + $0x38] sm:$0xff]
  %v1283 = vld [vmem:[%s1 + $0x40] sm:$0xff]
  %v1284 = vld [vmem:[%s1 + $0x48] sm:$0xff]
  %v1285 = vld [vmem:[%s1 + $0x50] sm:$0xff]
  %v1286 = vld [vmem:[%s1 + $0x58] sm:$0xff]
  %v1287 = vld [vmem:[%s1 + $0x60] sm:$0xff]
  %v1288 = vld [vmem:[%s1 + $0x68] sm:$0xff]
  %v1289 = vld [vmem:[%s1 + $0x70] sm:$0xff]
  %v1290 = vld [vmem:[%s1 + $0x78] sm:$0xff]
  %v1291 = vld [vmem:[%s1 + $0x80] sm:$0xff]
  %v1292 = vld [vmem:[%s1 + $0x88] sm:$0xff]
  %v1293 = vld [vmem:[%s1 + $0x90] sm:$0xff]
  %v1294 = vld [vmem:[%s1 + $0x98] sm:$0xff]
  %v1295 = vld [vmem:[%s1 + $0xa0] sm:$0xff]
  %v1296 = vld [vmem:[%s1 + $0xa8] sm:$0xff]
  %v1297 = vld [vmem:[%s1 + $0xb0] sm:$0xff]
  %v1298 = vld [vmem:[%s1 + $0xb8] sm:$0xff]
  %v1299 = vld [vmem:[%s1 + $0xc0] sm:$0xff]
  %v1300 = vld [vmem:[%s1 + $0xc8] sm:$0xff]
  %v1301 = vld [vmem:[%s1 + $0xd0] sm:$0xff]
  %v1302 = vld [vmem:[%s1 + $0xd8] sm:$0xff]
  %v1303 = vld [vmem:[%s1 + $0xe0] sm:$0xff]
  %v1304 = vld [vmem:[%s1 + $0xe8] sm:$0xff]
  %v1305 = vld [vmem:[%s1 + $0xf0] sm:$0xff]
  %v1306 = vld [vmem:[%s1 + $0xf8] sm:$0xff]
  %v1339 = vunpack.c.l.b16 %v1275
  %v1340 = vunpack.c.h.b16 %v1275
  %v1341 = vunpack.c.l.b16 %v1276
  %v1342 = vunpack.c.h.b16 %v1276
  %v1343 = vunpack.c.l.b16 %v1277
  %v1344 = vunpack.c.h.b16 %v1277
  %v1345 = vunpack.c.l.b16 %v1278
  %v1346 = vunpack.c.h.b16 %v1278
  %v1347 = vunpack.c.l.b16 %v1279
  %v1348 = vunpack.c.h.b16 %v1279
  %v1349 = vunpack.c.l.b16 %v1280
  %v1350 = vunpack.c.h.b16 %v1280
  %v1351 = vunpack.c.l.b16 %v1281
  %v1352 = vunpack.c.h.b16 %v1281
  %v1353 = vunpack.c.l.b16 %v1282
  %v1354 = vunpack.c.h.b16 %v1282
  %v1355 = vunpack.c.l.b16 %v1283
  %v1356 = vunpack.c.h.b16 %v1283
  %v1357 = vunpack.c.l.b16 %v1284
  %v1358 = vunpack.c.h.b16 %v1284
  %v1359 = vunpack.c.l.b16 %v1285
  %v1360 = vunpack.c.h.b16 %v1285
  %v1361 = vunpack.c.l.b16 %v1286
  %v1362 = vunpack.c.h.b16 %v1286
  %v1363 = vunpack.c.l.b16 %v1287
  %v1364 = vunpack.c.h.b16 %v1287
  %v1365 = vunpack.c.l.b16 %v1288
  %v1366 = vunpack.c.h.b16 %v1288
  %v1367 = vunpack.c.l.b16 %v1289
  %v1368 = vunpack.c.h.b16 %v1289
  %v1369 = vunpack.c.l.b16 %v1290
  %v1370 = vunpack.c.h.b16 %v1290
  %v1371 = vunpack.c.l.b16 %v1291
  %v1372 = vunpack.c.h.b16 %v1291
  %v1373 = vunpack.c.l.b16 %v1292
  %v1374 = vunpack.c.h.b16 %v1292
  %v1375 = vunpack.c.l.b16 %v1293
  %v1376 = vunpack.c.h.b16 %v1293
  %v1377 = vunpack.c.l.b16 %v1294
  %v1378 = vunpack.c.h.b16 %v1294
  %v1379 = vunpack.c.l.b16 %v1295
  %v1380 = vunpack.c.h.b16 %v1295
  %v1381 = vunpack.c.l.b16 %v1296
  %v1382 = vunpack.c.h.b16 %v1296
  %v1383 = vunpack.c.l.b16 %v1297
  %v1384 = vunpack.c.h.b16 %v1297
  %v1385 = vunpack.c.l.b16 %v1298
  %v1386 = vunpack.c.h.b16 %v1298
  %v1387 = vunpack.c.l.b16 %v1299
  %v1388 = vunpack.c.h.b16 %v1299
  %v1389 = vunpack.c.l.b16 %v1300
  %v1390 = vunpack.c.h.b16 %v1300
  %v1391 = vunpack.c.l.b16 %v1301
  %v1392 = vunpack.c.h.b16 %v1301
  %v1393 = vunpack.c.l.b16 %v1302
  %v1394 = vunpack.c.h.b16 %v1302
  %v1395 = vunpack.c.l.b16 %v1303
  %v1396 = vunpack.c.h.b16 %v1303
  %v1397 = vunpack.c.l.b16 %v1304
  %v1398 = vunpack.c.h.b16 %v1304
  %v1399 = vunpack.c.l.b16 %v1305
  %v1400 = vunpack.c.h.b16 %v1305
  %v1401 = vunpack.c.l.b16 %v1306
  %v1402 = vunpack.c.h.b16 %v1306
  %v1403 = vpack.c.b16 %v1343, %v1339
  %v1404 = vpack.c.b16 %v1344, %v1340
  %v1405 = vpack.c.b16 %v1345, %v1341
  %v1406 = vpack.c.b16 %v1346, %v1342
  %v1407 = vpack.c.b16 %v1351, %v1347
  %v1408 = vpack.c.b16 %v1352, %v1348
  %v1409 = vpack.c.b16 %v1353, %v1349
  %v1410 = vpack.c.b16 %v1354, %v1350
  %v1411 = vpack.c.b16 %v1359, %v1355
  %v1412 = vpack.c.b16 %v1360, %v1356
  %v1413 = vpack.c.b16 %v1361, %v1357
  %v1414 = vpack.c.b16 %v1362, %v1358
  %v1415 = vpack.c.b16 %v1367, %v1363
  %v1416 = vpack.c.b16 %v1368, %v1364
  %v1417 = vpack.c.b16 %v1369, %v1365
  %v1418 = vpack.c.b16 %v1370, %v1366
  %v1419 = vpack.c.b16 %v1375, %v1371
  %v1420 = vpack.c.b16 %v1376, %v1372
  %v1421 = vpack.c.b16 %v1377, %v1373
  %v1422 = vpack.c.b16 %v1378, %v1374
  %v1423 = vpack.c.b16 %v1383, %v1379
  %v1424 = vpack.c.b16 %v1384, %v1380
  %v1425 = vpack.c.b16 %v1385, %v1381
  %v1426 = vpack.c.b16 %v1386, %v1382
  %v1427 = vpack.c.b16 %v1391, %v1387
  %v1428 = vpack.c.b16 %v1392, %v1388
  %v1429 = vpack.c.b16 %v1393, %v1389
  %v1430 = vpack.c.b16 %v1394, %v1390
  %v1431 = vpack.c.b16 %v1399, %v1395
  %v1432 = vpack.c.b16 %v1400, %v1396
  %v1433 = vpack.c.b16 %v1401, %v1397
  %v1434 = vpack.c.b16 %v1402, %v1398
  %1467 = vmatprep.subr.bf16.mxu0 %v1404
  %1468 = vmatpush1.bf16.msra.mxu0 %v1403
  %1469 = vmatprep.subr.bf16.mxu0 %v1408
  %1470 = vmatpush1.bf16.msra.mxu0 %v1407
  %1471 = vmatprep.subr.bf16.mxu0 %v1412
  %1472 = vmatpush1.bf16.msra.mxu0 %v1411
  %1473 = vmatprep.subr.bf16.mxu0 %v1416
  %1474 = vmatpush1.bf16.msra.mxu0 %v1415
  %1475 = vmatprep.subr.bf16.mxu0 %v1420
  %1476 = vmatpush1.bf16.msra.mxu0 %v1419
  %1477 = vmatprep.subr.bf16.mxu0 %v1424
  %1478 = vmatpush1.bf16.msra.mxu0 %v1423
  %1479 = vmatprep.subr.bf16.mxu0 %v1428
  %1480 = vmatpush1.bf16.msra.mxu0 %v1427
  %1481 = vmatprep.subr.bf16.mxu0 %v1432
  %1482 = vmatpush1.bf16.msra.mxu0 %v1431
  %1483 = vmatprep.subr.bf16.mxu0 0
  %1484 = vmatpush1.bf16.msra.mxu0 0
  %1485 = vmatprep.subr.bf16.mxu0 0
  %1486 = vmatpush1.bf16.msra.mxu0 0
  %1487 = vmatprep.subr.bf16.mxu0 0
  %1488 = vmatpush1.bf16.msra.mxu0 0
  %1489 = vmatprep.subr.bf16.mxu0 0
  %1490 = vmatpush1.bf16.msra.mxu0 0
  %1491 = vmatprep.subr.bf16.mxu0 0
  %1492 = vmatpush1.bf16.msra.mxu0 0
  %1493 = vmatprep.subr.bf16.mxu0 0
  %1494 = vmatpush1.bf16.msra.mxu0 0
  %1495 = vmatprep.subr.bf16.mxu0 0
  %1496 = vmatpush1.bf16.msra.mxu0 0
  %1497 = vmatprep.subr.bf16.mxu0 0
  %1498 = vmatpush1.bf16.msra.mxu0 0
  %1499 = vmatprep.mubr.bf16.mxu0 0
  %1500 = vmatmul.mubr.bf16.gmra.mrb[0].mxu0 %v1274
  %v1501 = vpop.f32.mrb[0].mxu0
  %v1502 = vadd.f32 0.0, %v1501
  %v1503 = vpop.f32.mrb[0].mxu0
  %v1504 = vadd.f32 0.0, %v1503
  %v1505 = vpop.f32.mrb[0].mxu0
  %v1506 = vpop.f32.mrb[0].mxu0
  %1507 = vdwg.mxu0
  %1508 = vmatprep.subr.bf16.mxu0 %v1406
  %1509 = vmatpush1.bf16.msra.mxu0 %v1405
  %1510 = vmatprep.subr.bf16.mxu0 %v1410
  %1511 = vmatpush1.bf16.msra.mxu0 %v1409
  %1512 = vmatprep.subr.bf16.mxu0 %v1414
  %1513 = vmatpush1.bf16.msra.mxu0 %v1413
  %1514 = vmatprep.subr.bf16.mxu0 %v1418
  %1515 = vmatpush1.bf16.msra.mxu0 %v1417
  %1516 = vmatprep.subr.bf16.mxu0 %v1422
  %1517 = vmatpush1.bf16.msra.mxu0 %v1421
  %1518 = vmatprep.subr.bf16.mxu0 %v1426
  %1519 = vmatpush1.bf16.msra.mxu0 %v1425
  %1520 = vmatprep.subr.bf16.mxu0 %v1430
  %1521 = vmatpush1.bf16.msra.mxu0 %v1429
  %1522 = vmatprep.subr.bf16.mxu0 %v1434
  %1523 = vmatpush1.bf16.msra.mxu0 %v1433
  %1524 = vmatprep.subr.bf16.mxu0 0
  %1525 = vmatpush1.bf16.msra.mxu0 0
  %1526 = vmatprep.subr.bf16.mxu0 0
  %1527 = vmatpush1.bf16.msra.mxu0 0
  %1528 = vmatprep.subr.bf16.mxu0 0
  %1529 = vmatpush1.bf16.msra.mxu0 0
  %1530 = vmatprep.subr.bf16.mxu0 0
  %1531 = vmatpush1.bf16.msra.mxu0 0
  %1532 = vmatprep.subr.bf16.mxu0 0
  %1533 = vmatpush1.bf16.msra.mxu0 0
  %1534 = vmatprep.subr.bf16.mxu0 0
  %1535 = vmatpush1.bf16.msra.mxu0 0
  %1536 = vmatprep.subr.bf16.mxu0 0
  %1537 = vmatpush1.bf16.msra.mxu0 0
  %1538 = vmatprep.subr.bf16.mxu0 0
  %1539 = vmatpush1.bf16.msra.mxu0 0
  %1540 = vmatprep.mubr.bf16.mxu0 0
  %1541 = vmatmul.mubr.bf16.gmra.mrb[0].mxu0 %v1274
  %v1542 = vpop.f32.mrb[0].mxu0
  %v1543 = vadd.f32 0.0, %v1542
  %v1544 = vpop.f32.mrb[0].mxu0
  %v1545 = vadd.f32 0.0, %v1544
  %v1546 = vpop.f32.mrb[0].mxu0
  %v1547 = vpop.f32.mrb[0].mxu0
  %1548 = vdwg.mxu0
  %v1549 = vadd.f32 %v1270, %v1502
  %v1550 = vadd.f32 %v1271, %v1504
  %v1551 = vadd.f32 %v1272, %v1543
  %v1552 = vadd.f32 %v1273, %v1545
  %v1553 = vxor.u32 %v1549, 2147483648
  %v1554 = vmul.f32 %v1553, 1.442695
  %v1555 = vpow.pop %v1554
  %v1556 = vadd.f32 %v1555, 1.0
  %v1557 = vrcp.pop %v1556
  %v1558 = vmul.f32 1.0, %v1557
  %v1559 = vxor.u32 %v1550, 2147483648
  %v1560 = vmul.f32 %v1559, 1.442695
  %v1561 = vpow.pop %v1560
  %v1562 = vadd.f32 %v1561, 1.0
  %v1563 = vrcp.pop %v1562
  %v1564 = vmul.f32 1.0, %v1563
  %v1565 = vtanh.pop %v1551
  %v1566 = vxor.u32 %v1552, 2147483648
  %v1567 = vmul.f32 %v1566, 1.442695
  %v1568 = vpow.pop %v1567
  %v1569 = vadd.f32 %v1568, 1.0
  %v1570 = vrcp.pop %v1569
  %v1571 = vmul.f32 1.0, %v1570
  %v1572 = vmul.f32 %v1564, %v1264
  %v1573 = vmul.f32 %v1558, %v1565
  %v1574 = vadd.f32 %v1572, %v1573
  %v1575 = vtanh.pop %v1574
  %v1576 = vmul.f32 %v1571, %v1575
  %s1577 = scalar_lea.vmem %s4, 32
  %1578 = vst [vmem:[%s1577] sm:$0xff] %v1576
  %s1579 = scalar_lea.vmem %s0, 160
  %v1580 = vld [vmem:[%s1579] sm:$0xff]
  %v1581 = vld [vmem:[%s1579 + $0x8] sm:$0xff]
  %v1582 = vld [vmem:[%s1579 + $0x10] sm:$0xff]
  %v1583 = vld [vmem:[%s1579 + $0x18] sm:$0xff]
  %v1584 = vpack.c.bf16 %v1576, %v1576
  %v1585 = vld [vmem:[%s1] sm:$0xff]
  %v1586 = vld [vmem:[%s1 + $0x8] sm:$0xff]
  %v1587 = vld [vmem:[%s1 + $0x10] sm:$0xff]
  %v1588 = vld [vmem:[%s1 + $0x18] sm:$0xff]
  %v1589 = vld [vmem:[%s1 + $0x20] sm:$0xff]
  %v1590 = vld [vmem:[%s1 + $0x28] sm:$0xff]
  %v1591 = vld [vmem:[%s1 + $0x30] sm:$0xff]
  %v1592 = vld [vmem:[%s1 + $0x38] sm:$0xff]
  %v1593 = vld [vmem:[%s1 + $0x40] sm:$0xff]
  %v1594 = vld [vmem:[%s1 + $0x48] sm:$0xff]
  %v1595 = vld [vmem:[%s1 + $0x50] sm:$0xff]
  %v1596 = vld [vmem:[%s1 + $0x58] sm:$0xff]
  %v1597 = vld [vmem:[%s1 + $0x60] sm:$0xff]
  %v1598 = vld [vmem:[%s1 + $0x68] sm:$0xff]
  %v1599 = vld [vmem:[%s1 + $0x70] sm:$0xff]
  %v1600 = vld [vmem:[%s1 + $0x78] sm:$0xff]
  %v1601 = vld [vmem:[%s1 + $0x80] sm:$0xff]
  %v1602 = vld [vmem:[%s1 + $0x88] sm:$0xff]
  %v1603 = vld [vmem:[%s1 + $0x90] sm:$0xff]
  %v1604 = vld [vmem:[%s1 + $0x98] sm:$0xff]
  %v1605 = vld [vmem:[%s1 + $0xa0] sm:$0xff]
  %v1606 = vld [vmem:[%s1 + $0xa8] sm:$0xff]
  %v1607 = vld [vmem:[%s1 + $0xb0] sm:$0xff]
  %v1608 = vld [vmem:[%s1 + $0xb8] sm:$0xff]
  %v1609 = vld [vmem:[%s1 + $0xc0] sm:$0xff]
  %v1610 = vld [vmem:[%s1 + $0xc8] sm:$0xff]
  %v1611 = vld [vmem:[%s1 + $0xd0] sm:$0xff]
  %v1612 = vld [vmem:[%s1 + $0xd8] sm:$0xff]
  %v1613 = vld [vmem:[%s1 + $0xe0] sm:$0xff]
  %v1614 = vld [vmem:[%s1 + $0xe8] sm:$0xff]
  %v1615 = vld [vmem:[%s1 + $0xf0] sm:$0xff]
  %v1616 = vld [vmem:[%s1 + $0xf8] sm:$0xff]
  %v1649 = vunpack.c.l.b16 %v1585
  %v1650 = vunpack.c.h.b16 %v1585
  %v1651 = vunpack.c.l.b16 %v1586
  %v1652 = vunpack.c.h.b16 %v1586
  %v1653 = vunpack.c.l.b16 %v1587
  %v1654 = vunpack.c.h.b16 %v1587
  %v1655 = vunpack.c.l.b16 %v1588
  %v1656 = vunpack.c.h.b16 %v1588
  %v1657 = vunpack.c.l.b16 %v1589
  %v1658 = vunpack.c.h.b16 %v1589
  %v1659 = vunpack.c.l.b16 %v1590
  %v1660 = vunpack.c.h.b16 %v1590
  %v1661 = vunpack.c.l.b16 %v1591
  %v1662 = vunpack.c.h.b16 %v1591
  %v1663 = vunpack.c.l.b16 %v1592
  %v1664 = vunpack.c.h.b16 %v1592
  %v1665 = vunpack.c.l.b16 %v1593
  %v1666 = vunpack.c.h.b16 %v1593
  %v1667 = vunpack.c.l.b16 %v1594
  %v1668 = vunpack.c.h.b16 %v1594
  %v1669 = vunpack.c.l.b16 %v1595
  %v1670 = vunpack.c.h.b16 %v1595
  %v1671 = vunpack.c.l.b16 %v1596
  %v1672 = vunpack.c.h.b16 %v1596
  %v1673 = vunpack.c.l.b16 %v1597
  %v1674 = vunpack.c.h.b16 %v1597
  %v1675 = vunpack.c.l.b16 %v1598
  %v1676 = vunpack.c.h.b16 %v1598
  %v1677 = vunpack.c.l.b16 %v1599
  %v1678 = vunpack.c.h.b16 %v1599
  %v1679 = vunpack.c.l.b16 %v1600
  %v1680 = vunpack.c.h.b16 %v1600
  %v1681 = vunpack.c.l.b16 %v1601
  %v1682 = vunpack.c.h.b16 %v1601
  %v1683 = vunpack.c.l.b16 %v1602
  %v1684 = vunpack.c.h.b16 %v1602
  %v1685 = vunpack.c.l.b16 %v1603
  %v1686 = vunpack.c.h.b16 %v1603
  %v1687 = vunpack.c.l.b16 %v1604
  %v1688 = vunpack.c.h.b16 %v1604
  %v1689 = vunpack.c.l.b16 %v1605
  %v1690 = vunpack.c.h.b16 %v1605
  %v1691 = vunpack.c.l.b16 %v1606
  %v1692 = vunpack.c.h.b16 %v1606
  %v1693 = vunpack.c.l.b16 %v1607
  %v1694 = vunpack.c.h.b16 %v1607
  %v1695 = vunpack.c.l.b16 %v1608
  %v1696 = vunpack.c.h.b16 %v1608
  %v1697 = vunpack.c.l.b16 %v1609
  %v1698 = vunpack.c.h.b16 %v1609
  %v1699 = vunpack.c.l.b16 %v1610
  %v1700 = vunpack.c.h.b16 %v1610
  %v1701 = vunpack.c.l.b16 %v1611
  %v1702 = vunpack.c.h.b16 %v1611
  %v1703 = vunpack.c.l.b16 %v1612
  %v1704 = vunpack.c.h.b16 %v1612
  %v1705 = vunpack.c.l.b16 %v1613
  %v1706 = vunpack.c.h.b16 %v1613
  %v1707 = vunpack.c.l.b16 %v1614
  %v1708 = vunpack.c.h.b16 %v1614
  %v1709 = vunpack.c.l.b16 %v1615
  %v1710 = vunpack.c.h.b16 %v1615
  %v1711 = vunpack.c.l.b16 %v1616
  %v1712 = vunpack.c.h.b16 %v1616
  %v1713 = vpack.c.b16 %v1653, %v1649
  %v1714 = vpack.c.b16 %v1654, %v1650
  %v1715 = vpack.c.b16 %v1655, %v1651
  %v1716 = vpack.c.b16 %v1656, %v1652
  %v1717 = vpack.c.b16 %v1661, %v1657
  %v1718 = vpack.c.b16 %v1662, %v1658
  %v1719 = vpack.c.b16 %v1663, %v1659
  %v1720 = vpack.c.b16 %v1664, %v1660
  %v1721 = vpack.c.b16 %v1669, %v1665
  %v1722 = vpack.c.b16 %v1670, %v1666
  %v1723 = vpack.c.b16 %v1671, %v1667
  %v1724 = vpack.c.b16 %v1672, %v1668
  %v1725 = vpack.c.b16 %v1677, %v1673
  %v1726 = vpack.c.b16 %v1678, %v1674
  %v1727 = vpack.c.b16 %v1679, %v1675
  %v1728 = vpack.c.b16 %v1680, %v1676
  %v1729 = vpack.c.b16 %v1685, %v1681
  %v1730 = vpack.c.b16 %v1686, %v1682
  %v1731 = vpack.c.b16 %v1687, %v1683
  %v1732 = vpack.c.b16 %v1688, %v1684
  %v1733 = vpack.c.b16 %v1693, %v1689
  %v1734 = vpack.c.b16 %v1694, %v1690
  %v1735 = vpack.c.b16 %v1695, %v1691
  %v1736 = vpack.c.b16 %v1696, %v1692
  %v1737 = vpack.c.b16 %v1701, %v1697
  %v1738 = vpack.c.b16 %v1702, %v1698
  %v1739 = vpack.c.b16 %v1703, %v1699
  %v1740 = vpack.c.b16 %v1704, %v1700
  %v1741 = vpack.c.b16 %v1709, %v1705
  %v1742 = vpack.c.b16 %v1710, %v1706
  %v1743 = vpack.c.b16 %v1711, %v1707
  %v1744 = vpack.c.b16 %v1712, %v1708
  %1777 = vmatprep.subr.bf16.mxu0 %v1714
  %1778 = vmatpush1.bf16.msra.mxu0 %v1713
  %1779 = vmatprep.subr.bf16.mxu0 %v1718
  %1780 = vmatpush1.bf16.msra.mxu0 %v1717
  %1781 = vmatprep.subr.bf16.mxu0 %v1722
  %1782 = vmatpush1.bf16.msra.mxu0 %v1721
  %1783 = vmatprep.subr.bf16.mxu0 %v1726
  %1784 = vmatpush1.bf16.msra.mxu0 %v1725
  %1785 = vmatprep.subr.bf16.mxu0 %v1730
  %1786 = vmatpush1.bf16.msra.mxu0 %v1729
  %1787 = vmatprep.subr.bf16.mxu0 %v1734
  %1788 = vmatpush1.bf16.msra.mxu0 %v1733
  %1789 = vmatprep.subr.bf16.mxu0 %v1738
  %1790 = vmatpush1.bf16.msra.mxu0 %v1737
  %1791 = vmatprep.subr.bf16.mxu0 %v1742
  %1792 = vmatpush1.bf16.msra.mxu0 %v1741
  %1793 = vmatprep.subr.bf16.mxu0 0
  %1794 = vmatpush1.bf16.msra.mxu0 0
  %1795 = vmatprep.subr.bf16.mxu0 0
  %1796 = vmatpush1.bf16.msra.mxu0 0
  %1797 = vmatprep.subr.bf16.mxu0 0
  %1798 = vmatpush1.bf16.msra.mxu0 0
  %1799 = vmatprep.subr.bf16.mxu0 0
  %1800 = vmatpush1.bf16.msra.mxu0 0
  %1801 = vmatprep.subr.bf16.mxu0 0
  %1802 = vmatpush1.bf16.msra.mxu0 0
  %1803 = vmatprep.subr.bf16.mxu0 0
  %1804 = vmatpush1.bf16.msra.mxu0 0
  %1805 = vmatprep.subr.bf16.mxu0 0
  %1806 = vmatpush1.bf16.msra.mxu0 0
  %1807 = vmatprep.subr.bf16.mxu0 0
  %1808 = vmatpush1.bf16.msra.mxu0 0
  %1809 = vmatprep.mubr.bf16.mxu0 0
  %1810 = vmatmul.mubr.bf16.gmra.mrb[0].mxu0 %v1584
  %v1811 = vpop.f32.mrb[0].mxu0
  %v1812 = vadd.f32 0.0, %v1811
  %v1813 = vpop.f32.mrb[0].mxu0
  %v1814 = vadd.f32 0.0, %v1813
  %v1815 = vpop.f32.mrb[0].mxu0
  %v1816 = vpop.f32.mrb[0].mxu0
  %1817 = vdwg.mxu0
  %1818 = vmatprep.subr.bf16.mxu0 %v1716
  %1819 = vmatpush1.bf16.msra.mxu0 %v1715
  %1820 = vmatprep.subr.bf16.mxu0 %v1720
  %1821 = vmatpush1.bf16.msra.mxu0 %v1719
  %1822 = vmatprep.subr.bf16.mxu0 %v1724
  %1823 = vmatpush1.bf16.msra.mxu0 %v1723
  %1824 = vmatprep.subr.bf16.mxu0 %v1728
  %1825 = vmatpush1.bf16.msra.mxu0 %v1727
  %1826 = vmatprep.subr.bf16.mxu0 %v1732
  %1827 = vmatpush1.bf16.msra.mxu0 %v1731
  %1828 = vmatprep.subr.bf16.mxu0 %v1736
  %1829 = vmatpush1.bf16.msra.mxu0 %v1735
  %1830 = vmatprep.subr.bf16.mxu0 %v1740
  %1831 = vmatpush1.bf16.msra.mxu0 %v1739
  %1832 = vmatprep.subr.bf16.mxu0 %v1744
  %1833 = vmatpush1.bf16.msra.mxu0 %v1743
  %1834 = vmatprep.subr.bf16.mxu0 0
  %1835 = vmatpush1.bf16.msra.mxu0 0
  %1836 = vmatprep.subr.bf16.mxu0 0
  %1837 = vmatpush1.bf16.msra.mxu0 0
  %1838 = vmatprep.subr.bf16.mxu0 0
  %1839 = vmatpush1.bf16.msra.mxu0 0
  %1840 = vmatprep.subr.bf16.mxu0 0
  %1841 = vmatpush1.bf16.msra.mxu0 0
  %1842 = vmatprep.subr.bf16.mxu0 0
  %1843 = vmatpush1.bf16.msra.mxu0 0
  %1844 = vmatprep.subr.bf16.mxu0 0
  %1845 = vmatpush1.bf16.msra.mxu0 0
  %1846 = vmatprep.subr.bf16.mxu0 0
  %1847 = vmatpush1.bf16.msra.mxu0 0
  %1848 = vmatprep.subr.bf16.mxu0 0
  %1849 = vmatpush1.bf16.msra.mxu0 0
  %1850 = vmatprep.mubr.bf16.mxu0 0
  %1851 = vmatmul.mubr.bf16.gmra.mrb[0].mxu0 %v1584
  %v1852 = vpop.f32.mrb[0].mxu0
  %v1853 = vadd.f32 0.0, %v1852
  %v1854 = vpop.f32.mrb[0].mxu0
  %v1855 = vadd.f32 0.0, %v1854
  %v1856 = vpop.f32.mrb[0].mxu0
  %v1857 = vpop.f32.mrb[0].mxu0
  %1858 = vdwg.mxu0
  %v1859 = vadd.f32 %v1580, %v1812
  %v1860 = vadd.f32 %v1581, %v1814
  %v1861 = vadd.f32 %v1582, %v1853
  %v1862 = vadd.f32 %v1583, %v1855
  %v1863 = vxor.u32 %v1859, 2147483648
  %v1864 = vmul.f32 %v1863, 1.442695
  %v1865 = vpow.pop %v1864
  %v1866 = vadd.f32 %v1865, 1.0
  %v1867 = vrcp.pop %v1866
  %v1868 = vmul.f32 1.0, %v1867
  %v1869 = vxor.u32 %v1860, 2147483648
  %v1870 = vmul.f32 %v1869, 1.442695
  %v1871 = vpow.pop %v1870
  %v1872 = vadd.f32 %v1871, 1.0
  %v1873 = vrcp.pop %v1872
  %v1874 = vmul.f32 1.0, %v1873
  %v1875 = vtanh.pop %v1861
  %v1876 = vxor.u32 %v1862, 2147483648
  %v1877 = vmul.f32 %v1876, 1.442695
  %v1878 = vpow.pop %v1877
  %v1879 = vadd.f32 %v1878, 1.0
  %v1880 = vrcp.pop %v1879
  %v1881 = vmul.f32 1.0, %v1880
  %v1882 = vmul.f32 %v1874, %v1574
  %v1883 = vmul.f32 %v1868, %v1875
  %v1884 = vadd.f32 %v1882, %v1883
  %v1885 = vtanh.pop %v1884
  %v1886 = vmul.f32 %v1881, %v1885
  %s1887 = scalar_lea.vmem %s4, 40
  %1888 = vst [vmem:[%s1887] sm:$0xff] %v1886
  %s1889 = scalar_lea.vmem %s0, 192
  %v1890 = vld [vmem:[%s1889] sm:$0xff]
  %v1891 = vld [vmem:[%s1889 + $0x8] sm:$0xff]
  %v1892 = vld [vmem:[%s1889 + $0x10] sm:$0xff]
  %v1893 = vld [vmem:[%s1889 + $0x18] sm:$0xff]
  %v1894 = vpack.c.bf16 %v1886, %v1886
  %v1895 = vld [vmem:[%s1] sm:$0xff]
  %v1896 = vld [vmem:[%s1 + $0x8] sm:$0xff]
  %v1897 = vld [vmem:[%s1 + $0x10] sm:$0xff]
  %v1898 = vld [vmem:[%s1 + $0x18] sm:$0xff]
  %v1899 = vld [vmem:[%s1 + $0x20] sm:$0xff]
  %v1900 = vld [vmem:[%s1 + $0x28] sm:$0xff]
  %v1901 = vld [vmem:[%s1 + $0x30] sm:$0xff]
  %v1902 = vld [vmem:[%s1 + $0x38] sm:$0xff]
  %v1903 = vld [vmem:[%s1 + $0x40] sm:$0xff]
  %v1904 = vld [vmem:[%s1 + $0x48] sm:$0xff]
  %v1905 = vld [vmem:[%s1 + $0x50] sm:$0xff]
  %v1906 = vld [vmem:[%s1 + $0x58] sm:$0xff]
  %v1907 = vld [vmem:[%s1 + $0x60] sm:$0xff]
  %v1908 = vld [vmem:[%s1 + $0x68] sm:$0xff]
  %v1909 = vld [vmem:[%s1 + $0x70] sm:$0xff]
  %v1910 = vld [vmem:[%s1 + $0x78] sm:$0xff]
  %v1911 = vld [vmem:[%s1 + $0x80] sm:$0xff]
  %v1912 = vld [vmem:[%s1 + $0x88] sm:$0xff]
  %v1913 = vld [vmem:[%s1 + $0x90] sm:$0xff]
  %v1914 = vld [vmem:[%s1 + $0x98] sm:$0xff]
  %v1915 = vld [vmem:[%s1 + $0xa0] sm:$0xff]
  %v1916 = vld [vmem:[%s1 + $0xa8] sm:$0xff]
  %v1917 = vld [vmem:[%s1 + $0xb0] sm:$0xff]
  %v1918 = vld [vmem:[%s1 + $0xb8] sm:$0xff]
  %v1919 = vld [vmem:[%s1 + $0xc0] sm:$0xff]
  %v1920 = vld [vmem:[%s1 + $0xc8] sm:$0xff]
  %v1921 = vld [vmem:[%s1 + $0xd0] sm:$0xff]
  %v1922 = vld [vmem:[%s1 + $0xd8] sm:$0xff]
  %v1923 = vld [vmem:[%s1 + $0xe0] sm:$0xff]
  %v1924 = vld [vmem:[%s1 + $0xe8] sm:$0xff]
  %v1925 = vld [vmem:[%s1 + $0xf0] sm:$0xff]
  %v1926 = vld [vmem:[%s1 + $0xf8] sm:$0xff]
  %v1959 = vunpack.c.l.b16 %v1895
  %v1960 = vunpack.c.h.b16 %v1895
  %v1961 = vunpack.c.l.b16 %v1896
  %v1962 = vunpack.c.h.b16 %v1896
  %v1963 = vunpack.c.l.b16 %v1897
  %v1964 = vunpack.c.h.b16 %v1897
  %v1965 = vunpack.c.l.b16 %v1898
  %v1966 = vunpack.c.h.b16 %v1898
  %v1967 = vunpack.c.l.b16 %v1899
  %v1968 = vunpack.c.h.b16 %v1899
  %v1969 = vunpack.c.l.b16 %v1900
  %v1970 = vunpack.c.h.b16 %v1900
  %v1971 = vunpack.c.l.b16 %v1901
  %v1972 = vunpack.c.h.b16 %v1901
  %v1973 = vunpack.c.l.b16 %v1902
  %v1974 = vunpack.c.h.b16 %v1902
  %v1975 = vunpack.c.l.b16 %v1903
  %v1976 = vunpack.c.h.b16 %v1903
  %v1977 = vunpack.c.l.b16 %v1904
  %v1978 = vunpack.c.h.b16 %v1904
  %v1979 = vunpack.c.l.b16 %v1905
  %v1980 = vunpack.c.h.b16 %v1905
  %v1981 = vunpack.c.l.b16 %v1906
  %v1982 = vunpack.c.h.b16 %v1906
  %v1983 = vunpack.c.l.b16 %v1907
  %v1984 = vunpack.c.h.b16 %v1907
  %v1985 = vunpack.c.l.b16 %v1908
  %v1986 = vunpack.c.h.b16 %v1908
  %v1987 = vunpack.c.l.b16 %v1909
  %v1988 = vunpack.c.h.b16 %v1909
  %v1989 = vunpack.c.l.b16 %v1910
  %v1990 = vunpack.c.h.b16 %v1910
  %v1991 = vunpack.c.l.b16 %v1911
  %v1992 = vunpack.c.h.b16 %v1911
  %v1993 = vunpack.c.l.b16 %v1912
  %v1994 = vunpack.c.h.b16 %v1912
  %v1995 = vunpack.c.l.b16 %v1913
  %v1996 = vunpack.c.h.b16 %v1913
  %v1997 = vunpack.c.l.b16 %v1914
  %v1998 = vunpack.c.h.b16 %v1914
  %v1999 = vunpack.c.l.b16 %v1915
  %v2000 = vunpack.c.h.b16 %v1915
  %v2001 = vunpack.c.l.b16 %v1916
  %v2002 = vunpack.c.h.b16 %v1916
  %v2003 = vunpack.c.l.b16 %v1917
  %v2004 = vunpack.c.h.b16 %v1917
  %v2005 = vunpack.c.l.b16 %v1918
  %v2006 = vunpack.c.h.b16 %v1918
  %v2007 = vunpack.c.l.b16 %v1919
  %v2008 = vunpack.c.h.b16 %v1919
  %v2009 = vunpack.c.l.b16 %v1920
  %v2010 = vunpack.c.h.b16 %v1920
  %v2011 = vunpack.c.l.b16 %v1921
  %v2012 = vunpack.c.h.b16 %v1921
  %v2013 = vunpack.c.l.b16 %v1922
  %v2014 = vunpack.c.h.b16 %v1922
  %v2015 = vunpack.c.l.b16 %v1923
  %v2016 = vunpack.c.h.b16 %v1923
  %v2017 = vunpack.c.l.b16 %v1924
  %v2018 = vunpack.c.h.b16 %v1924
  %v2019 = vunpack.c.l.b16 %v1925
  %v2020 = vunpack.c.h.b16 %v1925
  %v2021 = vunpack.c.l.b16 %v1926
  %v2022 = vunpack.c.h.b16 %v1926
  %v2023 = vpack.c.b16 %v1963, %v1959
  %v2024 = vpack.c.b16 %v1964, %v1960
  %v2025 = vpack.c.b16 %v1965, %v1961
  %v2026 = vpack.c.b16 %v1966, %v1962
  %v2027 = vpack.c.b16 %v1971, %v1967
  %v2028 = vpack.c.b16 %v1972, %v1968
  %v2029 = vpack.c.b16 %v1973, %v1969
  %v2030 = vpack.c.b16 %v1974, %v1970
  %v2031 = vpack.c.b16 %v1979, %v1975
  %v2032 = vpack.c.b16 %v1980, %v1976
  %v2033 = vpack.c.b16 %v1981, %v1977
  %v2034 = vpack.c.b16 %v1982, %v1978
  %v2035 = vpack.c.b16 %v1987, %v1983
  %v2036 = vpack.c.b16 %v1988, %v1984
  %v2037 = vpack.c.b16 %v1989, %v1985
  %v2038 = vpack.c.b16 %v1990, %v1986
  %v2039 = vpack.c.b16 %v1995, %v1991
  %v2040 = vpack.c.b16 %v1996, %v1992
  %v2041 = vpack.c.b16 %v1997, %v1993
  %v2042 = vpack.c.b16 %v1998, %v1994
  %v2043 = vpack.c.b16 %v2003, %v1999
  %v2044 = vpack.c.b16 %v2004, %v2000
  %v2045 = vpack.c.b16 %v2005, %v2001
  %v2046 = vpack.c.b16 %v2006, %v2002
  %v2047 = vpack.c.b16 %v2011, %v2007
  %v2048 = vpack.c.b16 %v2012, %v2008
  %v2049 = vpack.c.b16 %v2013, %v2009
  %v2050 = vpack.c.b16 %v2014, %v2010
  %v2051 = vpack.c.b16 %v2019, %v2015
  %v2052 = vpack.c.b16 %v2020, %v2016
  %v2053 = vpack.c.b16 %v2021, %v2017
  %v2054 = vpack.c.b16 %v2022, %v2018
  %2087 = vmatprep.subr.bf16.mxu0 %v2024
  %2088 = vmatpush1.bf16.msra.mxu0 %v2023
  %2089 = vmatprep.subr.bf16.mxu0 %v2028
  %2090 = vmatpush1.bf16.msra.mxu0 %v2027
  %2091 = vmatprep.subr.bf16.mxu0 %v2032
  %2092 = vmatpush1.bf16.msra.mxu0 %v2031
  %2093 = vmatprep.subr.bf16.mxu0 %v2036
  %2094 = vmatpush1.bf16.msra.mxu0 %v2035
  %2095 = vmatprep.subr.bf16.mxu0 %v2040
  %2096 = vmatpush1.bf16.msra.mxu0 %v2039
  %2097 = vmatprep.subr.bf16.mxu0 %v2044
  %2098 = vmatpush1.bf16.msra.mxu0 %v2043
  %2099 = vmatprep.subr.bf16.mxu0 %v2048
  %2100 = vmatpush1.bf16.msra.mxu0 %v2047
  %2101 = vmatprep.subr.bf16.mxu0 %v2052
  %2102 = vmatpush1.bf16.msra.mxu0 %v2051
  %2103 = vmatprep.subr.bf16.mxu0 0
  %2104 = vmatpush1.bf16.msra.mxu0 0
  %2105 = vmatprep.subr.bf16.mxu0 0
  %2106 = vmatpush1.bf16.msra.mxu0 0
  %2107 = vmatprep.subr.bf16.mxu0 0
  %2108 = vmatpush1.bf16.msra.mxu0 0
  %2109 = vmatprep.subr.bf16.mxu0 0
  %2110 = vmatpush1.bf16.msra.mxu0 0
  %2111 = vmatprep.subr.bf16.mxu0 0
  %2112 = vmatpush1.bf16.msra.mxu0 0
  %2113 = vmatprep.subr.bf16.mxu0 0
  %2114 = vmatpush1.bf16.msra.mxu0 0
  %2115 = vmatprep.subr.bf16.mxu0 0
  %2116 = vmatpush1.bf16.msra.mxu0 0
  %2117 = vmatprep.subr.bf16.mxu0 0
  %2118 = vmatpush1.bf16.msra.mxu0 0
  %2119 = vmatprep.mubr.bf16.mxu0 0
  %2120 = vmatmul.mubr.bf16.gmra.mrb[0].mxu0 %v1894
  %v2121 = vpop.f32.mrb[0].mxu0
  %v2122 = vadd.f32 0.0, %v2121
  %v2123 = vpop.f32.mrb[0].mxu0
  %v2124 = vadd.f32 0.0, %v2123
  %v2125 = vpop.f32.mrb[0].mxu0
  %v2126 = vpop.f32.mrb[0].mxu0
  %2127 = vdwg.mxu0
  %2128 = vmatprep.subr.bf16.mxu0 %v2026
  %2129 = vmatpush1.bf16.msra.mxu0 %v2025
  %2130 = vmatprep.subr.bf16.mxu0 %v2030
  %2131 = vmatpush1.bf16.msra.mxu0 %v2029
  %2132 = vmatprep.subr.bf16.mxu0 %v2034
  %2133 = vmatpush1.bf16.msra.mxu0 %v2033
  %2134 = vmatprep.subr.bf16.mxu0 %v2038
  %2135 = vmatpush1.bf16.msra.mxu0 %v2037
  %2136 = vmatprep.subr.bf16.mxu0 %v2042
  %2137 = vmatpush1.bf16.msra.mxu0 %v2041
  %2138 = vmatprep.subr.bf16.mxu0 %v2046
  %2139 = vmatpush1.bf16.msra.mxu0 %v2045
  %2140 = vmatprep.subr.bf16.mxu0 %v2050
  %2141 = vmatpush1.bf16.msra.mxu0 %v2049
  %2142 = vmatprep.subr.bf16.mxu0 %v2054
  %2143 = vmatpush1.bf16.msra.mxu0 %v2053
  %2144 = vmatprep.subr.bf16.mxu0 0
  %2145 = vmatpush1.bf16.msra.mxu0 0
  %2146 = vmatprep.subr.bf16.mxu0 0
  %2147 = vmatpush1.bf16.msra.mxu0 0
  %2148 = vmatprep.subr.bf16.mxu0 0
  %2149 = vmatpush1.bf16.msra.mxu0 0
  %2150 = vmatprep.subr.bf16.mxu0 0
  %2151 = vmatpush1.bf16.msra.mxu0 0
  %2152 = vmatprep.subr.bf16.mxu0 0
  %2153 = vmatpush1.bf16.msra.mxu0 0
  %2154 = vmatprep.subr.bf16.mxu0 0
  %2155 = vmatpush1.bf16.msra.mxu0 0
  %2156 = vmatprep.subr.bf16.mxu0 0
  %2157 = vmatpush1.bf16.msra.mxu0 0
  %2158 = vmatprep.subr.bf16.mxu0 0
  %2159 = vmatpush1.bf16.msra.mxu0 0
  %2160 = vmatprep.mubr.bf16.mxu0 0
  %2161 = vmatmul.mubr.bf16.gmra.mrb[0].mxu0 %v1894
  %v2162 = vpop.f32.mrb[0].mxu0
  %v2163 = vadd.f32 0.0, %v2162
  %v2164 = vpop.f32.mrb[0].mxu0
  %v2165 = vadd.f32 0.0, %v2164
  %v2166 = vpop.f32.mrb[0].mxu0
  %v2167 = vpop.f32.mrb[0].mxu0
  %2168 = vdwg.mxu0
  %v2169 = vadd.f32 %v1890, %v2122
  %v2170 = vadd.f32 %v1891, %v2124
  %v2171 = vadd.f32 %v1892, %v2163
  %v2172 = vadd.f32 %v1893, %v2165
  %v2173 = vxor.u32 %v2169, 2147483648
  %v2174 = vmul.f32 %v2173, 1.442695
  %v2175 = vpow.pop %v2174
  %v2176 = vadd.f32 %v2175, 1.0
  %v2177 = vrcp.pop %v2176
  %v2178 = vmul.f32 1.0, %v2177
  %v2179 = vxor.u32 %v2170, 2147483648
  %v2180 = vmul.f32 %v2179, 1.442695
  %v2181 = vpow.pop %v2180
  %v2182 = vadd.f32 %v2181, 1.0
  %v2183 = vrcp.pop %v2182
  %v2184 = vmul.f32 1.0, %v2183
  %v2185 = vtanh.pop %v2171
  %v2186 = vxor.u32 %v2172, 2147483648
  %v2187 = vmul.f32 %v2186, 1.442695
  %v2188 = vpow.pop %v2187
  %v2189 = vadd.f32 %v2188, 1.0
  %v2190 = vrcp.pop %v2189
  %v2191 = vmul.f32 1.0, %v2190
  %v2192 = vmul.f32 %v2184, %v1884
  %v2193 = vmul.f32 %v2178, %v2185
  %v2194 = vadd.f32 %v2192, %v2193
  %v2195 = vtanh.pop %v2194
  %v2196 = vmul.f32 %v2191, %v2195
  %s2197 = scalar_lea.vmem %s4, 48
  %2198 = vst [vmem:[%s2197] sm:$0xff] %v2196
  %s2199 = scalar_lea.vmem %s0, 224
  %v2200 = vld [vmem:[%s2199] sm:$0xff]
  %v2201 = vld [vmem:[%s2199 + $0x8] sm:$0xff]
  %v2202 = vld [vmem:[%s2199 + $0x10] sm:$0xff]
  %v2203 = vld [vmem:[%s2199 + $0x18] sm:$0xff]
  %v2204 = vpack.c.bf16 %v2196, %v2196
  %v2205 = vld [vmem:[%s1] sm:$0xff]
  %v2206 = vld [vmem:[%s1 + $0x8] sm:$0xff]
  %v2207 = vld [vmem:[%s1 + $0x10] sm:$0xff]
  %v2208 = vld [vmem:[%s1 + $0x18] sm:$0xff]
  %v2209 = vld [vmem:[%s1 + $0x20] sm:$0xff]
  %v2210 = vld [vmem:[%s1 + $0x28] sm:$0xff]
  %v2211 = vld [vmem:[%s1 + $0x30] sm:$0xff]
  %v2212 = vld [vmem:[%s1 + $0x38] sm:$0xff]
  %v2213 = vld [vmem:[%s1 + $0x40] sm:$0xff]
  %v2214 = vld [vmem:[%s1 + $0x48] sm:$0xff]
  %v2215 = vld [vmem:[%s1 + $0x50] sm:$0xff]
  %v2216 = vld [vmem:[%s1 + $0x58] sm:$0xff]
  %v2217 = vld [vmem:[%s1 + $0x60] sm:$0xff]
  %v2218 = vld [vmem:[%s1 + $0x68] sm:$0xff]
  %v2219 = vld [vmem:[%s1 + $0x70] sm:$0xff]
  %v2220 = vld [vmem:[%s1 + $0x78] sm:$0xff]
  %v2221 = vld [vmem:[%s1 + $0x80] sm:$0xff]
  %v2222 = vld [vmem:[%s1 + $0x88] sm:$0xff]
  %v2223 = vld [vmem:[%s1 + $0x90] sm:$0xff]
  %v2224 = vld [vmem:[%s1 + $0x98] sm:$0xff]
  %v2225 = vld [vmem:[%s1 + $0xa0] sm:$0xff]
  %v2226 = vld [vmem:[%s1 + $0xa8] sm:$0xff]
  %v2227 = vld [vmem:[%s1 + $0xb0] sm:$0xff]
  %v2228 = vld [vmem:[%s1 + $0xb8] sm:$0xff]
  %v2229 = vld [vmem:[%s1 + $0xc0] sm:$0xff]
  %v2230 = vld [vmem:[%s1 + $0xc8] sm:$0xff]
  %v2231 = vld [vmem:[%s1 + $0xd0] sm:$0xff]
  %v2232 = vld [vmem:[%s1 + $0xd8] sm:$0xff]
  %v2233 = vld [vmem:[%s1 + $0xe0] sm:$0xff]
  %v2234 = vld [vmem:[%s1 + $0xe8] sm:$0xff]
  %v2235 = vld [vmem:[%s1 + $0xf0] sm:$0xff]
  %v2236 = vld [vmem:[%s1 + $0xf8] sm:$0xff]
  %v2269 = vunpack.c.l.b16 %v2205
  %v2270 = vunpack.c.h.b16 %v2205
  %v2271 = vunpack.c.l.b16 %v2206
  %v2272 = vunpack.c.h.b16 %v2206
  %v2273 = vunpack.c.l.b16 %v2207
  %v2274 = vunpack.c.h.b16 %v2207
  %v2275 = vunpack.c.l.b16 %v2208
  %v2276 = vunpack.c.h.b16 %v2208
  %v2277 = vunpack.c.l.b16 %v2209
  %v2278 = vunpack.c.h.b16 %v2209
  %v2279 = vunpack.c.l.b16 %v2210
  %v2280 = vunpack.c.h.b16 %v2210
  %v2281 = vunpack.c.l.b16 %v2211
  %v2282 = vunpack.c.h.b16 %v2211
  %v2283 = vunpack.c.l.b16 %v2212
  %v2284 = vunpack.c.h.b16 %v2212
  %v2285 = vunpack.c.l.b16 %v2213
  %v2286 = vunpack.c.h.b16 %v2213
  %v2287 = vunpack.c.l.b16 %v2214
  %v2288 = vunpack.c.h.b16 %v2214
  %v2289 = vunpack.c.l.b16 %v2215
  %v2290 = vunpack.c.h.b16 %v2215
  %v2291 = vunpack.c.l.b16 %v2216
  %v2292 = vunpack.c.h.b16 %v2216
  %v2293 = vunpack.c.l.b16 %v2217
  %v2294 = vunpack.c.h.b16 %v2217
  %v2295 = vunpack.c.l.b16 %v2218
  %v2296 = vunpack.c.h.b16 %v2218
  %v2297 = vunpack.c.l.b16 %v2219
  %v2298 = vunpack.c.h.b16 %v2219
  %v2299 = vunpack.c.l.b16 %v2220
  %v2300 = vunpack.c.h.b16 %v2220
  %v2301 = vunpack.c.l.b16 %v2221
  %v2302 = vunpack.c.h.b16 %v2221
  %v2303 = vunpack.c.l.b16 %v2222
  %v2304 = vunpack.c.h.b16 %v2222
  %v2305 = vunpack.c.l.b16 %v2223
  %v2306 = vunpack.c.h.b16 %v2223
  %v2307 = vunpack.c.l.b16 %v2224
  %v2308 = vunpack.c.h.b16 %v2224
  %v2309 = vunpack.c.l.b16 %v2225
  %v2310 = vunpack.c.h.b16 %v2225
  %v2311 = vunpack.c.l.b16 %v2226
  %v2312 = vunpack.c.h.b16 %v2226
  %v2313 = vunpack.c.l.b16 %v2227
  %v2314 = vunpack.c.h.b16 %v2227
  %v2315 = vunpack.c.l.b16 %v2228
  %v2316 = vunpack.c.h.b16 %v2228
  %v2317 = vunpack.c.l.b16 %v2229
  %v2318 = vunpack.c.h.b16 %v2229
  %v2319 = vunpack.c.l.b16 %v2230
  %v2320 = vunpack.c.h.b16 %v2230
  %v2321 = vunpack.c.l.b16 %v2231
  %v2322 = vunpack.c.h.b16 %v2231
  %v2323 = vunpack.c.l.b16 %v2232
  %v2324 = vunpack.c.h.b16 %v2232
  %v2325 = vunpack.c.l.b16 %v2233
  %v2326 = vunpack.c.h.b16 %v2233
  %v2327 = vunpack.c.l.b16 %v2234
  %v2328 = vunpack.c.h.b16 %v2234
  %v2329 = vunpack.c.l.b16 %v2235
  %v2330 = vunpack.c.h.b16 %v2235
  %v2331 = vunpack.c.l.b16 %v2236
  %v2332 = vunpack.c.h.b16 %v2236
  %v2333 = vpack.c.b16 %v2273, %v2269
  %v2334 = vpack.c.b16 %v2274, %v2270
  %v2335 = vpack.c.b16 %v2275, %v2271
  %v2336 = vpack.c.b16 %v2276, %v2272
  %v2337 = vpack.c.b16 %v2281, %v2277
  %v2338 = vpack.c.b16 %v2282, %v2278
  %v2339 = vpack.c.b16 %v2283, %v2279
  %v2340 = vpack.c.b16 %v2284, %v2280
  %v2341 = vpack.c.b16 %v2289, %v2285
  %v2342 = vpack.c.b16 %v2290, %v2286
  %v2343 = vpack.c.b16 %v2291, %v2287
  %v2344 = vpack.c.b16 %v2292, %v2288
  %v2345 = vpack.c.b16 %v2297, %v2293
  %v2346 = vpack.c.b16 %v2298, %v2294
  %v2347 = vpack.c.b16 %v2299, %v2295
  %v2348 = vpack.c.b16 %v2300, %v2296
  %v2349 = vpack.c.b16 %v2305, %v2301
  %v2350 = vpack.c.b16 %v2306, %v2302
  %v2351 = vpack.c.b16 %v2307, %v2303
  %v2352 = vpack.c.b16 %v2308, %v2304
  %v2353 = vpack.c.b16 %v2313, %v2309
  %v2354 = vpack.c.b16 %v2314, %v2310
  %v2355 = vpack.c.b16 %v2315, %v2311
  %v2356 = vpack.c.b16 %v2316, %v2312
  %v2357 = vpack.c.b16 %v2321, %v2317
  %v2358 = vpack.c.b16 %v2322, %v2318
  %v2359 = vpack.c.b16 %v2323, %v2319
  %v2360 = vpack.c.b16 %v2324, %v2320
  %v2361 = vpack.c.b16 %v2329, %v2325
  %v2362 = vpack.c.b16 %v2330, %v2326
  %v2363 = vpack.c.b16 %v2331, %v2327
  %v2364 = vpack.c.b16 %v2332, %v2328
  %2397 = vmatprep.subr.bf16.mxu0 %v2334
  %2398 = vmatpush1.bf16.msra.mxu0 %v2333
  %2399 = vmatprep.subr.bf16.mxu0 %v2338
  %2400 = vmatpush1.bf16.msra.mxu0 %v2337
  %2401 = vmatprep.subr.bf16.mxu0 %v2342
  %2402 = vmatpush1.bf16.msra.mxu0 %v2341
  %2403 = vmatprep.subr.bf16.mxu0 %v2346
  %2404 = vmatpush1.bf16.msra.mxu0 %v2345
  %2405 = vmatprep.subr.bf16.mxu0 %v2350
  %2406 = vmatpush1.bf16.msra.mxu0 %v2349
  %2407 = vmatprep.subr.bf16.mxu0 %v2354
  %2408 = vmatpush1.bf16.msra.mxu0 %v2353
  %2409 = vmatprep.subr.bf16.mxu0 %v2358
  %2410 = vmatpush1.bf16.msra.mxu0 %v2357
  %2411 = vmatprep.subr.bf16.mxu0 %v2362
  %2412 = vmatpush1.bf16.msra.mxu0 %v2361
  %2413 = vmatprep.subr.bf16.mxu0 0
  %2414 = vmatpush1.bf16.msra.mxu0 0
  %2415 = vmatprep.subr.bf16.mxu0 0
  %2416 = vmatpush1.bf16.msra.mxu0 0
  %2417 = vmatprep.subr.bf16.mxu0 0
  %2418 = vmatpush1.bf16.msra.mxu0 0
  %2419 = vmatprep.subr.bf16.mxu0 0
  %2420 = vmatpush1.bf16.msra.mxu0 0
  %2421 = vmatprep.subr.bf16.mxu0 0
  %2422 = vmatpush1.bf16.msra.mxu0 0
  %2423 = vmatprep.subr.bf16.mxu0 0
  %2424 = vmatpush1.bf16.msra.mxu0 0
  %2425 = vmatprep.subr.bf16.mxu0 0
  %2426 = vmatpush1.bf16.msra.mxu0 0
  %2427 = vmatprep.subr.bf16.mxu0 0
  %2428 = vmatpush1.bf16.msra.mxu0 0
  %2429 = vmatprep.mubr.bf16.mxu0 0
  %2430 = vmatmul.mubr.bf16.gmra.mrb[0].mxu0 %v2204
  %v2431 = vpop.f32.mrb[0].mxu0
  %v2432 = vadd.f32 0.0, %v2431
  %v2433 = vpop.f32.mrb[0].mxu0
  %v2434 = vadd.f32 0.0, %v2433
  %v2435 = vpop.f32.mrb[0].mxu0
  %v2436 = vpop.f32.mrb[0].mxu0
  %2437 = vdwg.mxu0
  %2438 = vmatprep.subr.bf16.mxu0 %v2336
  %2439 = vmatpush1.bf16.msra.mxu0 %v2335
  %2440 = vmatprep.subr.bf16.mxu0 %v2340
  %2441 = vmatpush1.bf16.msra.mxu0 %v2339
  %2442 = vmatprep.subr.bf16.mxu0 %v2344
  %2443 = vmatpush1.bf16.msra.mxu0 %v2343
  %2444 = vmatprep.subr.bf16.mxu0 %v2348
  %2445 = vmatpush1.bf16.msra.mxu0 %v2347
  %2446 = vmatprep.subr.bf16.mxu0 %v2352
  %2447 = vmatpush1.bf16.msra.mxu0 %v2351
  %2448 = vmatprep.subr.bf16.mxu0 %v2356
  %2449 = vmatpush1.bf16.msra.mxu0 %v2355
  %2450 = vmatprep.subr.bf16.mxu0 %v2360
  %2451 = vmatpush1.bf16.msra.mxu0 %v2359
  %2452 = vmatprep.subr.bf16.mxu0 %v2364
  %2453 = vmatpush1.bf16.msra.mxu0 %v2363
  %2454 = vmatprep.subr.bf16.mxu0 0
  %2455 = vmatpush1.bf16.msra.mxu0 0
  %2456 = vmatprep.subr.bf16.mxu0 0
  %2457 = vmatpush1.bf16.msra.mxu0 0
  %2458 = vmatprep.subr.bf16.mxu0 0
  %2459 = vmatpush1.bf16.msra.mxu0 0
  %2460 = vmatprep.subr.bf16.mxu0 0
  %2461 = vmatpush1.bf16.msra.mxu0 0
  %2462 = vmatprep.subr.bf16.mxu0 0
  %2463 = vmatpush1.bf16.msra.mxu0 0
  %2464 = vmatprep.subr.bf16.mxu0 0
  %2465 = vmatpush1.bf16.msra.mxu0 0
  %2466 = vmatprep.subr.bf16.mxu0 0
  %2467 = vmatpush1.bf16.msra.mxu0 0
  %2468 = vmatprep.subr.bf16.mxu0 0
  %2469 = vmatpush1.bf16.msra.mxu0 0
  %2470 = vmatprep.mubr.bf16.mxu0 0
  %2471 = vmatmul.mubr.bf16.gmra.mrb[0].mxu0 %v2204
  %v2472 = vpop.f32.mrb[0].mxu0
  %v2473 = vadd.f32 0.0, %v2472
  %v2474 = vpop.f32.mrb[0].mxu0
  %v2475 = vadd.f32 0.0, %v2474
  %v2476 = vpop.f32.mrb[0].mxu0
  %v2477 = vpop.f32.mrb[0].mxu0
  %2478 = vdwg.mxu0
  %v2479 = vadd.f32 %v2200, %v2432
  %v2480 = vadd.f32 %v2201, %v2434
  %v2481 = vadd.f32 %v2202, %v2473
  %v2482 = vadd.f32 %v2203, %v2475
  %v2483 = vxor.u32 %v2479, 2147483648
  %v2484 = vmul.f32 %v2483, 1.442695
  %v2485 = vpow.pop %v2484
  %v2486 = vadd.f32 %v2485, 1.0
  %v2487 = vrcp.pop %v2486
  %v2488 = vmul.f32 1.0, %v2487
  %v2489 = vxor.u32 %v2480, 2147483648
  %v2490 = vmul.f32 %v2489, 1.442695
  %v2491 = vpow.pop %v2490
  %v2492 = vadd.f32 %v2491, 1.0
  %v2493 = vrcp.pop %v2492
  %v2494 = vmul.f32 1.0, %v2493
  %v2495 = vtanh.pop %v2481
  %v2496 = vxor.u32 %v2482, 2147483648
  %v2497 = vmul.f32 %v2496, 1.442695
  %v2498 = vpow.pop %v2497
  %v2499 = vadd.f32 %v2498, 1.0
  %v2500 = vrcp.pop %v2499
  %v2501 = vmul.f32 1.0, %v2500
  %v2502 = vmul.f32 %v2494, %v2194
  %v2503 = vmul.f32 %v2488, %v2495
  %v2504 = vadd.f32 %v2502, %v2503
  %v2505 = vtanh.pop %v2504
  %v2506 = vmul.f32 %v2501, %v2505
  %s2507 = scalar_lea.vmem %s4, 56
  %2508 = vst [vmem:[%s2507] sm:$0xff] %v2506
  %2509 = vst [vmem:[#allocation2] sm:$0xff] %v2506
  %2510 = vst [vmem:[#allocation3] sm:$0xff] %v2504
  // Predicated region
  $region22: #{rnn_model_forward.6} parent=0 // pred_check
    %p2511 = pneg %p21
  $region23: #{rnn_model_forward.6} parent=0 // pred_check_branch
    %2513 = sbr.rel (%p2511) target = $region25
  $region24: #{rnn_model_forward.6} parent=0 // pred_region
    %2514 = vst [vmem:[%s5] sm:$0xff] %v2506
    %2515 = vst [vmem:[%s6] sm:$0xff] %v2504
  $region25: #{rnn_model_forward.6} parent=0 // pred_fallthru
    _
  // Predicated region
  $region26: #{rnn_model_forward.6} parent=0 // pred_check
    _
  $region27: #{rnn_model_forward.6} parent=0 // pred_check_branch
    %2517 = sbr.rel (0) target = $region29
  $region28: #{rnn_model_forward.6} parent=0 // pred_region
    _
  $region29: #{rnn_model_forward.6} parent=0 // pred_fallthru
    _
  // Predicated region
  $region30: #{rnn_model_forward.6} parent=0 // pred_check
    _
  $region31: #{rnn_model_forward.6} parent=0 // pred_check_branch
    %2519 = sbr.rel (0) target = $region33
  $region32: #{rnn_model_forward.6} parent=0 // pred_region
    _
  $region33: #{rnn_model_forward.6} parent=0 // pred_fallthru
    _
  // Predicated region
  $region34: #{rnn_model_forward.6} parent=0 // pred_check
    _
  $region35: #{rnn_model_forward.6} parent=0 // pred_check_branch
    %2521 = sbr.rel (0) target = $region37
  $region36: #{rnn_model_forward.6} parent=0 // pred_region
    _
  $region37: #{rnn_model_forward.6} parent=0 // pred_fallthru
    _
  // Predicated region
  $region38: #{rnn_model_forward.6} parent=0 // pred_check
    _
  $region39: #{rnn_model_forward.6} parent=0 // pred_check_branch
    %2523 = sbr.rel (0) target = $region41
  $region40: #{rnn_model_forward.6} parent=0 // pred_region
    _
  $region41: #{rnn_model_forward.6} parent=0 // pred_fallthru
    _
  // Predicated region
  $region42: #{rnn_model_forward.6} parent=0 // pred_check
    _
  $region43: #{rnn_model_forward.6} parent=0 // pred_check_branch
    %2525 = sbr.rel (0) target = $region45
  $region44: #{rnn_model_forward.6} parent=0 // pred_region
    _
  $region45: #{rnn_model_forward.6} parent=0 // pred_fallthru
    _
  // Predicated region
  $region46: #{rnn_model_forward.6} parent=0 // pred_check
    _
  $region47: #{rnn_model_forward.6} parent=0 // pred_check_branch
    %2527 = sbr.rel (0) target = $region49
  $region48: #{rnn_model_forward.6} parent=0 // pred_region
    _
  $region49: #{rnn_model_forward.6} parent=0 // pred_fallthru
    _

</llo_original>
